<compile_context>
chip_gen: v7x
topology: tpu7x:2x2x1
jax: 0.10.0
libtpu: 0.0.40
codegen_flags: <defaults>
</compile_context>

<pallas_src>
import functools

import jax
import jax.numpy as jnp
from jax import lax
from jax.experimental import pallas as pl
from jax.experimental.pallas import tpu as pltpu

_NEG_SLOPE = 0.1
_BN_EPS = 1e-5


def _leaky_relu(y):
    return jnp.where(y > 0, y, _NEG_SLOPE * y)


def _flat_shift(x2d, s):
    """xs[p] = x2d[p + s], zero-filled outside [0, H*W)."""
    if s == 0:
        return x2d
    _, c = x2d.shape
    z = jnp.zeros((abs(s), c), x2d.dtype)
    if s > 0:
        return jnp.concatenate([x2d[s:], z], axis=0)
    return jnp.concatenate([z, x2d[:s]], axis=0)


def _scaled_pred_kernel(x_ref, w1_ref, b1_ref, w2_ref, b2_ref, o_ref, *, img_w):
    # x_ref : (1, H*W, Cin)           activations, channels on lanes
    # w1_ref: (9, Cin, Cmid)          3x3 conv taps (BN folded in)
    # b1_ref: (1, Cmid)
    # w2_ref: (Cmid, Cout)            1x1 conv (BN folded in)
    # b2_ref: (1, Cout)
    # o_ref : (1, 3, H*W, ncls+5)
    x = x_ref[0].astype(jnp.float32)                 # (HW, Cin)
    hw, cin = x.shape
    cmid = w1_ref.shape[2]
    n_anchor = o_ref.shape[1]
    npred = o_ref.shape[3]

    # Column index of every flattened pixel (for the W-boundary masks).
    col = lax.broadcasted_iota(jnp.int32, (hw, cin), 0) % img_w
    mask_l = col >= 1                 # taps that read column w-1
    mask_r = col < img_w - 1          # taps that read column w+1

    # ---- conv 3x3, padding=1: 9 shifted MXU matmuls accumulated in f32 ----
    acc = jnp.zeros((hw, cmid), jnp.float32)
    for ky in range(3):
        dy = ky - 1
        for kx in range(3):
            dx = kx - 1
            xs = _flat_shift(x, dy * img_w + dx)     # zero fill handles the H border
            if dx == -1:
                xs = jnp.where(mask_l, xs, 0.0)      # zero the W border
            elif dx == 1:
                xs = jnp.where(mask_r, xs, 0.0)
            acc = acc + jnp.dot(xs, w1_ref[ky * 3 + kx],
                                preferred_element_type=jnp.float32)

    y1 = _leaky_relu(acc + b1_ref[...])              # (HW, Cmid)

    # ---- conv 1x1 ----
    y2 = jnp.dot(y1, w2_ref[...], preferred_element_type=jnp.float32)
    y2 = _leaky_relu(y2 + b2_ref[...])               # (HW, Cout)

    # ---- head split: channel c = a*(ncls+5)+j  ->  out[0, a, p, j] ----
    for a in range(n_anchor):
        o_ref[0, a] = y2[:, a * npred:(a + 1) * npred].astype(o_ref.dtype)


def scaled_prediction(x, params, nclasses):
    """x: (N, C, H, W) NCHW like the PyTorch module. Returns (N, 3, H, W, nclasses+5)."""
    n, cin, h, w = x.shape
    w1 = params["w1"]                # (Cmid, Cin, 3, 3)   torch OIHW
    w2 = params["w2"]                # (Cout, Cmid, 1, 1)
    cmid = w1.shape[0]
    cout = w2.shape[0]
    npred = nclasses + 5
    n_anchor = cout // npred         # 3

    # Fold BatchNorm (running stats) into the conv weights & biases.
    s1 = params["gamma1"] * lax.rsqrt(params["var1"] + _BN_EPS)
    w1k = (jnp.transpose(w1, (2, 3, 1, 0)).reshape(9, cin, cmid)
           * s1[None, None, :]).astype(jnp.float32)
    b1k = ((params["b1"] - params["mean1"]) * s1 + params["beta1"])[None, :]

    s2 = params["gamma2"] * lax.rsqrt(params["var2"] + _BN_EPS)
    w2k = (w2[:, :, 0, 0].T * s2[None, :]).astype(jnp.float32)
    b2k = ((params["b2"] - params["mean2"]) * s2 + params["beta2"])[None, :]

    # NCHW -> (N, H*W, C): channels on the TPU lane axis (lane-dense matmuls).
    x2d = jnp.transpose(x, (0, 2, 3, 1)).reshape(n, h * w, cin)

    kernel = functools.partial(_scaled_pred_kernel, img_w=w)

    out = pl.pallas_call(
        kernel,
        out_shape=jax.ShapeDtypeStruct((n, n_anchor, h * w, npred), x.dtype),
        grid=(n,),
        in_specs=[
            pl.BlockSpec((1, h * w, cin), lambda i: (i, 0, 0)),
            pl.BlockSpec((9, cin, cmid), lambda i: (0, 0, 0)),
            pl.BlockSpec((1, cmid), lambda i: (0, 0)),
            pl.BlockSpec((cmid, cout), lambda i: (0, 0)),
            pl.BlockSpec((1, cout), lambda i: (0, 0)),
        ],
        out_specs=pl.BlockSpec((1, n_anchor, h * w, npred),
                               lambda i: (i, 0, 0, 0)),
        compiler_params=pltpu.CompilerParams(
            dimension_semantics=("parallel",)),
    )(x2d, w1k, b1k, w2k, b2k)

    # Free (contiguous) reshape: (N, 3, H*W, P) -> (N, 3, H, W, P),
    # identical to the torch reshape+permute result.
    return out.reshape(n, n_anchor, h, w, npred)


def _reference(x, params, nclasses):
    """Plain-JAX reference mirroring the PyTorch module (eval-mode BN)."""
    def cnn_block(y, wt, b, gamma, beta, mean, var, pad):
        y = lax.conv_general_dilated(
            y, wt, window_strides=(1, 1),
            padding=((pad, pad), (pad, pad)),
            dimension_numbers=("NCHW", "OIHW", "NCHW"))
        y = y + b[None, :, None, None]
        y = (y - mean[None, :, None, None]) * lax.rsqrt(
            var[None, :, None, None] + _BN_EPS)
        y = y * gamma[None, :, None, None] + beta[None, :, None, None]
        return jnp.where(y > 0, y, _NEG_SLOPE * y)

    y = cnn_block(x, params["w1"], params["b1"], params["gamma1"],
                  params["beta1"], params["mean1"], params["var1"], 1)
    y = cnn_block(y, params["w2"], params["b2"], params["gamma2"],
                  params["beta2"], params["mean2"], params["var2"], 0)
    n, _, h, w = x.shape
    npred = nclasses + 5
    return jnp.transpose(y.reshape(n, 3, npred, h, w), (0, 1, 3, 4, 2))


if __name__ == "__main__":
    key = jax.random.PRNGKey(0)
    n, c, h, w = 2, 4, 16, 16
    nclasses = 3
    cmid = 2 * c
    cout = (nclasses + 5) * 3

    ks = jax.random.split(key, 13)
    params = {
        "w1": 0.2 * jax.random.normal(ks[0], (cmid, c, 3, 3), jnp.float32),
        "b1": 0.1 * jax.random.normal(ks[1], (cmid,), jnp.float32),
        "gamma1": 1.0 + 0.1 * jax.random.normal(ks[2], (cmid,), jnp.float32),
        "beta1": 0.1 * jax.random.normal(ks[3], (cmid,), jnp.float32),
        "mean1": 0.1 * jax.random.normal(ks[4], (cmid,), jnp.float32),
        "var1": 0.5 + jax.nn.softplus(jax.random.normal(ks[5], (cmid,), jnp.float32)),
        "w2": 0.2 * jax.random.normal(ks[6], (cout, cmid, 1, 1), jnp.float32),
        "b2": 0.1 * jax.random.normal(ks[7], (cout,), jnp.float32),
        "gamma2": 1.0 + 0.1 * jax.random.normal(ks[8], (cout,), jnp.float32),
        "beta2": 0.1 * jax.random.normal(ks[9], (cout,), jnp.float32),
        "mean2": 0.1 * jax.random.normal(ks[10], (cout,), jnp.float32),
        "var2": 0.5 + jax.nn.softplus(jax.random.normal(ks[11], (cout,), jnp.float32)),
    }
    x = jax.random.normal(ks[12], (n, c, h, w), jnp.float32)

    out = jax.block_until_ready(scaled_prediction(x, params, nclasses))
    ref = _reference(x, params, nclasses)

    assert out.shape == (n, 3, h, w, nclasses + 5), out.shape
    assert jnp.allclose(out, ref, atol=1e-4, rtol=1e-4), float(
        jnp.max(jnp.abs(out - ref)))
    print("KERNEL_OK")
</pallas_src>

<mosaic_0001>
module attributes {stable_mosaic.version = 11 : i64} {
  func.func @_scaled_pred_kernel(%arg0: i32, %arg1: memref<1x256x4xf32, #tpu.memory_space<vmem>>, %arg2: memref<9x4x8xf32, #tpu.memory_space<vmem>>, %arg3: memref<1x8xf32, #tpu.memory_space<vmem>>, %arg4: memref<8x24xf32, #tpu.memory_space<vmem>>, %arg5: memref<1x24xf32, #tpu.memory_space<vmem>>, %arg6: memref<1x3x256x8xf32, #tpu.memory_space<vmem>>) attributes {dimension_semantics = [#tpu.dimension_semantics<parallel>], iteration_bounds = array<i64: 2>, scalar_prefetch = 0 : i64, scratch_operands = 0 : i64, tpu.core_type = #tpu.core_type<tc>, window_params = [{transform_indices = @transform_0, window_bounds = array<i64: 1, 256, 4>}, {pipeline_mode = #tpu.pipeline_mode<synchronous>, transform_indices = @transform_1, window_bounds = array<i64: 9, 4, 8>}, {pipeline_mode = #tpu.pipeline_mode<synchronous>, transform_indices = @transform_2, window_bounds = array<i64: 1, 8>}, {pipeline_mode = #tpu.pipeline_mode<synchronous>, transform_indices = @transform_3, window_bounds = array<i64: 8, 24>}, {pipeline_mode = #tpu.pipeline_mode<synchronous>, transform_indices = @transform_4, window_bounds = array<i64: 1, 24>}, {transform_indices = @transform_5, window_bounds = array<i64: 1, 3, 256, 8>}]} {
    %c0 = arith.constant 0 : index
    %c0_0 = arith.constant 0 : index
    %c0_1 = arith.constant 0 : index
    %0 = vector.load %arg1[%c0, %c0_0, %c0_1] : memref<1x256x4xf32, #tpu.memory_space<vmem>>, vector<1x256x4xf32>
    %1 = vector.shape_cast %0 : vector<1x256x4xf32> to vector<256x4xf32>
    %2 = tpu.iota {dimensions = array<i32: 0>} : vector<256x4xi32>
    %c16_i32 = arith.constant 16 : i32
    %c0_i32 = arith.constant 0 : i32
    %3 = arith.cmpi eq, %c16_i32, %c0_i32 : i32
    %c1_i32 = arith.constant 1 : i32
    %4 = arith.select %3, %c1_i32, %c16_i32 : i32
    %5 = vector.broadcast %4 : i32 to vector<256x4xi32>
    %6 = arith.remsi %2, %5 : vector<256x4xi32>
    %c0_i32_2 = arith.constant 0 : i32
    %7 = vector.broadcast %c0_i32_2 : i32 to vector<256x4xi32>
    %8 = arith.cmpi ne, %6, %7 : vector<256x4xi32>
    %c0_i32_3 = arith.constant 0 : i32
    %9 = vector.broadcast %c0_i32_3 : i32 to vector<256x4xi32>
    %10 = arith.cmpi slt, %6, %9 : vector<256x4xi32>
    %c0_i32_4 = arith.constant 0 : i32
    %11 = arith.cmpi slt, %4, %c0_i32_4 : i32
    %12 = vector.broadcast %11 : i1 to vector<256x4xi1>
    %13 = vector.broadcast %12 : vector<256x4xi1> to vector<256x4xi1>
    %14 = arith.xori %10, %13 : vector<256x4xi1>
    %15 = arith.andi %14, %8 : vector<256x4xi1>
    %16 = vector.broadcast %4 : i32 to vector<256x4xi32>
    %17 = arith.addi %6, %16 : vector<256x4xi32>
    %18 = arith.select %15, %17, %6 : vector<256x4xi1>, vector<256x4xi32>
    %c1_i32_5 = arith.constant 1 : i32
    %19 = vector.broadcast %c1_i32_5 : i32 to vector<256x4xi32>
    %20 = arith.cmpi sge, %18, %19 : vector<256x4xi32>
    %c15_i32 = arith.constant 15 : i32
    %21 = vector.broadcast %c15_i32 : i32 to vector<256x4xi32>
    %22 = arith.cmpi slt, %18, %21 : vector<256x4xi32>
    %cst = arith.constant 0.000000e+00 : f32
    %23 = vector.broadcast %cst : f32 to vector<256x8xf32>
    %cst_6 = arith.constant 0.000000e+00 : f32
    %24 = vector.broadcast %cst_6 : f32 to vector<17x4xf32>
    %25 = vector.extract_strided_slice %1 {offsets = [0, 0], sizes = [239, 4], strides = [1, 1]} : vector<256x4xf32> to vector<239x4xf32>
    %26 = tpu.concatenate %24, %25 in 0 : vector<17x4xf32>, vector<239x4xf32> -> vector<256x4xf32>
    %cst_7 = arith.constant 0.000000e+00 : f32
    %27 = vector.broadcast %cst_7 : f32 to vector<256x4xf32>
    %28 = arith.select %20, %26, %27 : vector<256x4xi1>, vector<256x4xf32>
    %c0_8 = arith.constant 0 : index
    %c0_9 = arith.constant 0 : index
    %c0_10 = arith.constant 0 : index
    %29 = vector.load %arg2[%c0_8, %c0_9, %c0_10] : memref<9x4x8xf32, #tpu.memory_space<vmem>>, vector<1x4x8xf32>
    %30 = vector.shape_cast %29 : vector<1x4x8xf32> to vector<4x8xf32>
    %cst_11 = arith.constant dense<0.000000e+00> : vector<256x8xf32>
    %31 = tpu.matmul %28, %30, %cst_11 {dimension_numbers = #tpu.dot_dimension_numbers<[1], [0], [0], [1], [0, 0, 1, 1], [], []>} : vector<256x4xf32>, vector<4x8xf32>, vector<256x8xf32> -> vector<256x8xf32>
    %32 = arith.addf %23, %31 : vector<256x8xf32>
    %cst_12 = arith.constant 0.000000e+00 : f32
    %33 = vector.broadcast %cst_12 : f32 to vector<16x4xf32>
    %34 = vector.extract_strided_slice %1 {offsets = [0, 0], sizes = [240, 4], strides = [1, 1]} : vector<256x4xf32> to vector<240x4xf32>
    %35 = tpu.concatenate %33, %34 in 0 : vector<16x4xf32>, vector<240x4xf32> -> vector<256x4xf32>
    %c1 = arith.constant 1 : index
    %c0_13 = arith.constant 0 : index
    %c0_14 = arith.constant 0 : index
    %36 = vector.load %arg2[%c1, %c0_13, %c0_14] : memref<9x4x8xf32, #tpu.memory_space<vmem>>, vector<1x4x8xf32>
    %37 = vector.shape_cast %36 : vector<1x4x8xf32> to vector<4x8xf32>
    %cst_15 = arith.constant dense<0.000000e+00> : vector<256x8xf32>
    %38 = tpu.matmul %35, %37, %cst_15 {dimension_numbers = #tpu.dot_dimension_numbers<[1], [0], [0], [1], [0, 0, 1, 1], [], []>} : vector<256x4xf32>, vector<4x8xf32>, vector<256x8xf32> -> vector<256x8xf32>
    %39 = arith.addf %32, %38 : vector<256x8xf32>
    %cst_16 = arith.constant 0.000000e+00 : f32
    %40 = vector.broadcast %cst_16 : f32 to vector<15x4xf32>
    %41 = vector.extract_strided_slice %1 {offsets = [0, 0], sizes = [241, 4], strides = [1, 1]} : vector<256x4xf32> to vector<241x4xf32>
    %42 = tpu.concatenate %40, %41 in 0 : vector<15x4xf32>, vector<241x4xf32> -> vector<256x4xf32>
    %cst_17 = arith.constant 0.000000e+00 : f32
    %43 = vector.broadcast %cst_17 : f32 to vector<256x4xf32>
    %44 = arith.select %22, %42, %43 : vector<256x4xi1>, vector<256x4xf32>
    %c2 = arith.constant 2 : index
    %c0_18 = arith.constant 0 : index
    %c0_19 = arith.constant 0 : index
    %45 = vector.load %arg2[%c2, %c0_18, %c0_19] : memref<9x4x8xf32, #tpu.memory_space<vmem>>, vector<1x4x8xf32>
    %46 = vector.shape_cast %45 : vector<1x4x8xf32> to vector<4x8xf32>
    %cst_20 = arith.constant dense<0.000000e+00> : vector<256x8xf32>
    %47 = tpu.matmul %44, %46, %cst_20 {dimension_numbers = #tpu.dot_dimension_numbers<[1], [0], [0], [1], [0, 0, 1, 1], [], []>} : vector<256x4xf32>, vector<4x8xf32>, vector<256x8xf32> -> vector<256x8xf32>
    %48 = arith.addf %39, %47 : vector<256x8xf32>
    %cst_21 = arith.constant 0.000000e+00 : f32
    %49 = vector.broadcast %cst_21 : f32 to vector<1x4xf32>
    %50 = vector.extract_strided_slice %1 {offsets = [0, 0], sizes = [255, 4], strides = [1, 1]} : vector<256x4xf32> to vector<255x4xf32>
    %51 = tpu.concatenate %49, %50 in 0 : vector<1x4xf32>, vector<255x4xf32> -> vector<256x4xf32>
    %cst_22 = arith.constant 0.000000e+00 : f32
    %52 = vector.broadcast %cst_22 : f32 to vector<256x4xf32>
    %53 = arith.select %20, %51, %52 : vector<256x4xi1>, vector<256x4xf32>
    %c3 = arith.constant 3 : index
    %c0_23 = arith.constant 0 : index
    %c0_24 = arith.constant 0 : index
    %54 = vector.load %arg2[%c3, %c0_23, %c0_24] : memref<9x4x8xf32, #tpu.memory_space<vmem>>, vector<1x4x8xf32>
    %55 = vector.shape_cast %54 : vector<1x4x8xf32> to vector<4x8xf32>
    %cst_25 = arith.constant dense<0.000000e+00> : vector<256x8xf32>
    %56 = tpu.matmul %53, %55, %cst_25 {dimension_numbers = #tpu.dot_dimension_numbers<[1], [0], [0], [1], [0, 0, 1, 1], [], []>} : vector<256x4xf32>, vector<4x8xf32>, vector<256x8xf32> -> vector<256x8xf32>
    %57 = arith.addf %48, %56 : vector<256x8xf32>
    %c4 = arith.constant 4 : index
    %c0_26 = arith.constant 0 : index
    %c0_27 = arith.constant 0 : index
    %58 = vector.load %arg2[%c4, %c0_26, %c0_27] : memref<9x4x8xf32, #tpu.memory_space<vmem>>, vector<1x4x8xf32>
    %59 = vector.shape_cast %58 : vector<1x4x8xf32> to vector<4x8xf32>
    %cst_28 = arith.constant dense<0.000000e+00> : vector<256x8xf32>
    %60 = tpu.matmul %1, %59, %cst_28 {dimension_numbers = #tpu.dot_dimension_numbers<[1], [0], [0], [1], [0, 0, 1, 1], [], []>} : vector<256x4xf32>, vector<4x8xf32>, vector<256x8xf32> -> vector<256x8xf32>
    %61 = arith.addf %57, %60 : vector<256x8xf32>
    %cst_29 = arith.constant 0.000000e+00 : f32
    %62 = vector.broadcast %cst_29 : f32 to vector<1x4xf32>
    %63 = vector.extract_strided_slice %1 {offsets = [1, 0], sizes = [255, 4], strides = [1, 1]} : vector<256x4xf32> to vector<255x4xf32>
    %64 = tpu.concatenate %63, %62 in 0 : vector<255x4xf32>, vector<1x4xf32> -> vector<256x4xf32>
    %cst_30 = arith.constant 0.000000e+00 : f32
    %65 = vector.broadcast %cst_30 : f32 to vector<256x4xf32>
    %66 = arith.select %22, %64, %65 : vector<256x4xi1>, vector<256x4xf32>
    %c5 = arith.constant 5 : index
    %c0_31 = arith.constant 0 : index
    %c0_32 = arith.constant 0 : index
    %67 = vector.load %arg2[%c5, %c0_31, %c0_32] : memref<9x4x8xf32, #tpu.memory_space<vmem>>, vector<1x4x8xf32>
    %68 = vector.shape_cast %67 : vector<1x4x8xf32> to vector<4x8xf32>
    %cst_33 = arith.constant dense<0.000000e+00> : vector<256x8xf32>
    %69 = tpu.matmul %66, %68, %cst_33 {dimension_numbers = #tpu.dot_dimension_numbers<[1], [0], [0], [1], [0, 0, 1, 1], [], []>} : vector<256x4xf32>, vector<4x8xf32>, vector<256x8xf32> -> vector<256x8xf32>
    %70 = arith.addf %61, %69 : vector<256x8xf32>
    %cst_34 = arith.constant 0.000000e+00 : f32
    %71 = vector.broadcast %cst_34 : f32 to vector<15x4xf32>
    %72 = vector.extract_strided_slice %1 {offsets = [15, 0], sizes = [241, 4], strides = [1, 1]} : vector<256x4xf32> to vector<241x4xf32>
    %73 = tpu.concatenate %72, %71 in 0 : vector<241x4xf32>, vector<15x4xf32> -> vector<256x4xf32>
    %cst_35 = arith.constant 0.000000e+00 : f32
    %74 = vector.broadcast %cst_35 : f32 to vector<256x4xf32>
    %75 = arith.select %20, %73, %74 : vector<256x4xi1>, vector<256x4xf32>
    %c6 = arith.constant 6 : index
    %c0_36 = arith.constant 0 : index
    %c0_37 = arith.constant 0 : index
    %76 = vector.load %arg2[%c6, %c0_36, %c0_37] : memref<9x4x8xf32, #tpu.memory_space<vmem>>, vector<1x4x8xf32>
    %77 = vector.shape_cast %76 : vector<1x4x8xf32> to vector<4x8xf32>
    %cst_38 = arith.constant dense<0.000000e+00> : vector<256x8xf32>
    %78 = tpu.matmul %75, %77, %cst_38 {dimension_numbers = #tpu.dot_dimension_numbers<[1], [0], [0], [1], [0, 0, 1, 1], [], []>} : vector<256x4xf32>, vector<4x8xf32>, vector<256x8xf32> -> vector<256x8xf32>
    %79 = arith.addf %70, %78 : vector<256x8xf32>
    %cst_39 = arith.constant 0.000000e+00 : f32
    %80 = vector.broadcast %cst_39 : f32 to vector<16x4xf32>
    %81 = vector.extract_strided_slice %1 {offsets = [16, 0], sizes = [240, 4], strides = [1, 1]} : vector<256x4xf32> to vector<240x4xf32>
    %82 = tpu.concatenate %81, %80 in 0 : vector<240x4xf32>, vector<16x4xf32> -> vector<256x4xf32>
    %c7 = arith.constant 7 : index
    %c0_40 = arith.constant 0 : index
    %c0_41 = arith.constant 0 : index
    %83 = vector.load %arg2[%c7, %c0_40, %c0_41] : memref<9x4x8xf32, #tpu.memory_space<vmem>>, vector<1x4x8xf32>
    %84 = vector.shape_cast %83 : vector<1x4x8xf32> to vector<4x8xf32>
    %cst_42 = arith.constant dense<0.000000e+00> : vector<256x8xf32>
    %85 = tpu.matmul %82, %84, %cst_42 {dimension_numbers = #tpu.dot_dimension_numbers<[1], [0], [0], [1], [0, 0, 1, 1], [], []>} : vector<256x4xf32>, vector<4x8xf32>, vector<256x8xf32> -> vector<256x8xf32>
    %86 = arith.addf %79, %85 : vector<256x8xf32>
    %cst_43 = arith.constant 0.000000e+00 : f32
    %87 = vector.broadcast %cst_43 : f32 to vector<17x4xf32>
    %88 = vector.extract_strided_slice %1 {offsets = [17, 0], sizes = [239, 4], strides = [1, 1]} : vector<256x4xf32> to vector<239x4xf32>
    %89 = tpu.concatenate %88, %87 in 0 : vector<239x4xf32>, vector<17x4xf32> -> vector<256x4xf32>
    %cst_44 = arith.constant 0.000000e+00 : f32
    %90 = vector.broadcast %cst_44 : f32 to vector<256x4xf32>
    %91 = arith.select %22, %89, %90 : vector<256x4xi1>, vector<256x4xf32>
    %c8 = arith.constant 8 : index
    %c0_45 = arith.constant 0 : index
    %c0_46 = arith.constant 0 : index
    %92 = vector.load %arg2[%c8, %c0_45, %c0_46] : memref<9x4x8xf32, #tpu.memory_space<vmem>>, vector<1x4x8xf32>
    %93 = vector.shape_cast %92 : vector<1x4x8xf32> to vector<4x8xf32>
    %cst_47 = arith.constant dense<0.000000e+00> : vector<256x8xf32>
    %94 = tpu.matmul %91, %93, %cst_47 {dimension_numbers = #tpu.dot_dimension_numbers<[1], [0], [0], [1], [0, 0, 1, 1], [], []>} : vector<256x4xf32>, vector<4x8xf32>, vector<256x8xf32> -> vector<256x8xf32>
    %95 = arith.addf %86, %94 : vector<256x8xf32>
    %c0_48 = arith.constant 0 : index
    %c0_49 = arith.constant 0 : index
    %96 = vector.load %arg3[%c0_48, %c0_49] : memref<1x8xf32, #tpu.memory_space<vmem>>, vector<1x8xf32>
    %97 = vector.broadcast %96 : vector<1x8xf32> to vector<256x8xf32>
    %98 = arith.addf %95, %97 : vector<256x8xf32>
    %cst_50 = arith.constant 0.000000e+00 : f32
    %99 = vector.broadcast %cst_50 : f32 to vector<256x8xf32>
    %100 = arith.cmpf ogt, %98, %99 : vector<256x8xf32>
    %cst_51 = arith.constant 1.000000e-01 : f32
    %101 = vector.broadcast %cst_51 : f32 to vector<256x8xf32>
    %102 = arith.mulf %101, %98 : vector<256x8xf32>
    %103 = arith.select %100, %98, %102 : vector<256x8xi1>, vector<256x8xf32>
    %c0_52 = arith.constant 0 : index
    %c0_53 = arith.constant 0 : index
    %104 = vector.load %arg4[%c0_52, %c0_53] : memref<8x24xf32, #tpu.memory_space<vmem>>, vector<8x24xf32>
    %cst_54 = arith.constant dense<0.000000e+00> : vector<256x24xf32>
    %105 = tpu.matmul %103, %104, %cst_54 {dimension_numbers = #tpu.dot_dimension_numbers<[1], [0], [0], [1], [0, 0, 1, 1], [], []>} : vector<256x8xf32>, vector<8x24xf32>, vector<256x24xf32> -> vector<256x24xf32>
    %c0_55 = arith.constant 0 : index
    %c0_56 = arith.constant 0 : index
    %106 = vector.load %arg5[%c0_55, %c0_56] : memref<1x24xf32, #tpu.memory_space<vmem>>, vector<1x24xf32>
    %107 = vector.broadcast %106 : vector<1x24xf32> to vector<256x24xf32>
    %108 = arith.addf %105, %107 : vector<256x24xf32>
    %cst_57 = arith.constant 0.000000e+00 : f32
    %109 = vector.broadcast %cst_57 : f32 to vector<256x24xf32>
    %110 = arith.cmpf ogt, %108, %109 : vector<256x24xf32>
    %cst_58 = arith.constant 1.000000e-01 : f32
    %111 = vector.broadcast %cst_58 : f32 to vector<256x24xf32>
    %112 = arith.mulf %111, %108 : vector<256x24xf32>
    %113 = arith.select %110, %108, %112 : vector<256x24xi1>, vector<256x24xf32>
    %114 = vector.extract_strided_slice %113 {offsets = [0, 0], sizes = [256, 8], strides = [1, 1]} : vector<256x24xf32> to vector<256x8xf32>
    %c0_59 = arith.constant 0 : index
    %c0_60 = arith.constant 0 : index
    %c0_61 = arith.constant 0 : index
    %c0_62 = arith.constant 0 : index
    %115 = vector.load %arg6[%c0_59, %c0_60, %c0_61, %c0_62] : memref<1x3x256x8xf32, #tpu.memory_space<vmem>>, vector<1x1x256x8xf32>
    %116 = vector.shape_cast %115 : vector<1x1x256x8xf32> to vector<256x8xf32>
    %117 = vector.shape_cast %114 : vector<256x8xf32> to vector<1x1x256x8xf32>
    tpu.vector_store %arg6[%c0_59, %c0_60, %c0_61, %c0_62], %117 {strides = array<i32>} : memref<1x3x256x8xf32, #tpu.memory_space<vmem>>, vector<1x1x256x8xf32>,
    %118 = vector.extract_strided_slice %113 {offsets = [0, 8], sizes = [256, 8], strides = [1, 1]} : vector<256x24xf32> to vector<256x8xf32>
    %c0_63 = arith.constant 0 : index
    %c1_64 = arith.constant 1 : index
    %c0_65 = arith.constant 0 : index
    %c0_66 = arith.constant 0 : index
    %119 = vector.load %arg6[%c0_63, %c1_64, %c0_65, %c0_66] : memref<1x3x256x8xf32, #tpu.memory_space<vmem>>, vector<1x1x256x8xf32>
    %120 = vector.shape_cast %119 : vector<1x1x256x8xf32> to vector<256x8xf32>
    %121 = vector.shape_cast %118 : vector<256x8xf32> to vector<1x1x256x8xf32>
    tpu.vector_store %arg6[%c0_63, %c1_64, %c0_65, %c0_66], %121 {strides = array<i32>} : memref<1x3x256x8xf32, #tpu.memory_space<vmem>>, vector<1x1x256x8xf32>,
    %122 = vector.extract_strided_slice %113 {offsets = [0, 16], sizes = [256, 8], strides = [1, 1]} : vector<256x24xf32> to vector<256x8xf32>
    %c0_67 = arith.constant 0 : index
    %c2_68 = arith.constant 2 : index
    %c0_69 = arith.constant 0 : index
    %c0_70 = arith.constant 0 : index
    %123 = vector.load %arg6[%c0_67, %c2_68, %c0_69, %c0_70] : memref<1x3x256x8xf32, #tpu.memory_space<vmem>>, vector<1x1x256x8xf32>
    %124 = vector.shape_cast %123 : vector<1x1x256x8xf32> to vector<256x8xf32>
    %125 = vector.shape_cast %122 : vector<256x8xf32> to vector<1x1x256x8xf32>
    tpu.vector_store %arg6[%c0_67, %c2_68, %c0_69, %c0_70], %125 {strides = array<i32>} : memref<1x3x256x8xf32, #tpu.memory_space<vmem>>, vector<1x1x256x8xf32>,
    return
  }
  func.func @transform_0(%arg0: i32) -> (i32, i32, i32) {
    %c0_i32 = arith.constant 0 : i32
    %c0_i32_0 = arith.constant 0 : i32
    %c0_i32_1 = arith.constant 0 : i32
    return %arg0, %c0_i32, %c0_i32_0 : i32, i32, i32
  }
  func.func @transform_1(%arg0: i32) -> (i32, i32, i32) {
    %c0_i32 = arith.constant 0 : i32
    %c0_i32_0 = arith.constant 0 : i32
    %c0_i32_1 = arith.constant 0 : i32
    %c0_i32_2 = arith.constant 0 : i32
    return %c0_i32, %c0_i32_0, %c0_i32_1 : i32, i32, i32
  }
  func.func @transform_2(%arg0: i32) -> (i32, i32) {
    %c0_i32 = arith.constant 0 : i32
    %c0_i32_0 = arith.constant 0 : i32
    %c0_i32_1 = arith.constant 0 : i32
    return %c0_i32, %c0_i32_0 : i32, i32
  }
  func.func @transform_3(%arg0: i32) -> (i32, i32) {
    %c0_i32 = arith.constant 0 : i32
    %c0_i32_0 = arith.constant 0 : i32
    %c0_i32_1 = arith.constant 0 : i32
    return %c0_i32, %c0_i32_0 : i32, i32
  }
  func.func @transform_4(%arg0: i32) -> (i32, i32) {
    %c0_i32 = arith.constant 0 : i32
    %c0_i32_0 = arith.constant 0 : i32
    %c0_i32_1 = arith.constant 0 : i32
    return %c0_i32, %c0_i32_0 : i32, i32
  }
  func.func @transform_5(%arg0: i32) -> (i32, i32, i32, i32) {
    %c0_i32 = arith.constant 0 : i32
    %c0_i32_0 = arith.constant 0 : i32
    %c0_i32_1 = arith.constant 0 : i32
    %c0_i32_2 = arith.constant 0 : i32
    return %arg0, %c0_i32, %c0_i32_0, %c0_i32_1 : i32, i32, i32, i32
  }
}

</mosaic_0001>

<llo_original>
// kernel: tpu_custom_call.1
$region0: #{tpu_custom_call.1}
  #allocation0 [shape = 'u32[]', space=smem, size = 0x4, offset = 0x4, fixed_abs, tag = 'smem constant byte address 0x4 - core index']
  #allocation1 [shape = 'u32[144,128]{1,0:T(1,128)}', space=vmem, size = 0x12000, scoped, tag = 'internal scratch']
  %s0 = inlined_call_operand.vmem [shape: f32[2,256,4], index: 0, kind: input, shape index: {}]
  %s1 = inlined_call_operand.vmem [shape: f32[9,4,8], index: 1, kind: input, shape index: {}]
  %s2 = inlined_call_operand.vmem [shape: f32[1,8], index: 2, kind: input, shape index: {}]
  %s3 = inlined_call_operand.vmem [shape: f32[8,24], index: 3, kind: input, shape index: {}]
  %s4 = inlined_call_operand.vmem [shape: f32[1,24], index: 4, kind: input, shape index: {}]
  %s5 = inlined_call_operand.vmem [shape: f32[2,3,256,8], index: 5, kind: output, shape index: {}]
  %s6 = sld [smem:[#allocation0]]
  $region53: #{tpu_custom_call.1} parent=0
    _
  %s8 = ssub.s32 1, %s6
  %s9 = scalar_select 0, %s8, %s6
  loop: start=0, step=1, limit=4
  $region2: #{tpu_custom_call.1} parent=0 // loop_pre_header
    _
  $region3: #{tpu_custom_call.1} parent=0 // loop_header
    %s11 = sphi 0, %s15
    %p12 = scmp.ge.s32.totalorder %s11, 4
    %s21 = sphi 0, %s23
    %s24 = sphi 0, %s21
    %s25 = sphi 0, %s24
    %s41 = sphi 0, %s25
    %s45 = sphi 0, %s45
    %s47 = sphi 0, %s45
    %s48 = sphi 0, %s47
    %s62 = sphi 0, %s48
    %s66 = sphi 0, %s66
    %s68 = sphi 0, %s66
    %s69 = sphi 0, %s68
    %s83 = sphi 0, %s69
    %s87 = sphi 0, %s87
    %s89 = sphi 0, %s87
    %s90 = sphi 0, %s89
    %s104 = sphi 0, %s90
    %s108 = sphi 0, %s108
    %s110 = sphi 0, %s108
    %s111 = sphi 0, %s110
    %s125 = sphi 0, %s111
    %s131 = sphi 0, %s133
    %s134 = sphi 0, %s131
    %s135 = sphi 0, %s134
    %s151 = sphi 0, %s135
  $region4: #{tpu_custom_call.1} parent=0 // loop_header_branch
    %14 = sbr.rel (%p12) target = $region8
  $region5: #{tpu_custom_call.1} parent=0 // loop_body
    %s16 = ssub.s32 %s11, 1
    %s17 = ssub.s32 %s11, 2
    %s18 = sadd.s32 %s11, 1
    %s19 = ssub.s32 %s11, %s18
    %p20 = scmp.eq.s32.totalorder %s19, 0
    %s22 = sadd.s32 %s21, 1
    %s23 = scalar_select %p20, %s21, %s22
    %p26 = pneg %p20
    %p27 = scmp.eq.s32.totalorder %s11, 1
    %p28 = por %p26, %p27
    %p29 = scmp.ne.s32.totalorder %s21, %s24
    %p30 = scmp.eq.s32.totalorder %s11, 0
    %p31 = por %p29, %p30
    %p32 = scmp.ne.s32.totalorder %s21, %s24
    %p33 = scmp.eq.s32.totalorder %s16, 1
    %p34 = por %p32, %p33
    %p35 = scmp.ne.s32.totalorder %s24, %s25
    %p36 = scmp.eq.s32.totalorder %s16, 0
    %p37 = por %p35, %p36
    %p38 = scmp.ne.s32.totalorder %s24, %s25
    %p39 = scmp.eq.s32.totalorder %s17, 1
    %p40 = por %p38, %p39
    %p42 = scmp.ne.s32.totalorder %s25, %s41
    %p43 = scmp.eq.s32.totalorder %s17, 0
    %p44 = por %p42, %p43
    %s46 = sadd.s32 %s45, 1
    %p49 = scmp.eq.s32.totalorder %s11, 1
    %p50 = scmp.ne.s32.totalorder %s45, %s47
    %p51 = scmp.eq.s32.totalorder %s11, 0
    %p52 = por %p50, %p51
    %p53 = scmp.ne.s32.totalorder %s45, %s47
    %p54 = scmp.eq.s32.totalorder %s16, 1
    %p55 = por %p53, %p54
    %p56 = scmp.ne.s32.totalorder %s47, %s48
    %p57 = scmp.eq.s32.totalorder %s16, 0
    %p58 = por %p56, %p57
    %p59 = scmp.ne.s32.totalorder %s47, %s48
    %p60 = scmp.eq.s32.totalorder %s17, 1
    %p61 = por %p59, %p60
    %p63 = scmp.ne.s32.totalorder %s48, %s62
    %p64 = scmp.eq.s32.totalorder %s17, 0
    %p65 = por %p63, %p64
    %s67 = sadd.s32 %s66, 1
    %p70 = scmp.eq.s32.totalorder %s11, 1
    %p71 = scmp.ne.s32.totalorder %s66, %s68
    %p72 = scmp.eq.s32.totalorder %s11, 0
    %p73 = por %p71, %p72
    %p74 = scmp.ne.s32.totalorder %s66, %s68
    %p75 = scmp.eq.s32.totalorder %s16, 1
    %p76 = por %p74, %p75
    %p77 = scmp.ne.s32.totalorder %s68, %s69
    %p78 = scmp.eq.s32.totalorder %s16, 0
    %p79 = por %p77, %p78
    %p80 = scmp.ne.s32.totalorder %s68, %s69
    %p81 = scmp.eq.s32.totalorder %s17, 1
    %p82 = por %p80, %p81
    %p84 = scmp.ne.s32.totalorder %s69, %s83
    %p85 = scmp.eq.s32.totalorder %s17, 0
    %p86 = por %p84, %p85
    %s88 = sadd.s32 %s87, 1
    %p91 = scmp.eq.s32.totalorder %s11, 1
    %p92 = scmp.ne.s32.totalorder %s87, %s89
    %p93 = scmp.eq.s32.totalorder %s11, 0
    %p94 = por %p92, %p93
    %p95 = scmp.ne.s32.totalorder %s87, %s89
    %p96 = scmp.eq.s32.totalorder %s16, 1
    %p97 = por %p95, %p96
    %p98 = scmp.ne.s32.totalorder %s89, %s90
    %p99 = scmp.eq.s32.totalorder %s16, 0
    %p100 = por %p98, %p99
    %p101 = scmp.ne.s32.totalorder %s89, %s90
    %p102 = scmp.eq.s32.totalorder %s17, 1
    %p103 = por %p101, %p102
    %p105 = scmp.ne.s32.totalorder %s90, %s104
    %p106 = scmp.eq.s32.totalorder %s17, 0
    %p107 = por %p105, %p106
    %s109 = sadd.s32 %s108, 1
    %p112 = scmp.eq.s32.totalorder %s11, 1
    %p113 = scmp.ne.s32.totalorder %s108, %s110
    %p114 = scmp.eq.s32.totalorder %s11, 0
    %p115 = por %p113, %p114
    %p116 = scmp.ne.s32.totalorder %s108, %s110
    %p117 = scmp.eq.s32.totalorder %s16, 1
    %p118 = por %p116, %p117
    %p119 = scmp.ne.s32.totalorder %s110, %s111
    %p120 = scmp.eq.s32.totalorder %s16, 0
    %p121 = por %p119, %p120
    %p122 = scmp.ne.s32.totalorder %s110, %s111
    %p123 = scmp.eq.s32.totalorder %s17, 1
    %p124 = por %p122, %p123
    %p126 = scmp.ne.s32.totalorder %s111, %s125
    %p127 = scmp.eq.s32.totalorder %s17, 0
    %p128 = por %p126, %p127
    %s129 = ssub.s32 %s11, %s18
    %p130 = scmp.eq.s32.totalorder %s129, 0
    %s132 = sadd.s32 %s131, 1
    %s133 = scalar_select %p130, %s131, %s132
    %p136 = pneg %p130
    %p137 = scmp.eq.s32.totalorder %s11, 1
    %p138 = por %p136, %p137
    %p139 = scmp.ne.s32.totalorder %s131, %s134
    %p140 = scmp.eq.s32.totalorder %s11, 0
    %p141 = por %p139, %p140
    %p142 = scmp.ne.s32.totalorder %s131, %s134
    %p143 = scmp.eq.s32.totalorder %s16, 1
    %p144 = por %p142, %p143
    %p145 = scmp.ne.s32.totalorder %s134, %s135
    %p146 = scmp.eq.s32.totalorder %s16, 0
    %p147 = por %p145, %p146
    %p148 = scmp.ne.s32.totalorder %s134, %s135
    %p149 = scmp.eq.s32.totalorder %s17, 1
    %p150 = por %p148, %p149
    %p152 = scmp.ne.s32.totalorder %s135, %s151
    %p153 = scmp.eq.s32.totalorder %s17, 0
    %p154 = por %p152, %p153
    %p155 = scmp.le.s32.totalorder 1, %s11
    %p156 = scmp.lt.s32.totalorder %s11, 3
    %p157 = pnand %p155, %p156
    %p158 = pneg %p157
    // Predicated region
    $region9: #{tpu_custom_call.1} parent=5 // pred_check
      _
    $region10: #{tpu_custom_call.1} parent=5 // pred_check_branch
      %160 = sbr.rel (%p157) target = $region12
    $region11: #{tpu_custom_call.1} parent=5 // pred_region
      %s161 = ssub.s32 %s11, 1
      // Predicated region
      $region13: #{tpu_custom_call.1} parent=11 // pred_check
        %p162 = pneg %p58
      $region14: #{tpu_custom_call.1} parent=11 // pred_check_branch
        %164 = sbr.rel (%p162) target = $region16
      $region15: #{tpu_custom_call.1} parent=11 // pred_region
        _
      $region16: #{tpu_custom_call.1} parent=11 // pred_fallthru
        _
      // Predicated region
      $region17: #{tpu_custom_call.1} parent=11 // pred_check
        %p165 = pneg %p79
      $region18: #{tpu_custom_call.1} parent=11 // pred_check_branch
        %167 = sbr.rel (%p165) target = $region20
      $region19: #{tpu_custom_call.1} parent=11 // pred_region
        _
      $region20: #{tpu_custom_call.1} parent=11 // pred_fallthru
        _
      // Predicated region
      $region21: #{tpu_custom_call.1} parent=11 // pred_check
        %p168 = pneg %p100
      $region22: #{tpu_custom_call.1} parent=11 // pred_check_branch
        %170 = sbr.rel (%p168) target = $region24
      $region23: #{tpu_custom_call.1} parent=11 // pred_region
        _
      $region24: #{tpu_custom_call.1} parent=11 // pred_fallthru
        _
      // Predicated region
      $region25: #{tpu_custom_call.1} parent=11 // pred_check
        %p171 = pneg %p121
      $region26: #{tpu_custom_call.1} parent=11 // pred_check_branch
        %173 = sbr.rel (%p171) target = $region28
      $region27: #{tpu_custom_call.1} parent=11 // pred_region
        _
      $region28: #{tpu_custom_call.1} parent=11 // pred_fallthru
        _
    $region12: #{tpu_custom_call.1} parent=5 // pred_fallthru
      _
    %p174 = scmp.lt.s32.totalorder %s11, 2
    // Predicated region
    $region29: #{tpu_custom_call.1} parent=5 // pred_check
      %p175 = pneg %p174
    $region30: #{tpu_custom_call.1} parent=5 // pred_check_branch
      %177 = sbr.rel (%p175) target = $region32
    $region31: #{tpu_custom_call.1} parent=5 // pred_region
      // Predicated region
      $region33: #{tpu_custom_call.1} parent=31 // pred_check
        %p178 = pneg %p31
      $region34: #{tpu_custom_call.1} parent=31 // pred_check_branch
        %180 = sbr.rel (%p178) target = $region36
      $region35: #{tpu_custom_call.1} parent=31 // pred_region
        %p181 = scmp.lt.s32.totalorder %s11, 1
        %s182 = scalar_select %p181, %s11, 1
        %s183 = smul.addr %s182, 32
        %s184 = smul.addr %s183, 8
        %s185 = scalar_lea.vmem %s0, %s184
      $region36: #{tpu_custom_call.1} parent=31 // pred_fallthru
        _
    $region32: #{tpu_custom_call.1} parent=5 // pred_fallthru
      _
    %p186 = scmp.le.s32.totalorder 1, %s11
    %p187 = scmp.lt.s32.totalorder %s11, 3
    %p188 = pnand %p186, %p187
    %p189 = pneg %p188
    // Predicated region
    $region37: #{tpu_custom_call.1} parent=5 // pred_check
      _
    $region38: #{tpu_custom_call.1} parent=5 // pred_check_branch
      %191 = sbr.rel (%p188) target = $region40
    $region39: #{tpu_custom_call.1} parent=5 // pred_region
      %s192 = ssub.s32 %s11, 1
      %p193 = scmp.lt.s32.totalorder %s16, 1
      %s194 = scalar_select %p193, %s16, 1
      %s195 = smul.addr %s194, 32
      %s196 = smul.addr %s195, 8
      %s197 = scalar_lea.vmem %s0, %s196
      %p198 = pneg %p37
      %p199 = pneg %p34
      %p200 = pneg %p58
      %p201 = pneg %p55
      %p202 = pneg %p79
      %p203 = pneg %p76
      %p204 = pneg %p100
      %p205 = pneg %p97
      %p206 = pneg %p121
      %p207 = pneg %p118
      %p208 = pneg %p147
      %p209 = pneg %p144
      %p210 = scmp.lt.s32.totalorder %s16, 1
      %s211 = scalar_select %p210, %s16, 1
      %s212 = smul.addr %s211, 96
      %s213 = smul.addr %s212, 8
      %s214 = scalar_lea.vmem %s5, %s213
      %p215 = scmp.lt.s32.totalorder %s16, 1
      %s216 = scalar_select %p215, %s16, 1
      %s217 = smul.addr %s216, 32
      %s218 = smul.addr %s217, 8
      %s219 = scalar_lea.vmem %s0, %s218
      %p220 = scmp.lt.s32.totalorder %s16, 1
      %s221 = scalar_select %p220, %s16, 1
      %s222 = smul.addr %s221, 96
      %s223 = smul.addr %s222, 8
      %s224 = scalar_lea.vmem %s5, %s223
      %v225 = vld [vmem:[%s219] sm:$0xff]
      %v226 = vld [vmem:[%s219 + $0x8] sm:$0xff]
      %v227 = vld [vmem:[%s219 + $0x10] sm:$0xff]
      %v228 = vld [vmem:[%s219 + $0x18] sm:$0xff]
      %v229 = vld [vmem:[%s219 + $0x20] sm:$0xff]
      %v230 = vld [vmem:[%s219 + $0x28] sm:$0xff]
      %v231 = vld [vmem:[%s219 + $0x30] sm:$0xff]
      %v232 = vld [vmem:[%s219 + $0x38] sm:$0xff]
      %v233 = vld [vmem:[%s219 + $0x40] sm:$0xff]
      %v234 = vld [vmem:[%s219 + $0x48] sm:$0xff]
      %v235 = vld [vmem:[%s219 + $0x50] sm:$0xff]
      %v236 = vld [vmem:[%s219 + $0x58] sm:$0xff]
      %v237 = vld [vmem:[%s219 + $0x60] sm:$0xff]
      %v238 = vld [vmem:[%s219 + $0x68] sm:$0xff]
      %v239 = vld [vmem:[%s219 + $0x70] sm:$0xff]
      %v240 = vld [vmem:[%s219 + $0x78] sm:$0xff]
      %v241 = vld [vmem:[%s219 + $0x80] sm:$0xff]
      %v242 = vld [vmem:[%s219 + $0x88] sm:$0xff]
      %v243 = vld [vmem:[%s219 + $0x90] sm:$0xff]
      %v244 = vld [vmem:[%s219 + $0x98] sm:$0xff]
      %v245 = vld [vmem:[%s219 + $0xa0] sm:$0xff]
      %v246 = vld [vmem:[%s219 + $0xa8] sm:$0xff]
      %v247 = vld [vmem:[%s219 + $0xb0] sm:$0xff]
      %v248 = vld [vmem:[%s219 + $0xb8] sm:$0xff]
      %v249 = vld [vmem:[%s219 + $0xc0] sm:$0xff]
      %v250 = vld [vmem:[%s219 + $0xc8] sm:$0xff]
      %v251 = vld [vmem:[%s219 + $0xd0] sm:$0xff]
      %v252 = vld [vmem:[%s219 + $0xd8] sm:$0xff]
      %v253 = vld [vmem:[%s219 + $0xe0] sm:$0xff]
      %v254 = vld [vmem:[%s219 + $0xe8] sm:$0xff]
      %v255 = vld [vmem:[%s219 + $0xf0] sm:$0xff]
      %v256 = vld [vmem:[%s219 + $0xf8] sm:$0xff]
      %v257 = vlaneseq
      %v258 = vshrl.u32 %v257, 7
      %v259 = vadd.s32 %v258, 8
      %v260 = vadd.s32 %v258, 16
      %v261 = vadd.s32 %v258, 24
      %v262 = vadd.s32 %v258, 32
      %v263 = vadd.s32 %v258, 40
      %v264 = vadd.s32 %v258, 48
      %v265 = vadd.s32 %v258, 56
      %v266 = vadd.s32 %v258, 64
      %v267 = vadd.s32 %v258, 72
      %v268 = vadd.s32 %v258, 80
      %v269 = vadd.s32 %v258, 88
      %v270 = vadd.s32 %v258, 96
      %v271 = vadd.s32 %v258, 104
      %v272 = vadd.s32 %v258, 112
      %v273 = vadd.s32 %v258, 120
      %v274 = vadd.s32 %v258, 128
      %v275 = vadd.s32 %v258, 136
      %v276 = vadd.s32 %v258, 144
      %v277 = vadd.s32 %v258, 152
      %v278 = vadd.s32 %v258, 160
      %v279 = vadd.s32 %v258, 168
      %v280 = vadd.s32 %v258, 176
      %v281 = vadd.s32 %v258, 184
      %v282 = vadd.s32 %v258, 192
      %v283 = vadd.s32 %v258, 200
      %v284 = vadd.s32 %v258, 208
      %v285 = vadd.s32 %v258, 216
      %v286 = vadd.s32 %v258, 224
      %v287 = vadd.s32 %v258, 232
      %v288 = vadd.s32 %v258, 240
      %v289 = vadd.s32 %v258, 248
      %vm290 = vcmp.lt.s32.totalorder %v258, 0
      %v291 = vsub.s32 0, %v258
      %v292 = vsel %vm290, %v291, %v258
      %v293 = vshrl.u32 %v292, 4
      %v294 = vand.u32 %v292, 15
      %v295 = vsub.s32 0, %v294
      %v296 = vsel %vm290, %v295, %v294
      %vm297 = vcmp.lt.s32.totalorder %v259, 0
      %v298 = vsub.s32 0, %v259
      %v299 = vsel %vm297, %v298, %v259
      %v300 = vshrl.u32 %v299, 4
      %v301 = vand.u32 %v299, 15
      %v302 = vsub.s32 0, %v301
      %v303 = vsel %vm297, %v302, %v301
      %vm304 = vcmp.lt.s32.totalorder %v260, 0
      %v305 = vsub.s32 0, %v260
      %v306 = vsel %vm304, %v305, %v260
      %v307 = vshrl.u32 %v306, 4
      %v308 = vand.u32 %v306, 15
      %v309 = vsub.s32 0, %v308
      %v310 = vsel %vm304, %v309, %v308
      %vm311 = vcmp.lt.s32.totalorder %v261, 0
      %v312 = vsub.s32 0, %v261
      %v313 = vsel %vm311, %v312, %v261
      %v314 = vshrl.u32 %v313, 4
      %v315 = vand.u32 %v313, 15
      %v316 = vsub.s32 0, %v315
      %v317 = vsel %vm311, %v316, %v315
      %vm318 = vcmp.lt.s32.totalorder %v262, 0
      %v319 = vsub.s32 0, %v262
      %v320 = vsel %vm318, %v319, %v262
      %v321 = vshrl.u32 %v320, 4
      %v322 = vand.u32 %v320, 15
      %v323 = vsub.s32 0, %v322
      %v324 = vsel %vm318, %v323, %v322
      %vm325 = vcmp.lt.s32.totalorder %v263, 0
      %v326 = vsub.s32 0, %v263
      %v327 = vsel %vm325, %v326, %v263
      %v328 = vshrl.u32 %v327, 4
      %v329 = vand.u32 %v327, 15
      %v330 = vsub.s32 0, %v329
      %v331 = vsel %vm325, %v330, %v329
      %vm332 = vcmp.lt.s32.totalorder %v264, 0
      %v333 = vsub.s32 0, %v264
      %v334 = vsel %vm332, %v333, %v264
      %v335 = vshrl.u32 %v334, 4
      %v336 = vand.u32 %v334, 15
      %v337 = vsub.s32 0, %v336
      %v338 = vsel %vm332, %v337, %v336
      %vm339 = vcmp.lt.s32.totalorder %v265, 0
      %v340 = vsub.s32 0, %v265
      %v341 = vsel %vm339, %v340, %v265
      %v342 = vshrl.u32 %v341, 4
      %v343 = vand.u32 %v341, 15
      %v344 = vsub.s32 0, %v343
      %v345 = vsel %vm339, %v344, %v343
      %vm346 = vcmp.lt.s32.totalorder %v266, 0
      %v347 = vsub.s32 0, %v266
      %v348 = vsel %vm346, %v347, %v266
      %v349 = vshrl.u32 %v348, 4
      %v350 = vand.u32 %v348, 15
      %v351 = vsub.s32 0, %v350
      %v352 = vsel %vm346, %v351, %v350
      %vm353 = vcmp.lt.s32.totalorder %v267, 0
      %v354 = vsub.s32 0, %v267
      %v355 = vsel %vm353, %v354, %v267
      %v356 = vshrl.u32 %v355, 4
      %v357 = vand.u32 %v355, 15
      %v358 = vsub.s32 0, %v357
      %v359 = vsel %vm353, %v358, %v357
      %vm360 = vcmp.lt.s32.totalorder %v268, 0
      %v361 = vsub.s32 0, %v268
      %v362 = vsel %vm360, %v361, %v268
      %v363 = vshrl.u32 %v362, 4
      %v364 = vand.u32 %v362, 15
      %v365 = vsub.s32 0, %v364
      %v366 = vsel %vm360, %v365, %v364
      %vm367 = vcmp.lt.s32.totalorder %v269, 0
      %v368 = vsub.s32 0, %v269
      %v369 = vsel %vm367, %v368, %v269
      %v370 = vshrl.u32 %v369, 4
      %v371 = vand.u32 %v369, 15
      %v372 = vsub.s32 0, %v371
      %v373 = vsel %vm367, %v372, %v371
      %vm374 = vcmp.lt.s32.totalorder %v270, 0
      %v375 = vsub.s32 0, %v270
      %v376 = vsel %vm374, %v375, %v270
      %v377 = vshrl.u32 %v376, 4
      %v378 = vand.u32 %v376, 15
      %v379 = vsub.s32 0, %v378
      %v380 = vsel %vm374, %v379, %v378
      %vm381 = vcmp.lt.s32.totalorder %v271, 0
      %v382 = vsub.s32 0, %v271
      %v383 = vsel %vm381, %v382, %v271
      %v384 = vshrl.u32 %v383, 4
      %v385 = vand.u32 %v383, 15
      %v386 = vsub.s32 0, %v385
      %v387 = vsel %vm381, %v386, %v385
      %vm388 = vcmp.lt.s32.totalorder %v272, 0
      %v389 = vsub.s32 0, %v272
      %v390 = vsel %vm388, %v389, %v272
      %v391 = vshrl.u32 %v390, 4
      %v392 = vand.u32 %v390, 15
      %v393 = vsub.s32 0, %v392
      %v394 = vsel %vm388, %v393, %v392
      %vm395 = vcmp.lt.s32.totalorder %v273, 0
      %v396 = vsub.s32 0, %v273
      %v397 = vsel %vm395, %v396, %v273
      %v398 = vshrl.u32 %v397, 4
      %v399 = vand.u32 %v397, 15
      %v400 = vsub.s32 0, %v399
      %v401 = vsel %vm395, %v400, %v399
      %vm402 = vcmp.lt.s32.totalorder %v274, 0
      %v403 = vsub.s32 0, %v274
      %v404 = vsel %vm402, %v403, %v274
      %v405 = vshrl.u32 %v404, 4
      %v406 = vand.u32 %v404, 15
      %v407 = vsub.s32 0, %v406
      %v408 = vsel %vm402, %v407, %v406
      %vm409 = vcmp.lt.s32.totalorder %v275, 0
      %v410 = vsub.s32 0, %v275
      %v411 = vsel %vm409, %v410, %v275
      %v412 = vshrl.u32 %v411, 4
      %v413 = vand.u32 %v411, 15
      %v414 = vsub.s32 0, %v413
      %v415 = vsel %vm409, %v414, %v413
      %vm416 = vcmp.lt.s32.totalorder %v276, 0
      %v417 = vsub.s32 0, %v276
      %v418 = vsel %vm416, %v417, %v276
      %v419 = vshrl.u32 %v418, 4
      %v420 = vand.u32 %v418, 15
      %v421 = vsub.s32 0, %v420
      %v422 = vsel %vm416, %v421, %v420
      %vm423 = vcmp.lt.s32.totalorder %v277, 0
      %v424 = vsub.s32 0, %v277
      %v425 = vsel %vm423, %v424, %v277
      %v426 = vshrl.u32 %v425, 4
      %v427 = vand.u32 %v425, 15
      %v428 = vsub.s32 0, %v427
      %v429 = vsel %vm423, %v428, %v427
      %vm430 = vcmp.lt.s32.totalorder %v278, 0
      %v431 = vsub.s32 0, %v278
      %v432 = vsel %vm430, %v431, %v278
      %v433 = vshrl.u32 %v432, 4
      %v434 = vand.u32 %v432, 15
      %v435 = vsub.s32 0, %v434
      %v436 = vsel %vm430, %v435, %v434
      %vm437 = vcmp.lt.s32.totalorder %v279, 0
      %v438 = vsub.s32 0, %v279
      %v439 = vsel %vm437, %v438, %v279
      %v440 = vshrl.u32 %v439, 4
      %v441 = vand.u32 %v439, 15
      %v442 = vsub.s32 0, %v441
      %v443 = vsel %vm437, %v442, %v441
      %vm444 = vcmp.lt.s32.totalorder %v280, 0
      %v445 = vsub.s32 0, %v280
      %v446 = vsel %vm444, %v445, %v280
      %v447 = vshrl.u32 %v446, 4
      %v448 = vand.u32 %v446, 15
      %v449 = vsub.s32 0, %v448
      %v450 = vsel %vm444, %v449, %v448
      %vm451 = vcmp.lt.s32.totalorder %v281, 0
      %v452 = vsub.s32 0, %v281
      %v453 = vsel %vm451, %v452, %v281
      %v454 = vshrl.u32 %v453, 4
      %v455 = vand.u32 %v453, 15
      %v456 = vsub.s32 0, %v455
      %v457 = vsel %vm451, %v456, %v455
      %vm458 = vcmp.lt.s32.totalorder %v282, 0
      %v459 = vsub.s32 0, %v282
      %v460 = vsel %vm458, %v459, %v282
      %v461 = vshrl.u32 %v460, 4
      %v462 = vand.u32 %v460, 15
      %v463 = vsub.s32 0, %v462
      %v464 = vsel %vm458, %v463, %v462
      %vm465 = vcmp.lt.s32.totalorder %v283, 0
      %v466 = vsub.s32 0, %v283
      %v467 = vsel %vm465, %v466, %v283
      %v468 = vshrl.u32 %v467, 4
      %v469 = vand.u32 %v467, 15
      %v470 = vsub.s32 0, %v469
      %v471 = vsel %vm465, %v470, %v469
      %vm472 = vcmp.lt.s32.totalorder %v284, 0
      %v473 = vsub.s32 0, %v284
      %v474 = vsel %vm472, %v473, %v284
      %v475 = vshrl.u32 %v474, 4
      %v476 = vand.u32 %v474, 15
      %v477 = vsub.s32 0, %v476
      %v478 = vsel %vm472, %v477, %v476
      %vm479 = vcmp.lt.s32.totalorder %v285, 0
      %v480 = vsub.s32 0, %v285
      %v481 = vsel %vm479, %v480, %v285
      %v482 = vshrl.u32 %v481, 4
      %v483 = vand.u32 %v481, 15
      %v484 = vsub.s32 0, %v483
      %v485 = vsel %vm479, %v484, %v483
      %vm486 = vcmp.lt.s32.totalorder %v286, 0
      %v487 = vsub.s32 0, %v286
      %v488 = vsel %vm486, %v487, %v286
      %v489 = vshrl.u32 %v488, 4
      %v490 = vand.u32 %v488, 15
      %v491 = vsub.s32 0, %v490
      %v492 = vsel %vm486, %v491, %v490
      %vm493 = vcmp.lt.s32.totalorder %v287, 0
      %v494 = vsub.s32 0, %v287
      %v495 = vsel %vm493, %v494, %v287
      %v496 = vshrl.u32 %v495, 4
      %v497 = vand.u32 %v495, 15
      %v498 = vsub.s32 0, %v497
      %v499 = vsel %vm493, %v498, %v497
      %vm500 = vcmp.lt.s32.totalorder %v288, 0
      %v501 = vsub.s32 0, %v288
      %v502 = vsel %vm500, %v501, %v288
      %v503 = vshrl.u32 %v502, 4
      %v504 = vand.u32 %v502, 15
      %v505 = vsub.s32 0, %v504
      %v506 = vsel %vm500, %v505, %v504
      %vm507 = vcmp.lt.s32.totalorder %v289, 0
      %v508 = vsub.s32 0, %v289
      %v509 = vsel %vm507, %v508, %v289
      %v510 = vshrl.u32 %v509, 4
      %v511 = vand.u32 %v509, 15
      %v512 = vsub.s32 0, %v511
      %v513 = vsel %vm507, %v512, %v511
      %vm514 = vcmp.ne.s32.totalorder %v296, 0
      %vm515 = vcmp.ne.s32.totalorder %v303, 0
      %vm516 = vcmp.ne.s32.totalorder %v310, 0
      %vm517 = vcmp.ne.s32.totalorder %v317, 0
      %vm518 = vcmp.ne.s32.totalorder %v324, 0
      %vm519 = vcmp.ne.s32.totalorder %v331, 0
      %vm520 = vcmp.ne.s32.totalorder %v338, 0
      %vm521 = vcmp.ne.s32.totalorder %v345, 0
      %vm522 = vcmp.ne.s32.totalorder %v352, 0
      %vm523 = vcmp.ne.s32.totalorder %v359, 0
      %vm524 = vcmp.ne.s32.totalorder %v366, 0
      %vm525 = vcmp.ne.s32.totalorder %v373, 0
      %vm526 = vcmp.ne.s32.totalorder %v380, 0
      %vm527 = vcmp.ne.s32.totalorder %v387, 0
      %vm528 = vcmp.ne.s32.totalorder %v394, 0
      %vm529 = vcmp.ne.s32.totalorder %v401, 0
      %vm530 = vcmp.ne.s32.totalorder %v408, 0
      %vm531 = vcmp.ne.s32.totalorder %v415, 0
      %vm532 = vcmp.ne.s32.totalorder %v422, 0
      %vm533 = vcmp.ne.s32.totalorder %v429, 0
      %vm534 = vcmp.ne.s32.totalorder %v436, 0
      %vm535 = vcmp.ne.s32.totalorder %v443, 0
      %vm536 = vcmp.ne.s32.totalorder %v450, 0
      %vm537 = vcmp.ne.s32.totalorder %v457, 0
      %vm538 = vcmp.ne.s32.totalorder %v464, 0
      %vm539 = vcmp.ne.s32.totalorder %v471, 0
      %vm540 = vcmp.ne.s32.totalorder %v478, 0
      %vm541 = vcmp.ne.s32.totalorder %v485, 0
      %vm542 = vcmp.ne.s32.totalorder %v492, 0
      %vm543 = vcmp.ne.s32.totalorder %v499, 0
      %vm544 = vcmp.ne.s32.totalorder %v506, 0
      %vm545 = vcmp.ne.s32.totalorder %v513, 0
      %vm546 = vcmp.lt.s32.totalorder %v296, 0
      %vm547 = vcmp.lt.s32.totalorder %v303, 0
      %vm548 = vcmp.lt.s32.totalorder %v310, 0
      %vm549 = vcmp.lt.s32.totalorder %v317, 0
      %vm550 = vcmp.lt.s32.totalorder %v324, 0
      %vm551 = vcmp.lt.s32.totalorder %v331, 0
      %vm552 = vcmp.lt.s32.totalorder %v338, 0
      %vm553 = vcmp.lt.s32.totalorder %v345, 0
      %vm554 = vcmp.lt.s32.totalorder %v352, 0
      %vm555 = vcmp.lt.s32.totalorder %v359, 0
      %vm556 = vcmp.lt.s32.totalorder %v366, 0
      %vm557 = vcmp.lt.s32.totalorder %v373, 0
      %vm558 = vcmp.lt.s32.totalorder %v380, 0
      %vm559 = vcmp.lt.s32.totalorder %v387, 0
      %vm560 = vcmp.lt.s32.totalorder %v394, 0
      %vm561 = vcmp.lt.s32.totalorder %v401, 0
      %vm562 = vcmp.lt.s32.totalorder %v408, 0
      %vm563 = vcmp.lt.s32.totalorder %v415, 0
      %vm564 = vcmp.lt.s32.totalorder %v422, 0
      %vm565 = vcmp.lt.s32.totalorder %v429, 0
      %vm566 = vcmp.lt.s32.totalorder %v436, 0
      %vm567 = vcmp.lt.s32.totalorder %v443, 0
      %vm568 = vcmp.lt.s32.totalorder %v450, 0
      %vm569 = vcmp.lt.s32.totalorder %v457, 0
      %vm570 = vcmp.lt.s32.totalorder %v464, 0
      %vm571 = vcmp.lt.s32.totalorder %v471, 0
      %vm572 = vcmp.lt.s32.totalorder %v478, 0
      %vm573 = vcmp.lt.s32.totalorder %v485, 0
      %vm574 = vcmp.lt.s32.totalorder %v492, 0
      %vm575 = vcmp.lt.s32.totalorder %v499, 0
      %vm576 = vcmp.lt.s32.totalorder %v506, 0
      %vm577 = vcmp.lt.s32.totalorder %v513, 0
      %vm578 = vmand %vm546, %vm514
      %vm579 = vmand %vm547, %vm515
      %vm580 = vmand %vm548, %vm516
      %vm581 = vmand %vm549, %vm517
      %vm582 = vmand %vm550, %vm518
      %vm583 = vmand %vm551, %vm519
      %vm584 = vmand %vm552, %vm520
      %vm585 = vmand %vm553, %vm521
      %vm586 = vmand %vm554, %vm522
      %vm587 = vmand %vm555, %vm523
      %vm588 = vmand %vm556, %vm524
      %vm589 = vmand %vm557, %vm525
      %vm590 = vmand %vm558, %vm526
      %vm591 = vmand %vm559, %vm527
      %vm592 = vmand %vm560, %vm528
      %vm593 = vmand %vm561, %vm529
      %vm594 = vmand %vm562, %vm530
      %vm595 = vmand %vm563, %vm531
      %vm596 = vmand %vm564, %vm532
      %vm597 = vmand %vm565, %vm533
      %vm598 = vmand %vm566, %vm534
      %vm599 = vmand %vm567, %vm535
      %vm600 = vmand %vm568, %vm536
      %vm601 = vmand %vm569, %vm537
      %vm602 = vmand %vm570, %vm538
      %vm603 = vmand %vm571, %vm539
      %vm604 = vmand %vm572, %vm540
      %vm605 = vmand %vm573, %vm541
      %vm606 = vmand %vm574, %vm542
      %vm607 = vmand %vm575, %vm543
      %vm608 = vmand %vm576, %vm544
      %vm609 = vmand %vm577, %vm545
      %v610 = vadd.s32 %v296, 16
      %v611 = vadd.s32 %v303, 16
      %v612 = vadd.s32 %v310, 16
      %v613 = vadd.s32 %v317, 16
      %v614 = vadd.s32 %v324, 16
      %v615 = vadd.s32 %v331, 16
      %v616 = vadd.s32 %v338, 16
      %v617 = vadd.s32 %v345, 16
      %v618 = vadd.s32 %v352, 16
      %v619 = vadd.s32 %v359, 16
      %v620 = vadd.s32 %v366, 16
      %v621 = vadd.s32 %v373, 16
      %v622 = vadd.s32 %v380, 16
      %v623 = vadd.s32 %v387, 16
      %v624 = vadd.s32 %v394, 16
      %v625 = vadd.s32 %v401, 16
      %v626 = vadd.s32 %v408, 16
      %v627 = vadd.s32 %v415, 16
      %v628 = vadd.s32 %v422, 16
      %v629 = vadd.s32 %v429, 16
      %v630 = vadd.s32 %v436, 16
      %v631 = vadd.s32 %v443, 16
      %v632 = vadd.s32 %v450, 16
      %v633 = vadd.s32 %v457, 16
      %v634 = vadd.s32 %v464, 16
      %v635 = vadd.s32 %v471, 16
      %v636 = vadd.s32 %v478, 16
      %v637 = vadd.s32 %v485, 16
      %v638 = vadd.s32 %v492, 16
      %v639 = vadd.s32 %v499, 16
      %v640 = vadd.s32 %v506, 16
      %v641 = vadd.s32 %v513, 16
      %v642 = vsel %vm578, %v610, %v296
      %v643 = vsel %vm579, %v611, %v303
      %v644 = vsel %vm580, %v612, %v310
      %v645 = vsel %vm581, %v613, %v317
      %v646 = vsel %vm582, %v614, %v324
      %v647 = vsel %vm583, %v615, %v331
      %v648 = vsel %vm584, %v616, %v338
      %v649 = vsel %vm585, %v617, %v345
      %v650 = vsel %vm586, %v618, %v352
      %v651 = vsel %vm587, %v619, %v359
      %v652 = vsel %vm588, %v620, %v366
      %v653 = vsel %vm589, %v621, %v373
      %v654 = vsel %vm590, %v622, %v380
      %v655 = vsel %vm591, %v623, %v387
      %v656 = vsel %vm592, %v624, %v394
      %v657 = vsel %vm593, %v625, %v401
      %v658 = vsel %vm594, %v626, %v408
      %v659 = vsel %vm595, %v627, %v415
      %v660 = vsel %vm596, %v628, %v422
      %v661 = vsel %vm597, %v629, %v429
      %v662 = vsel %vm598, %v630, %v436
      %v663 = vsel %vm599, %v631, %v443
      %v664 = vsel %vm600, %v632, %v450
      %v665 = vsel %vm601, %v633, %v457
      %v666 = vsel %vm602, %v634, %v464
      %v667 = vsel %vm603, %v635, %v471
      %v668 = vsel %vm604, %v636, %v478
      %v669 = vsel %vm605, %v637, %v485
      %v670 = vsel %vm606, %v638, %v492
      %v671 = vsel %vm607, %v639, %v499
      %v672 = vsel %vm608, %v640, %v506
      %v673 = vsel %vm609, %v641, %v513
      %vm674 = vcmp.ge.s32.totalorder %v642, 1
      %vm675 = vcmp.ge.s32.totalorder %v643, 1
      %vm676 = vcmp.ge.s32.totalorder %v644, 1
      %vm677 = vcmp.ge.s32.totalorder %v645, 1
      %vm678 = vcmp.ge.s32.totalorder %v646, 1
      %vm679 = vcmp.ge.s32.totalorder %v647, 1
      %vm680 = vcmp.ge.s32.totalorder %v648, 1
      %vm681 = vcmp.ge.s32.totalorder %v649, 1
      %vm682 = vcmp.ge.s32.totalorder %v650, 1
      %vm683 = vcmp.ge.s32.totalorder %v651, 1
      %vm684 = vcmp.ge.s32.totalorder %v652, 1
      %vm685 = vcmp.ge.s32.totalorder %v653, 1
      %vm686 = vcmp.ge.s32.totalorder %v654, 1
      %vm687 = vcmp.ge.s32.totalorder %v655, 1
      %vm688 = vcmp.ge.s32.totalorder %v656, 1
      %vm689 = vcmp.ge.s32.totalorder %v657, 1
      %vm690 = vcmp.ge.s32.totalorder %v658, 1
      %vm691 = vcmp.ge.s32.totalorder %v659, 1
      %vm692 = vcmp.ge.s32.totalorder %v660, 1
      %vm693 = vcmp.ge.s32.totalorder %v661, 1
      %vm694 = vcmp.ge.s32.totalorder %v662, 1
      %vm695 = vcmp.ge.s32.totalorder %v663, 1
      %vm696 = vcmp.ge.s32.totalorder %v664, 1
      %vm697 = vcmp.ge.s32.totalorder %v665, 1
      %vm698 = vcmp.ge.s32.totalorder %v666, 1
      %vm699 = vcmp.ge.s32.totalorder %v667, 1
      %vm700 = vcmp.ge.s32.totalorder %v668, 1
      %vm701 = vcmp.ge.s32.totalorder %v669, 1
      %vm702 = vcmp.ge.s32.totalorder %v670, 1
      %vm703 = vcmp.ge.s32.totalorder %v671, 1
      %vm704 = vcmp.ge.s32.totalorder %v672, 1
      %vm705 = vcmp.ge.s32.totalorder %v673, 1
      %vm706 = vcmp.lt.s32.totalorder %v642, 15
      %vm707 = vcmp.lt.s32.totalorder %v643, 15
      %vm708 = vcmp.lt.s32.totalorder %v644, 15
      %vm709 = vcmp.lt.s32.totalorder %v645, 15
      %vm710 = vcmp.lt.s32.totalorder %v646, 15
      %vm711 = vcmp.lt.s32.totalorder %v647, 15
      %vm712 = vcmp.lt.s32.totalorder %v648, 15
      %vm713 = vcmp.lt.s32.totalorder %v649, 15
      %vm714 = vcmp.lt.s32.totalorder %v650, 15
      %vm715 = vcmp.lt.s32.totalorder %v651, 15
      %vm716 = vcmp.lt.s32.totalorder %v652, 15
      %vm717 = vcmp.lt.s32.totalorder %v653, 15
      %vm718 = vcmp.lt.s32.totalorder %v654, 15
      %vm719 = vcmp.lt.s32.totalorder %v655, 15
      %vm720 = vcmp.lt.s32.totalorder %v656, 15
      %vm721 = vcmp.lt.s32.totalorder %v657, 15
      %vm722 = vcmp.lt.s32.totalorder %v658, 15
      %vm723 = vcmp.lt.s32.totalorder %v659, 15
      %vm724 = vcmp.lt.s32.totalorder %v660, 15
      %vm725 = vcmp.lt.s32.totalorder %v661, 15
      %vm726 = vcmp.lt.s32.totalorder %v662, 15
      %vm727 = vcmp.lt.s32.totalorder %v663, 15
      %vm728 = vcmp.lt.s32.totalorder %v664, 15
      %vm729 = vcmp.lt.s32.totalorder %v665, 15
      %vm730 = vcmp.lt.s32.totalorder %v666, 15
      %vm731 = vcmp.lt.s32.totalorder %v667, 15
      %vm732 = vcmp.lt.s32.totalorder %v668, 15
      %vm733 = vcmp.lt.s32.totalorder %v669, 15
      %vm734 = vcmp.lt.s32.totalorder %v670, 15
      %vm735 = vcmp.lt.s32.totalorder %v671, 15
      %vm736 = vcmp.lt.s32.totalorder %v672, 15
      %vm737 = vcmp.lt.s32.totalorder %v673, 15
      %vm768 = vcmask 1040384
      %v769 = vrot.slane %v225, 7
      %v770 = vrot.slane %v226, 7
      %v771 = vsel %vm768, %v769, %v770
      %v772 = vrot.slane %v227, 7
      %v773 = vsel %vm768, %v770, %v772
      %v774 = vrot.slane %v228, 7
      %v775 = vsel %vm768, %v772, %v774
      %v776 = vrot.slane %v229, 7
      %v777 = vsel %vm768, %v774, %v776
      %v778 = vrot.slane %v230, 7
      %v779 = vsel %vm768, %v776, %v778
      %v780 = vrot.slane %v231, 7
      %v781 = vsel %vm768, %v778, %v780
      %v782 = vrot.slane %v232, 7
      %v783 = vsel %vm768, %v780, %v782
      %v784 = vrot.slane %v233, 7
      %v785 = vsel %vm768, %v782, %v784
      %v786 = vrot.slane %v234, 7
      %v787 = vsel %vm768, %v784, %v786
      %v788 = vrot.slane %v235, 7
      %v789 = vsel %vm768, %v786, %v788
      %v790 = vrot.slane %v236, 7
      %v791 = vsel %vm768, %v788, %v790
      %v792 = vrot.slane %v237, 7
      %v793 = vsel %vm768, %v790, %v792
      %v794 = vrot.slane %v238, 7
      %v795 = vsel %vm768, %v792, %v794
      %v796 = vrot.slane %v239, 7
      %v797 = vsel %vm768, %v794, %v796
      %v798 = vrot.slane %v240, 7
      %v799 = vsel %vm768, %v796, %v798
      %v800 = vrot.slane %v241, 7
      %v801 = vsel %vm768, %v798, %v800
      %v802 = vrot.slane %v242, 7
      %v803 = vsel %vm768, %v800, %v802
      %v804 = vrot.slane %v243, 7
      %v805 = vsel %vm768, %v802, %v804
      %v806 = vrot.slane %v244, 7
      %v807 = vsel %vm768, %v804, %v806
      %v808 = vrot.slane %v245, 7
      %v809 = vsel %vm768, %v806, %v808
      %v810 = vrot.slane %v246, 7
      %v811 = vsel %vm768, %v808, %v810
      %v812 = vrot.slane %v247, 7
      %v813 = vsel %vm768, %v810, %v812
      %v814 = vrot.slane %v248, 7
      %v815 = vsel %vm768, %v812, %v814
      %v816 = vrot.slane %v249, 7
      %v817 = vsel %vm768, %v814, %v816
      %v818 = vrot.slane %v250, 7
      %v819 = vsel %vm768, %v816, %v818
      %v820 = vrot.slane %v251, 7
      %v821 = vsel %vm768, %v818, %v820
      %v822 = vrot.slane %v252, 7
      %v823 = vsel %vm768, %v820, %v822
      %v824 = vrot.slane %v253, 7
      %v825 = vsel %vm768, %v822, %v824
      %v826 = vrot.slane %v254, 7
      %v827 = vsel %vm768, %v824, %v826
      %v858 = vsel %vm768, 0.0, %v769
      %v859 = vsel %vm676, %v858, 0.0
      %v860 = vsel %vm677, %v771, 0.0
      %v861 = vsel %vm678, %v773, 0.0
      %v862 = vsel %vm679, %v775, 0.0
      %v863 = vsel %vm680, %v777, 0.0
      %v864 = vsel %vm681, %v779, 0.0
      %v865 = vsel %vm682, %v781, 0.0
      %v866 = vsel %vm683, %v783, 0.0
      %v867 = vsel %vm684, %v785, 0.0
      %v868 = vsel %vm685, %v787, 0.0
      %v869 = vsel %vm686, %v789, 0.0
      %v870 = vsel %vm687, %v791, 0.0
      %v871 = vsel %vm688, %v793, 0.0
      %v872 = vsel %vm689, %v795, 0.0
      %v873 = vsel %vm690, %v797, 0.0
      %v874 = vsel %vm691, %v799, 0.0
      %v875 = vsel %vm692, %v801, 0.0
      %v876 = vsel %vm693, %v803, 0.0
      %v877 = vsel %vm694, %v805, 0.0
      %v878 = vsel %vm695, %v807, 0.0
      %v879 = vsel %vm696, %v809, 0.0
      %v880 = vsel %vm697, %v811, 0.0
      %v881 = vsel %vm698, %v813, 0.0
      %v882 = vsel %vm699, %v815, 0.0
      %v883 = vsel %vm700, %v817, 0.0
      %v884 = vsel %vm701, %v819, 0.0
      %v885 = vsel %vm702, %v821, 0.0
      %v886 = vsel %vm703, %v823, 0.0
      %v887 = vsel %vm704, %v825, 0.0
      %v888 = vsel %vm705, %v827, 0.0
      %v889 = vld [vmem:[%s1] sm:$0xf]
      %s890 = scalar_lea.vmem %s1, 4
      %v891 = vld [vmem:[%s890] sm:$0xf]
      %vm892 = vcmask 31744
      %v894 = vsel %vm892, 0.0, 0
      %v896 = vsel %vm892, %v225, 0
      %v898 = vsel %vm892, %v226, 0
      %v900 = vsel %vm892, %v227, 0
      %v902 = vsel %vm892, %v228, 0
      %v904 = vsel %vm892, %v229, 0
      %v906 = vsel %vm892, %v230, 0
      %v908 = vsel %vm892, %v231, 0
      %v910 = vsel %vm892, %v232, 0
      %v912 = vsel %vm892, %v233, 0
      %v914 = vsel %vm892, %v234, 0
      %v916 = vsel %vm892, %v235, 0
      %v918 = vsel %vm892, %v236, 0
      %v920 = vsel %vm892, %v237, 0
      %v922 = vsel %vm892, %v238, 0
      %v924 = vsel %vm892, %v239, 0
      %v926 = vsel %vm892, %v240, 0
      %v928 = vsel %vm892, %v241, 0
      %v930 = vsel %vm892, %v242, 0
      %v932 = vsel %vm892, %v243, 0
      %v934 = vsel %vm892, %v244, 0
      %v936 = vsel %vm892, %v245, 0
      %v938 = vsel %vm892, %v246, 0
      %v940 = vsel %vm892, %v247, 0
      %v942 = vsel %vm892, %v248, 0
      %v944 = vsel %vm892, %v249, 0
      %v946 = vsel %vm892, %v250, 0
      %v948 = vsel %vm892, %v251, 0
      %v950 = vsel %vm892, %v252, 0
      %v952 = vsel %vm892, %v253, 0
      %v954 = vsel %vm892, %v254, 0
      %vm956 = vcmask 1043456
      %v958 = vsel %vm956, %v891, 0
      %960 = vmatprep.subr.mxu0 0.0
      %961 = vmatpush1.msra.mxu0 %v958
      %962 = vmatprep.subr.mxu0 0.0
      %963 = vmatpush1.msra.mxu0 0.0
      %964 = vmatprep.subr.mxu0 0.0
      %965 = vmatpush1.msra.mxu0 0.0
      %966 = vmatprep.subr.mxu0 0.0
      %967 = vmatpush1.msra.mxu0 0.0
      %968 = vmatprep.subr.mxu0 0.0
      %969 = vmatpush1.msra.mxu0 0.0
      %970 = vmatprep.subr.mxu0 0.0
      %971 = vmatpush1.msra.mxu0 0.0
      %972 = vmatprep.subr.mxu0 0.0
      %973 = vmatpush1.msra.mxu0 0.0
      %974 = vmatprep.subr.mxu0 0.0
      %975 = vmatpush1.msra.mxu0 0.0
      %976 = vmatprep.subr.mxu0 0.0
      %977 = vmatpush1.msra.mxu0 0.0
      %978 = vmatprep.subr.mxu0 0.0
      %979 = vmatpush1.msra.mxu0 0.0
      %980 = vmatprep.subr.mxu0 0.0
      %981 = vmatpush1.msra.mxu0 0.0
      %982 = vmatprep.subr.mxu0 0.0
      %983 = vmatpush1.msra.mxu0 0.0
      %984 = vmatprep.subr.mxu0 0.0
      %985 = vmatpush1.msra.mxu0 0.0
      %986 = vmatprep.subr.mxu0 0.0
      %987 = vmatpush1.msra.mxu0 0.0
      %988 = vmatprep.subr.mxu0 0.0
      %989 = vmatpush1.msra.mxu0 0.0
      %990 = vmatprep.subr.mxu0 0.0
      %991 = vmatpush1.msra.mxu0 0.0
      %992 = vmatprep.subr.mxu0 0.0
      %993 = vmatpush1.msra.mxu0 0.0
      %994 = vmatprep.subr.mxu0 0.0
      %995 = vmatpush1.msra.mxu0 0.0
      %996 = vmatprep.subr.mxu0 0.0
      %997 = vmatpush1.msra.mxu0 0.0
      %998 = vmatprep.subr.mxu0 0.0
      %999 = vmatpush1.msra.mxu0 0.0
      %1000 = vmatprep.subr.mxu0 0.0
      %1001 = vmatpush1.msra.mxu0 0.0
      %1002 = vmatprep.subr.mxu0 0.0
      %1003 = vmatpush1.msra.mxu0 0.0
      %1004 = vmatprep.subr.mxu0 0.0
      %1005 = vmatpush1.msra.mxu0 0.0
      %1006 = vmatprep.subr.mxu0 0.0
      %1007 = vmatpush1.msra.mxu0 0.0
      %1008 = vmatprep.subr.mxu0 0.0
      %1009 = vmatpush1.msra.mxu0 0.0
      %1010 = vmatprep.subr.mxu0 0.0
      %1011 = vmatpush1.msra.mxu0 0.0
      %1012 = vmatprep.subr.mxu0 0.0
      %1013 = vmatpush1.msra.mxu0 0.0
      %1014 = vmatprep.subr.mxu0 0.0
      %1015 = vmatpush1.msra.mxu0 0.0
      %1016 = vmatprep.subr.mxu0 0.0
      %1017 = vmatpush1.msra.mxu0 0.0
      %1018 = vmatprep.subr.mxu0 0.0
      %1019 = vmatpush1.msra.mxu0 0.0
      %1020 = vmatprep.subr.mxu0 0.0
      %1021 = vmatpush1.msra.mxu0 0.0
      %1022 = vmatprep.subr.mxu0 0.0
      %1023 = vmatpush1.msra.mxu0 0.0
      %1024 = vmatprep.mubr.f32.mxu0 0.0
      %1025 = vmatmul.mubr.f32.gmra.mrb[0].mxu0 %v894
      %v1026 = vpop.f32.mrb[0].mxu0
      %v1027 = vadd.f32 0.0, %v1026
      %v1028 = vpop.f32.mrb[0].mxu0
      %1029 = vmatprep.mubr.f32.mxu0 0.0
      %1030 = vmatmul.mubr.f32.gmra.mrb[0].mxu0 %v894
      %v1031 = vpop.f32.mrb[0].mxu0
      %v1032 = vadd.f32 0.0, %v1031
      %v1033 = vpop.f32.mrb[0].mxu0
      %1034 = vmatprep.mubr.f32.mxu0 0.0
      %1035 = vmatmul.mubr.f32.gmra.mrb[0].mxu0 %v896
      %v1036 = vpop.f32.mrb[0].mxu0
      %v1037 = vadd.f32 0.0, %v1036
      %v1038 = vpop.f32.mrb[0].mxu0
      %1039 = vmatprep.mubr.f32.mxu0 0.0
      %1040 = vmatmul.mubr.f32.gmra.mrb[0].mxu0 %v898
      %v1041 = vpop.f32.mrb[0].mxu0
      %v1042 = vadd.f32 0.0, %v1041
      %v1043 = vpop.f32.mrb[0].mxu0
      %1044 = vmatprep.mubr.f32.mxu0 0.0
      %1045 = vmatmul.mubr.f32.gmra.mrb[0].mxu0 %v900
      %v1046 = vpop.f32.mrb[0].mxu0
      %v1047 = vadd.f32 0.0, %v1046
      %v1048 = vpop.f32.mrb[0].mxu0
      %1049 = vmatprep.mubr.f32.mxu0 0.0
      %1050 = vmatmul.mubr.f32.gmra.mrb[0].mxu0 %v902
      %v1051 = vpop.f32.mrb[0].mxu0
      %v1052 = vadd.f32 0.0, %v1051
      %v1053 = vpop.f32.mrb[0].mxu0
      %1054 = vmatprep.mubr.f32.mxu0 0.0
      %1055 = vmatmul.mubr.f32.gmra.mrb[0].mxu0 %v904
      %v1056 = vpop.f32.mrb[0].mxu0
      %v1057 = vadd.f32 0.0, %v1056
      %v1058 = vpop.f32.mrb[0].mxu0
      %1059 = vmatprep.mubr.f32.mxu0 0.0
      %1060 = vmatmul.mubr.f32.gmra.mrb[0].mxu0 %v906
      %v1061 = vpop.f32.mrb[0].mxu0
      %v1062 = vadd.f32 0.0, %v1061
      %v1063 = vpop.f32.mrb[0].mxu0
      %1064 = vmatprep.mubr.f32.mxu0 0.0
      %1065 = vmatmul.mubr.f32.gmra.mrb[0].mxu0 %v908
      %v1066 = vpop.f32.mrb[0].mxu0
      %v1067 = vadd.f32 0.0, %v1066
      %v1068 = vpop.f32.mrb[0].mxu0
      %1069 = vmatprep.mubr.f32.mxu0 0.0
      %1070 = vmatmul.mubr.f32.gmra.mrb[0].mxu0 %v910
      %v1071 = vpop.f32.mrb[0].mxu0
      %v1072 = vadd.f32 0.0, %v1071
      %v1073 = vpop.f32.mrb[0].mxu0
      %1074 = vmatprep.mubr.f32.mxu0 0.0
      %1075 = vmatmul.mubr.f32.gmra.mrb[0].mxu0 %v912
      %v1076 = vpop.f32.mrb[0].mxu0
      %v1077 = vadd.f32 0.0, %v1076
      %v1078 = vpop.f32.mrb[0].mxu0
      %1079 = vmatprep.mubr.f32.mxu0 0.0
      %1080 = vmatmul.mubr.f32.gmra.mrb[0].mxu0 %v914
      %v1081 = vpop.f32.mrb[0].mxu0
      %v1082 = vadd.f32 0.0, %v1081
      %v1083 = vpop.f32.mrb[0].mxu0
      %1084 = vmatprep.mubr.f32.mxu0 0.0
      %1085 = vmatmul.mubr.f32.gmra.mrb[0].mxu0 %v916
      %v1086 = vpop.f32.mrb[0].mxu0
      %v1087 = vadd.f32 0.0, %v1086
      %v1088 = vpop.f32.mrb[0].mxu0
      %1089 = vmatprep.mubr.f32.mxu0 0.0
      %1090 = vmatmul.mubr.f32.gmra.mrb[0].mxu0 %v918
      %v1091 = vpop.f32.mrb[0].mxu0
      %v1092 = vadd.f32 0.0, %v1091
      %v1093 = vpop.f32.mrb[0].mxu0
      %1094 = vmatprep.mubr.f32.mxu0 0.0
      %1095 = vmatmul.mubr.f32.gmra.mrb[0].mxu0 %v920
      %v1096 = vpop.f32.mrb[0].mxu0
      %v1097 = vadd.f32 0.0, %v1096
      %v1098 = vpop.f32.mrb[0].mxu0
      %1099 = vmatprep.mubr.f32.mxu0 0.0
      %1100 = vmatmul.mubr.f32.gmra.mrb[0].mxu0 %v922
      %v1101 = vpop.f32.mrb[0].mxu0
      %v1102 = vadd.f32 0.0, %v1101
      %v1103 = vpop.f32.mrb[0].mxu0
      %1104 = vmatprep.mubr.f32.mxu0 0.0
      %1105 = vmatmul.mubr.f32.gmra.mrb[0].mxu0 %v924
      %v1106 = vpop.f32.mrb[0].mxu0
      %v1107 = vadd.f32 0.0, %v1106
      %v1108 = vpop.f32.mrb[0].mxu0
      %1109 = vmatprep.mubr.f32.mxu0 0.0
      %1110 = vmatmul.mubr.f32.gmra.mrb[0].mxu0 %v926
      %v1111 = vpop.f32.mrb[0].mxu0
      %v1112 = vadd.f32 0.0, %v1111
      %v1113 = vpop.f32.mrb[0].mxu0
      %1114 = vmatprep.mubr.f32.mxu0 0.0
      %1115 = vmatmul.mubr.f32.gmra.mrb[0].mxu0 %v928
      %v1116 = vpop.f32.mrb[0].mxu0
      %v1117 = vadd.f32 0.0, %v1116
      %v1118 = vpop.f32.mrb[0].mxu0
      %1119 = vmatprep.mubr.f32.mxu0 0.0
      %1120 = vmatmul.mubr.f32.gmra.mrb[0].mxu0 %v930
      %v1121 = vpop.f32.mrb[0].mxu0
      %v1122 = vadd.f32 0.0, %v1121
      %v1123 = vpop.f32.mrb[0].mxu0
      %1124 = vmatprep.mubr.f32.mxu0 0.0
      %1125 = vmatmul.mubr.f32.gmra.mrb[0].mxu0 %v932
      %v1126 = vpop.f32.mrb[0].mxu0
      %v1127 = vadd.f32 0.0, %v1126
      %v1128 = vpop.f32.mrb[0].mxu0
      %1129 = vmatprep.mubr.f32.mxu0 0.0
      %1130 = vmatmul.mubr.f32.gmra.mrb[0].mxu0 %v934
      %v1131 = vpop.f32.mrb[0].mxu0
      %v1132 = vadd.f32 0.0, %v1131
      %v1133 = vpop.f32.mrb[0].mxu0
      %1134 = vmatprep.mubr.f32.mxu0 0.0
      %1135 = vmatmul.mubr.f32.gmra.mrb[0].mxu0 %v936
      %v1136 = vpop.f32.mrb[0].mxu0
      %v1137 = vadd.f32 0.0, %v1136
      %v1138 = vpop.f32.mrb[0].mxu0
      %1139 = vmatprep.mubr.f32.mxu0 0.0
      %1140 = vmatmul.mubr.f32.gmra.mrb[0].mxu0 %v938
      %v1141 = vpop.f32.mrb[0].mxu0
      %v1142 = vadd.f32 0.0, %v1141
      %v1143 = vpop.f32.mrb[0].mxu0
      %1144 = vmatprep.mubr.f32.mxu0 0.0
      %1145 = vmatmul.mubr.f32.gmra.mrb[0].mxu0 %v940
      %v1146 = vpop.f32.mrb[0].mxu0
      %v1147 = vadd.f32 0.0, %v1146
      %v1148 = vpop.f32.mrb[0].mxu0
      %1149 = vmatprep.mubr.f32.mxu0 0.0
      %1150 = vmatmul.mubr.f32.gmra.mrb[0].mxu0 %v942
      %v1151 = vpop.f32.mrb[0].mxu0
      %v1152 = vadd.f32 0.0, %v1151
      %v1153 = vpop.f32.mrb[0].mxu0
      %1154 = vmatprep.mubr.f32.mxu0 0.0
      %1155 = vmatmul.mubr.f32.gmra.mrb[0].mxu0 %v944
      %v1156 = vpop.f32.mrb[0].mxu0
      %v1157 = vadd.f32 0.0, %v1156
      %v1158 = vpop.f32.mrb[0].mxu0
      %1159 = vmatprep.mubr.f32.mxu0 0.0
      %1160 = vmatmul.mubr.f32.gmra.mrb[0].mxu0 %v946
      %v1161 = vpop.f32.mrb[0].mxu0
      %v1162 = vadd.f32 0.0, %v1161
      %v1163 = vpop.f32.mrb[0].mxu0
      %1164 = vmatprep.mubr.f32.mxu0 0.0
      %1165 = vmatmul.mubr.f32.gmra.mrb[0].mxu0 %v948
      %v1166 = vpop.f32.mrb[0].mxu0
      %v1167 = vadd.f32 0.0, %v1166
      %v1168 = vpop.f32.mrb[0].mxu0
      %1169 = vmatprep.mubr.f32.mxu0 0.0
      %1170 = vmatmul.mubr.f32.gmra.mrb[0].mxu0 %v950
      %v1171 = vpop.f32.mrb[0].mxu0
      %v1172 = vadd.f32 0.0, %v1171
      %v1173 = vpop.f32.mrb[0].mxu0
      %1174 = vmatprep.mubr.f32.mxu0 0.0
      %1175 = vmatmul.mubr.f32.gmra.mrb[0].mxu0 %v952
      %v1176 = vpop.f32.mrb[0].mxu0
      %v1177 = vadd.f32 0.0, %v1176
      %v1178 = vpop.f32.mrb[0].mxu0
      %1179 = vmatprep.mubr.f32.mxu0 0.0
      %1180 = vmatmul.mubr.f32.gmra.mrb[0].mxu0 %v954
      %v1181 = vpop.f32.mrb[0].mxu0
      %v1182 = vadd.f32 0.0, %v1181
      %v1183 = vpop.f32.mrb[0].mxu0
      %1184 = vdwg.mxu0
      %v1186 = vsel %vm892, %v859, 0
      %v1189 = vsel %vm892, %v860, 0
      %v1192 = vsel %vm892, %v861, 0
      %v1195 = vsel %vm892, %v862, 0
      %v1198 = vsel %vm892, %v863, 0
      %v1201 = vsel %vm892, %v864, 0
      %v1204 = vsel %vm892, %v865, 0
      %v1207 = vsel %vm892, %v866, 0
      %v1210 = vsel %vm892, %v867, 0
      %v1213 = vsel %vm892, %v868, 0
      %v1216 = vsel %vm892, %v869, 0
      %v1219 = vsel %vm892, %v870, 0
      %v1222 = vsel %vm892, %v871, 0
      %v1225 = vsel %vm892, %v872, 0
      %v1228 = vsel %vm892, %v873, 0
      %v1231 = vsel %vm892, %v874, 0
      %v1234 = vsel %vm892, %v875, 0
      %v1237 = vsel %vm892, %v876, 0
      %v1240 = vsel %vm892, %v877, 0
      %v1243 = vsel %vm892, %v878, 0
      %v1246 = vsel %vm892, %v879, 0
      %v1249 = vsel %vm892, %v880, 0
      %v1252 = vsel %vm892, %v881, 0
      %v1255 = vsel %vm892, %v882, 0
      %v1258 = vsel %vm892, %v883, 0
      %v1261 = vsel %vm892, %v884, 0
      %v1264 = vsel %vm892, %v885, 0
      %v1267 = vsel %vm892, %v886, 0
      %v1270 = vsel %vm892, %v887, 0
      %v1273 = vsel %vm892, %v888, 0
      %v1276 = vsel %vm956, %v889, 0
      %1278 = vmatprep.subr.mxu0 0.0
      %1279 = vmatpush1.msra.mxu0 %v1276
      %1280 = vmatprep.subr.mxu0 0.0
      %1281 = vmatpush1.msra.mxu0 0.0
      %1282 = vmatprep.subr.mxu0 0.0
      %1283 = vmatpush1.msra.mxu0 0.0
      %1284 = vmatprep.subr.mxu0 0.0
      %1285 = vmatpush1.msra.mxu0 0.0
      %1286 = vmatprep.subr.mxu0 0.0
      %1287 = vmatpush1.msra.mxu0 0.0
      %1288 = vmatprep.subr.mxu0 0.0
      %1289 = vmatpush1.msra.mxu0 0.0
      %1290 = vmatprep.subr.mxu0 0.0
      %1291 = vmatpush1.msra.mxu0 0.0
      %1292 = vmatprep.subr.mxu0 0.0
      %1293 = vmatpush1.msra.mxu0 0.0
      %1294 = vmatprep.subr.mxu0 0.0
      %1295 = vmatpush1.msra.mxu0 0.0
      %1296 = vmatprep.subr.mxu0 0.0
      %1297 = vmatpush1.msra.mxu0 0.0
      %1298 = vmatprep.subr.mxu0 0.0
      %1299 = vmatpush1.msra.mxu0 0.0
      %1300 = vmatprep.subr.mxu0 0.0
      %1301 = vmatpush1.msra.mxu0 0.0
      %1302 = vmatprep.subr.mxu0 0.0
      %1303 = vmatpush1.msra.mxu0 0.0
      %1304 = vmatprep.subr.mxu0 0.0
      %1305 = vmatpush1.msra.mxu0 0.0
      %1306 = vmatprep.subr.mxu0 0.0
      %1307 = vmatpush1.msra.mxu0 0.0
      %1308 = vmatprep.subr.mxu0 0.0
      %1309 = vmatpush1.msra.mxu0 0.0
      %1310 = vmatprep.subr.mxu0 0.0
      %1311 = vmatpush1.msra.mxu0 0.0
      %1312 = vmatprep.subr.mxu0 0.0
      %1313 = vmatpush1.msra.mxu0 0.0
      %1314 = vmatprep.subr.mxu0 0.0
      %1315 = vmatpush1.msra.mxu0 0.0
      %1316 = vmatprep.subr.mxu0 0.0
      %1317 = vmatpush1.msra.mxu0 0.0
      %1318 = vmatprep.subr.mxu0 0.0
      %1319 = vmatpush1.msra.mxu0 0.0
      %1320 = vmatprep.subr.mxu0 0.0
      %1321 = vmatpush1.msra.mxu0 0.0
      %1322 = vmatprep.subr.mxu0 0.0
      %1323 = vmatpush1.msra.mxu0 0.0
      %1324 = vmatprep.subr.mxu0 0.0
      %1325 = vmatpush1.msra.mxu0 0.0
      %1326 = vmatprep.subr.mxu0 0.0
      %1327 = vmatpush1.msra.mxu0 0.0
      %1328 = vmatprep.subr.mxu0 0.0
      %1329 = vmatpush1.msra.mxu0 0.0
      %1330 = vmatprep.subr.mxu0 0.0
      %1331 = vmatpush1.msra.mxu0 0.0
      %1332 = vmatprep.subr.mxu0 0.0
      %1333 = vmatpush1.msra.mxu0 0.0
      %1334 = vmatprep.subr.mxu0 0.0
      %1335 = vmatpush1.msra.mxu0 0.0
      %1336 = vmatprep.subr.mxu0 0.0
      %1337 = vmatpush1.msra.mxu0 0.0
      %1338 = vmatprep.subr.mxu0 0.0
      %1339 = vmatpush1.msra.mxu0 0.0
      %1340 = vmatprep.subr.mxu0 0.0
      %1341 = vmatpush1.msra.mxu0 0.0
      %1342 = vmatprep.mubr.f32.mxu0 0.0
      %1343 = vmatmul.mubr.f32.gmra.mrb[0].mxu0 %v894
      %v1344 = vpop.f32.mrb[0].mxu0
      %v1345 = vadd.f32 %v1027, %v1344
      %v1346 = vpop.f32.mrb[0].mxu0
      %1347 = vmatprep.mubr.f32.mxu0 0.0
      %1348 = vmatmul.mubr.f32.gmra.mrb[0].mxu0 %v894
      %v1349 = vpop.f32.mrb[0].mxu0
      %v1350 = vadd.f32 %v1032, %v1349
      %v1351 = vpop.f32.mrb[0].mxu0
      %1352 = vmatprep.mubr.f32.mxu0 0.0
      %1353 = vmatmul.mubr.f32.gmra.mrb[0].mxu0 %v1186
      %v1354 = vpop.f32.mrb[0].mxu0
      %v1355 = vadd.f32 %v1037, %v1354
      %v1356 = vpop.f32.mrb[0].mxu0
      %1357 = vmatprep.mubr.f32.mxu0 0.0
      %1358 = vmatmul.mubr.f32.gmra.mrb[0].mxu0 %v1189
      %v1359 = vpop.f32.mrb[0].mxu0
      %v1360 = vadd.f32 %v1042, %v1359
      %v1361 = vpop.f32.mrb[0].mxu0
      %1362 = vmatprep.mubr.f32.mxu0 0.0
      %1363 = vmatmul.mubr.f32.gmra.mrb[0].mxu0 %v1192
      %v1364 = vpop.f32.mrb[0].mxu0
      %v1365 = vadd.f32 %v1047, %v1364
      %v1366 = vpop.f32.mrb[0].mxu0
      %1367 = vmatprep.mubr.f32.mxu0 0.0
      %1368 = vmatmul.mubr.f32.gmra.mrb[0].mxu0 %v1195
      %v1369 = vpop.f32.mrb[0].mxu0
      %v1370 = vadd.f32 %v1052, %v1369
      %v1371 = vpop.f32.mrb[0].mxu0
      %1372 = vmatprep.mubr.f32.mxu0 0.0
      %1373 = vmatmul.mubr.f32.gmra.mrb[0].mxu0 %v1198
      %v1374 = vpop.f32.mrb[0].mxu0
      %v1375 = vadd.f32 %v1057, %v1374
      %v1376 = vpop.f32.mrb[0].mxu0
      %1377 = vmatprep.mubr.f32.mxu0 0.0
      %1378 = vmatmul.mubr.f32.gmra.mrb[0].mxu0 %v1201
      %v1379 = vpop.f32.mrb[0].mxu0
      %v1380 = vadd.f32 %v1062, %v1379
      %v1381 = vpop.f32.mrb[0].mxu0
      %1382 = vmatprep.mubr.f32.mxu0 0.0
      %1383 = vmatmul.mubr.f32.gmra.mrb[0].mxu0 %v1204
      %v1384 = vpop.f32.mrb[0].mxu0
      %v1385 = vadd.f32 %v1067, %v1384
      %v1386 = vpop.f32.mrb[0].mxu0
      %1387 = vmatprep.mubr.f32.mxu0 0.0
      %1388 = vmatmul.mubr.f32.gmra.mrb[0].mxu0 %v1207
      %v1389 = vpop.f32.mrb[0].mxu0
      %v1390 = vadd.f32 %v1072, %v1389
      %v1391 = vpop.f32.mrb[0].mxu0
      %1392 = vmatprep.mubr.f32.mxu0 0.0
      %1393 = vmatmul.mubr.f32.gmra.mrb[0].mxu0 %v1210
      %v1394 = vpop.f32.mrb[0].mxu0
      %v1395 = vadd.f32 %v1077, %v1394
      %v1396 = vpop.f32.mrb[0].mxu0
      %1397 = vmatprep.mubr.f32.mxu0 0.0
      %1398 = vmatmul.mubr.f32.gmra.mrb[0].mxu0 %v1213
      %v1399 = vpop.f32.mrb[0].mxu0
      %v1400 = vadd.f32 %v1082, %v1399
      %v1401 = vpop.f32.mrb[0].mxu0
      %1402 = vmatprep.mubr.f32.mxu0 0.0
      %1403 = vmatmul.mubr.f32.gmra.mrb[0].mxu0 %v1216
      %v1404 = vpop.f32.mrb[0].mxu0
      %v1405 = vadd.f32 %v1087, %v1404
      %v1406 = vpop.f32.mrb[0].mxu0
      %1407 = vmatprep.mubr.f32.mxu0 0.0
      %1408 = vmatmul.mubr.f32.gmra.mrb[0].mxu0 %v1219
      %v1409 = vpop.f32.mrb[0].mxu0
      %v1410 = vadd.f32 %v1092, %v1409
      %v1411 = vpop.f32.mrb[0].mxu0
      %1412 = vmatprep.mubr.f32.mxu0 0.0
      %1413 = vmatmul.mubr.f32.gmra.mrb[0].mxu0 %v1222
      %v1414 = vpop.f32.mrb[0].mxu0
      %v1415 = vadd.f32 %v1097, %v1414
      %v1416 = vpop.f32.mrb[0].mxu0
      %1417 = vmatprep.mubr.f32.mxu0 0.0
      %1418 = vmatmul.mubr.f32.gmra.mrb[0].mxu0 %v1225
      %v1419 = vpop.f32.mrb[0].mxu0
      %v1420 = vadd.f32 %v1102, %v1419
      %v1421 = vpop.f32.mrb[0].mxu0
      %1422 = vmatprep.mubr.f32.mxu0 0.0
      %1423 = vmatmul.mubr.f32.gmra.mrb[0].mxu0 %v1228
      %v1424 = vpop.f32.mrb[0].mxu0
      %v1425 = vadd.f32 %v1107, %v1424
      %v1426 = vpop.f32.mrb[0].mxu0
      %1427 = vmatprep.mubr.f32.mxu0 0.0
      %1428 = vmatmul.mubr.f32.gmra.mrb[0].mxu0 %v1231
      %v1429 = vpop.f32.mrb[0].mxu0
      %v1430 = vadd.f32 %v1112, %v1429
      %v1431 = vpop.f32.mrb[0].mxu0
      %1432 = vmatprep.mubr.f32.mxu0 0.0
      %1433 = vmatmul.mubr.f32.gmra.mrb[0].mxu0 %v1234
      %v1434 = vpop.f32.mrb[0].mxu0
      %v1435 = vadd.f32 %v1117, %v1434
      %v1436 = vpop.f32.mrb[0].mxu0
      %1437 = vmatprep.mubr.f32.mxu0 0.0
      %1438 = vmatmul.mubr.f32.gmra.mrb[0].mxu0 %v1237
      %v1439 = vpop.f32.mrb[0].mxu0
      %v1440 = vadd.f32 %v1122, %v1439
      %v1441 = vpop.f32.mrb[0].mxu0
      %1442 = vmatprep.mubr.f32.mxu0 0.0
      %1443 = vmatmul.mubr.f32.gmra.mrb[0].mxu0 %v1240
      %v1444 = vpop.f32.mrb[0].mxu0
      %v1445 = vadd.f32 %v1127, %v1444
      %v1446 = vpop.f32.mrb[0].mxu0
      %1447 = vmatprep.mubr.f32.mxu0 0.0
      %1448 = vmatmul.mubr.f32.gmra.mrb[0].mxu0 %v1243
      %v1449 = vpop.f32.mrb[0].mxu0
      %v1450 = vadd.f32 %v1132, %v1449
      %v1451 = vpop.f32.mrb[0].mxu0
      %1452 = vmatprep.mubr.f32.mxu0 0.0
      %1453 = vmatmul.mubr.f32.gmra.mrb[0].mxu0 %v1246
      %v1454 = vpop.f32.mrb[0].mxu0
      %v1455 = vadd.f32 %v1137, %v1454
      %v1456 = vpop.f32.mrb[0].mxu0
      %1457 = vmatprep.mubr.f32.mxu0 0.0
      %1458 = vmatmul.mubr.f32.gmra.mrb[0].mxu0 %v1249
      %v1459 = vpop.f32.mrb[0].mxu0
      %v1460 = vadd.f32 %v1142, %v1459
      %v1461 = vpop.f32.mrb[0].mxu0
      %1462 = vmatprep.mubr.f32.mxu0 0.0
      %1463 = vmatmul.mubr.f32.gmra.mrb[0].mxu0 %v1252
      %v1464 = vpop.f32.mrb[0].mxu0
      %v1465 = vadd.f32 %v1147, %v1464
      %v1466 = vpop.f32.mrb[0].mxu0
      %1467 = vmatprep.mubr.f32.mxu0 0.0
      %1468 = vmatmul.mubr.f32.gmra.mrb[0].mxu0 %v1255
      %v1469 = vpop.f32.mrb[0].mxu0
      %v1470 = vadd.f32 %v1152, %v1469
      %v1471 = vpop.f32.mrb[0].mxu0
      %1472 = vmatprep.mubr.f32.mxu0 0.0
      %1473 = vmatmul.mubr.f32.gmra.mrb[0].mxu0 %v1258
      %v1474 = vpop.f32.mrb[0].mxu0
      %v1475 = vadd.f32 %v1157, %v1474
      %v1476 = vpop.f32.mrb[0].mxu0
      %1477 = vmatprep.mubr.f32.mxu0 0.0
      %1478 = vmatmul.mubr.f32.gmra.mrb[0].mxu0 %v1261
      %v1479 = vpop.f32.mrb[0].mxu0
      %v1480 = vadd.f32 %v1162, %v1479
      %v1481 = vpop.f32.mrb[0].mxu0
      %1482 = vmatprep.mubr.f32.mxu0 0.0
      %1483 = vmatmul.mubr.f32.gmra.mrb[0].mxu0 %v1264
      %v1484 = vpop.f32.mrb[0].mxu0
      %v1485 = vadd.f32 %v1167, %v1484
      %v1486 = vpop.f32.mrb[0].mxu0
      %1487 = vmatprep.mubr.f32.mxu0 0.0
      %1488 = vmatmul.mubr.f32.gmra.mrb[0].mxu0 %v1267
      %v1489 = vpop.f32.mrb[0].mxu0
      %v1490 = vadd.f32 %v1172, %v1489
      %v1491 = vpop.f32.mrb[0].mxu0
      %1492 = vmatprep.mubr.f32.mxu0 0.0
      %1493 = vmatmul.mubr.f32.gmra.mrb[0].mxu0 %v1270
      %v1494 = vpop.f32.mrb[0].mxu0
      %v1495 = vadd.f32 %v1177, %v1494
      %v1496 = vpop.f32.mrb[0].mxu0
      %1497 = vmatprep.mubr.f32.mxu0 0.0
      %1498 = vmatmul.mubr.f32.gmra.mrb[0].mxu0 %v1273
      %v1499 = vpop.f32.mrb[0].mxu0
      %v1500 = vadd.f32 %v1182, %v1499
      %v1501 = vpop.f32.mrb[0].mxu0
      %1502 = vdwg.mxu0
      %vm1504 = vcmask 1046528
      %v1505 = vrot.slane %v225, 1
      %v1506 = vrot.slane %v226, 1
      %v1507 = vsel %vm1504, %v1505, %v1506
      %v1508 = vrot.slane %v227, 1
      %v1509 = vsel %vm1504, %v1506, %v1508
      %v1510 = vrot.slane %v228, 1
      %v1511 = vsel %vm1504, %v1508, %v1510
      %v1512 = vrot.slane %v229, 1
      %v1513 = vsel %vm1504, %v1510, %v1512
      %v1514 = vrot.slane %v230, 1
      %v1515 = vsel %vm1504, %v1512, %v1514
      %v1516 = vrot.slane %v231, 1
      %v1517 = vsel %vm1504, %v1514, %v1516
      %v1518 = vrot.slane %v232, 1
      %v1519 = vsel %vm1504, %v1516, %v1518
      %v1520 = vrot.slane %v233, 1
      %v1521 = vsel %vm1504, %v1518, %v1520
      %v1522 = vrot.slane %v234, 1
      %v1523 = vsel %vm1504, %v1520, %v1522
      %v1524 = vrot.slane %v235, 1
      %v1525 = vsel %vm1504, %v1522, %v1524
      %v1526 = vrot.slane %v236, 1
      %v1527 = vsel %vm1504, %v1524, %v1526
      %v1528 = vrot.slane %v237, 1
      %v1529 = vsel %vm1504, %v1526, %v1528
      %v1530 = vrot.slane %v238, 1
      %v1531 = vsel %vm1504, %v1528, %v1530
      %v1532 = vrot.slane %v239, 1
      %v1533 = vsel %vm1504, %v1530, %v1532
      %v1534 = vrot.slane %v240, 1
      %v1535 = vsel %vm1504, %v1532, %v1534
      %v1536 = vrot.slane %v241, 1
      %v1537 = vsel %vm1504, %v1534, %v1536
      %v1538 = vrot.slane %v242, 1
      %v1539 = vsel %vm1504, %v1536, %v1538
      %v1540 = vrot.slane %v243, 1
      %v1541 = vsel %vm1504, %v1538, %v1540
      %v1542 = vrot.slane %v244, 1
      %v1543 = vsel %vm1504, %v1540, %v1542
      %v1544 = vrot.slane %v245, 1
      %v1545 = vsel %vm1504, %v1542, %v1544
      %v1546 = vrot.slane %v246, 1
      %v1547 = vsel %vm1504, %v1544, %v1546
      %v1548 = vrot.slane %v247, 1
      %v1549 = vsel %vm1504, %v1546, %v1548
      %v1550 = vrot.slane %v248, 1
      %v1551 = vsel %vm1504, %v1548, %v1550
      %v1552 = vrot.slane %v249, 1
      %v1553 = vsel %vm1504, %v1550, %v1552
      %v1554 = vrot.slane %v250, 1
      %v1555 = vsel %vm1504, %v1552, %v1554
      %v1556 = vrot.slane %v251, 1
      %v1557 = vsel %vm1504, %v1554, %v1556
      %v1558 = vrot.slane %v252, 1
      %v1559 = vsel %vm1504, %v1556, %v1558
      %v1560 = vrot.slane %v253, 1
      %v1561 = vsel %vm1504, %v1558, %v1560
      %v1562 = vrot.slane %v254, 1
      %v1563 = vsel %vm1504, %v1560, %v1562
      %v1564 = vrot.slane %v255, 1
      %v1565 = vsel %vm1504, %v1562, %v1564
      %v1597 = vsel %vm1504, 0.0, %v1505
      %v1598 = vsel %vm707, %v1597, 0.0
      %v1599 = vsel %vm708, %v1507, 0.0
      %v1600 = vsel %vm709, %v1509, 0.0
      %v1601 = vsel %vm710, %v1511, 0.0
      %v1602 = vsel %vm711, %v1513, 0.0
      %v1603 = vsel %vm712, %v1515, 0.0
      %v1604 = vsel %vm713, %v1517, 0.0
      %v1605 = vsel %vm714, %v1519, 0.0
      %v1606 = vsel %vm715, %v1521, 0.0
      %v1607 = vsel %vm716, %v1523, 0.0
      %v1608 = vsel %vm717, %v1525, 0.0
      %v1609 = vsel %vm718, %v1527, 0.0
      %v1610 = vsel %vm719, %v1529, 0.0
      %v1611 = vsel %vm720, %v1531, 0.0
      %v1612 = vsel %vm721, %v1533, 0.0
      %v1613 = vsel %vm722, %v1535, 0.0
      %v1614 = vsel %vm723, %v1537, 0.0
      %v1615 = vsel %vm724, %v1539, 0.0
      %v1616 = vsel %vm725, %v1541, 0.0
      %v1617 = vsel %vm726, %v1543, 0.0
      %v1618 = vsel %vm727, %v1545, 0.0
      %v1619 = vsel %vm728, %v1547, 0.0
      %v1620 = vsel %vm729, %v1549, 0.0
      %v1621 = vsel %vm730, %v1551, 0.0
      %v1622 = vsel %vm731, %v1553, 0.0
      %v1623 = vsel %vm732, %v1555, 0.0
      %v1624 = vsel %vm733, %v1557, 0.0
      %v1625 = vsel %vm734, %v1559, 0.0
      %v1626 = vsel %vm735, %v1561, 0.0
      %v1627 = vsel %vm736, %v1563, 0.0
      %v1628 = vsel %vm737, %v1565, 0.0
      %s1629 = scalar_lea.vmem %s1, 8
      %v1630 = vld [vmem:[%s1629] sm:$0xf]
      %v1632 = vsel %vm892, %v1598, 0
      %v1635 = vsel %vm892, %v1599, 0
      %v1638 = vsel %vm892, %v1600, 0
      %v1641 = vsel %vm892, %v1601, 0
      %v1644 = vsel %vm892, %v1602, 0
      %v1647 = vsel %vm892, %v1603, 0
      %v1650 = vsel %vm892, %v1604, 0
      %v1653 = vsel %vm892, %v1605, 0
      %v1656 = vsel %vm892, %v1606, 0
      %v1659 = vsel %vm892, %v1607, 0
      %v1662 = vsel %vm892, %v1608, 0
      %v1665 = vsel %vm892, %v1609, 0
      %v1668 = vsel %vm892, %v1610, 0
      %v1671 = vsel %vm892, %v1611, 0
      %v1674 = vsel %vm892, %v1612, 0
      %v1677 = vsel %vm892, %v1613, 0
      %v1680 = vsel %vm892, %v1614, 0
      %v1683 = vsel %vm892, %v1615, 0
      %v1686 = vsel %vm892, %v1616, 0
      %v1689 = vsel %vm892, %v1617, 0
      %v1692 = vsel %vm892, %v1618, 0
      %v1695 = vsel %vm892, %v1619, 0
      %v1698 = vsel %vm892, %v1620, 0
      %v1701 = vsel %vm892, %v1621, 0
      %v1704 = vsel %vm892, %v1622, 0
      %v1707 = vsel %vm892, %v1623, 0
      %v1710 = vsel %vm892, %v1624, 0
      %v1713 = vsel %vm892, %v1625, 0
      %v1716 = vsel %vm892, %v1626, 0
      %v1719 = vsel %vm892, %v1627, 0
      %v1722 = vsel %vm892, %v1628, 0
      %v1725 = vsel %vm956, %v1630, 0
      %1727 = vmatprep.subr.mxu0 0.0
      %1728 = vmatpush1.msra.mxu0 %v1725
      %1729 = vmatprep.subr.mxu0 0.0
      %1730 = vmatpush1.msra.mxu0 0.0
      %1731 = vmatprep.subr.mxu0 0.0
      %1732 = vmatpush1.msra.mxu0 0.0
      %1733 = vmatprep.subr.mxu0 0.0
      %1734 = vmatpush1.msra.mxu0 0.0
      %1735 = vmatprep.subr.mxu0 0.0
      %1736 = vmatpush1.msra.mxu0 0.0
      %1737 = vmatprep.subr.mxu0 0.0
      %1738 = vmatpush1.msra.mxu0 0.0
      %1739 = vmatprep.subr.mxu0 0.0
      %1740 = vmatpush1.msra.mxu0 0.0
      %1741 = vmatprep.subr.mxu0 0.0
      %1742 = vmatpush1.msra.mxu0 0.0
      %1743 = vmatprep.subr.mxu0 0.0
      %1744 = vmatpush1.msra.mxu0 0.0
      %1745 = vmatprep.subr.mxu0 0.0
      %1746 = vmatpush1.msra.mxu0 0.0
      %1747 = vmatprep.subr.mxu0 0.0
      %1748 = vmatpush1.msra.mxu0 0.0
      %1749 = vmatprep.subr.mxu0 0.0
      %1750 = vmatpush1.msra.mxu0 0.0
      %1751 = vmatprep.subr.mxu0 0.0
      %1752 = vmatpush1.msra.mxu0 0.0
      %1753 = vmatprep.subr.mxu0 0.0
      %1754 = vmatpush1.msra.mxu0 0.0
      %1755 = vmatprep.subr.mxu0 0.0
      %1756 = vmatpush1.msra.mxu0 0.0
      %1757 = vmatprep.subr.mxu0 0.0
      %1758 = vmatpush1.msra.mxu0 0.0
      %1759 = vmatprep.subr.mxu0 0.0
      %1760 = vmatpush1.msra.mxu0 0.0
      %1761 = vmatprep.subr.mxu0 0.0
      %1762 = vmatpush1.msra.mxu0 0.0
      %1763 = vmatprep.subr.mxu0 0.0
      %1764 = vmatpush1.msra.mxu0 0.0
      %1765 = vmatprep.subr.mxu0 0.0
      %1766 = vmatpush1.msra.mxu0 0.0
      %1767 = vmatprep.subr.mxu0 0.0
      %1768 = vmatpush1.msra.mxu0 0.0
      %1769 = vmatprep.subr.mxu0 0.0
      %1770 = vmatpush1.msra.mxu0 0.0
      %1771 = vmatprep.subr.mxu0 0.0
      %1772 = vmatpush1.msra.mxu0 0.0
      %1773 = vmatprep.subr.mxu0 0.0
      %1774 = vmatpush1.msra.mxu0 0.0
      %1775 = vmatprep.subr.mxu0 0.0
      %1776 = vmatpush1.msra.mxu0 0.0
      %1777 = vmatprep.subr.mxu0 0.0
      %1778 = vmatpush1.msra.mxu0 0.0
      %1779 = vmatprep.subr.mxu0 0.0
      %1780 = vmatpush1.msra.mxu0 0.0
      %1781 = vmatprep.subr.mxu0 0.0
      %1782 = vmatpush1.msra.mxu0 0.0
      %1783 = vmatprep.subr.mxu0 0.0
      %1784 = vmatpush1.msra.mxu0 0.0
      %1785 = vmatprep.subr.mxu0 0.0
      %1786 = vmatpush1.msra.mxu0 0.0
      %1787 = vmatprep.subr.mxu0 0.0
      %1788 = vmatpush1.msra.mxu0 0.0
      %1789 = vmatprep.subr.mxu0 0.0
      %1790 = vmatpush1.msra.mxu0 0.0
      %1791 = vmatprep.mubr.f32.mxu0 0.0
      %1792 = vmatmul.mubr.f32.gmra.mrb[0].mxu0 %v894
      %v1793 = vpop.f32.mrb[0].mxu0
      %v1794 = vadd.f32 0.0, %v1793
      %v1795 = vpop.f32.mrb[0].mxu0
      %1796 = vmatprep.mubr.f32.mxu0 0.0
      %1797 = vmatmul.mubr.f32.gmra.mrb[0].mxu0 %v1632
      %v1798 = vpop.f32.mrb[0].mxu0
      %v1799 = vadd.f32 0.0, %v1798
      %v1800 = vpop.f32.mrb[0].mxu0
      %1801 = vmatprep.mubr.f32.mxu0 0.0
      %1802 = vmatmul.mubr.f32.gmra.mrb[0].mxu0 %v1635
      %v1803 = vpop.f32.mrb[0].mxu0
      %v1804 = vadd.f32 0.0, %v1803
      %v1805 = vpop.f32.mrb[0].mxu0
      %1806 = vmatprep.mubr.f32.mxu0 0.0
      %1807 = vmatmul.mubr.f32.gmra.mrb[0].mxu0 %v1638
      %v1808 = vpop.f32.mrb[0].mxu0
      %v1809 = vadd.f32 0.0, %v1808
      %v1810 = vpop.f32.mrb[0].mxu0
      %1811 = vmatprep.mubr.f32.mxu0 0.0
      %1812 = vmatmul.mubr.f32.gmra.mrb[0].mxu0 %v1641
      %v1813 = vpop.f32.mrb[0].mxu0
      %v1814 = vadd.f32 0.0, %v1813
      %v1815 = vpop.f32.mrb[0].mxu0
      %1816 = vmatprep.mubr.f32.mxu0 0.0
      %1817 = vmatmul.mubr.f32.gmra.mrb[0].mxu0 %v1644
      %v1818 = vpop.f32.mrb[0].mxu0
      %v1819 = vadd.f32 0.0, %v1818
      %v1820 = vpop.f32.mrb[0].mxu0
      %1821 = vmatprep.mubr.f32.mxu0 0.0
      %1822 = vmatmul.mubr.f32.gmra.mrb[0].mxu0 %v1647
      %v1823 = vpop.f32.mrb[0].mxu0
      %v1824 = vadd.f32 0.0, %v1823
      %v1825 = vpop.f32.mrb[0].mxu0
      %1826 = vmatprep.mubr.f32.mxu0 0.0
      %1827 = vmatmul.mubr.f32.gmra.mrb[0].mxu0 %v1650
      %v1828 = vpop.f32.mrb[0].mxu0
      %v1829 = vadd.f32 0.0, %v1828
      %v1830 = vpop.f32.mrb[0].mxu0
      %1831 = vmatprep.mubr.f32.mxu0 0.0
      %1832 = vmatmul.mubr.f32.gmra.mrb[0].mxu0 %v1653
      %v1833 = vpop.f32.mrb[0].mxu0
      %v1834 = vadd.f32 0.0, %v1833
      %v1835 = vpop.f32.mrb[0].mxu0
      %1836 = vmatprep.mubr.f32.mxu0 0.0
      %1837 = vmatmul.mubr.f32.gmra.mrb[0].mxu0 %v1656
      %v1838 = vpop.f32.mrb[0].mxu0
      %v1839 = vadd.f32 0.0, %v1838
      %v1840 = vpop.f32.mrb[0].mxu0
      %1841 = vmatprep.mubr.f32.mxu0 0.0
      %1842 = vmatmul.mubr.f32.gmra.mrb[0].mxu0 %v1659
      %v1843 = vpop.f32.mrb[0].mxu0
      %v1844 = vadd.f32 0.0, %v1843
      %v1845 = vpop.f32.mrb[0].mxu0
      %1846 = vmatprep.mubr.f32.mxu0 0.0
      %1847 = vmatmul.mubr.f32.gmra.mrb[0].mxu0 %v1662
      %v1848 = vpop.f32.mrb[0].mxu0
      %v1849 = vadd.f32 0.0, %v1848
      %v1850 = vpop.f32.mrb[0].mxu0
      %1851 = vmatprep.mubr.f32.mxu0 0.0
      %1852 = vmatmul.mubr.f32.gmra.mrb[0].mxu0 %v1665
      %v1853 = vpop.f32.mrb[0].mxu0
      %v1854 = vadd.f32 0.0, %v1853
      %v1855 = vpop.f32.mrb[0].mxu0
      %1856 = vmatprep.mubr.f32.mxu0 0.0
      %1857 = vmatmul.mubr.f32.gmra.mrb[0].mxu0 %v1668
      %v1858 = vpop.f32.mrb[0].mxu0
      %v1859 = vadd.f32 0.0, %v1858
      %v1860 = vpop.f32.mrb[0].mxu0
      %1861 = vmatprep.mubr.f32.mxu0 0.0
      %1862 = vmatmul.mubr.f32.gmra.mrb[0].mxu0 %v1671
      %v1863 = vpop.f32.mrb[0].mxu0
      %v1864 = vadd.f32 0.0, %v1863
      %v1865 = vpop.f32.mrb[0].mxu0
      %1866 = vmatprep.mubr.f32.mxu0 0.0
      %1867 = vmatmul.mubr.f32.gmra.mrb[0].mxu0 %v1674
      %v1868 = vpop.f32.mrb[0].mxu0
      %v1869 = vadd.f32 0.0, %v1868
      %v1870 = vpop.f32.mrb[0].mxu0
      %1871 = vmatprep.mubr.f32.mxu0 0.0
      %1872 = vmatmul.mubr.f32.gmra.mrb[0].mxu0 %v1677
      %v1873 = vpop.f32.mrb[0].mxu0
      %v1874 = vadd.f32 0.0, %v1873
      %v1875 = vpop.f32.mrb[0].mxu0
      %1876 = vmatprep.mubr.f32.mxu0 0.0
      %1877 = vmatmul.mubr.f32.gmra.mrb[0].mxu0 %v1680
      %v1878 = vpop.f32.mrb[0].mxu0
      %v1879 = vadd.f32 0.0, %v1878
      %v1880 = vpop.f32.mrb[0].mxu0
      %1881 = vmatprep.mubr.f32.mxu0 0.0
      %1882 = vmatmul.mubr.f32.gmra.mrb[0].mxu0 %v1683
      %v1883 = vpop.f32.mrb[0].mxu0
      %v1884 = vadd.f32 0.0, %v1883
      %v1885 = vpop.f32.mrb[0].mxu0
      %1886 = vmatprep.mubr.f32.mxu0 0.0
      %1887 = vmatmul.mubr.f32.gmra.mrb[0].mxu0 %v1686
      %v1888 = vpop.f32.mrb[0].mxu0
      %v1889 = vadd.f32 0.0, %v1888
      %v1890 = vpop.f32.mrb[0].mxu0
      %1891 = vmatprep.mubr.f32.mxu0 0.0
      %1892 = vmatmul.mubr.f32.gmra.mrb[0].mxu0 %v1689
      %v1893 = vpop.f32.mrb[0].mxu0
      %v1894 = vadd.f32 0.0, %v1893
      %v1895 = vpop.f32.mrb[0].mxu0
      %1896 = vmatprep.mubr.f32.mxu0 0.0
      %1897 = vmatmul.mubr.f32.gmra.mrb[0].mxu0 %v1692
      %v1898 = vpop.f32.mrb[0].mxu0
      %v1899 = vadd.f32 0.0, %v1898
      %v1900 = vpop.f32.mrb[0].mxu0
      %1901 = vmatprep.mubr.f32.mxu0 0.0
      %1902 = vmatmul.mubr.f32.gmra.mrb[0].mxu0 %v1695
      %v1903 = vpop.f32.mrb[0].mxu0
      %v1904 = vadd.f32 0.0, %v1903
      %v1905 = vpop.f32.mrb[0].mxu0
      %1906 = vmatprep.mubr.f32.mxu0 0.0
      %1907 = vmatmul.mubr.f32.gmra.mrb[0].mxu0 %v1698
      %v1908 = vpop.f32.mrb[0].mxu0
      %v1909 = vadd.f32 0.0, %v1908
      %v1910 = vpop.f32.mrb[0].mxu0
      %1911 = vmatprep.mubr.f32.mxu0 0.0
      %1912 = vmatmul.mubr.f32.gmra.mrb[0].mxu0 %v1701
      %v1913 = vpop.f32.mrb[0].mxu0
      %v1914 = vadd.f32 0.0, %v1913
      %v1915 = vpop.f32.mrb[0].mxu0
      %1916 = vmatprep.mubr.f32.mxu0 0.0
      %1917 = vmatmul.mubr.f32.gmra.mrb[0].mxu0 %v1704
      %v1918 = vpop.f32.mrb[0].mxu0
      %v1919 = vadd.f32 0.0, %v1918
      %v1920 = vpop.f32.mrb[0].mxu0
      %1921 = vmatprep.mubr.f32.mxu0 0.0
      %1922 = vmatmul.mubr.f32.gmra.mrb[0].mxu0 %v1707
      %v1923 = vpop.f32.mrb[0].mxu0
      %v1924 = vadd.f32 0.0, %v1923
      %v1925 = vpop.f32.mrb[0].mxu0
      %1926 = vmatprep.mubr.f32.mxu0 0.0
      %1927 = vmatmul.mubr.f32.gmra.mrb[0].mxu0 %v1710
      %v1928 = vpop.f32.mrb[0].mxu0
      %v1929 = vadd.f32 0.0, %v1928
      %v1930 = vpop.f32.mrb[0].mxu0
      %1931 = vmatprep.mubr.f32.mxu0 0.0
      %1932 = vmatmul.mubr.f32.gmra.mrb[0].mxu0 %v1713
      %v1933 = vpop.f32.mrb[0].mxu0
      %v1934 = vadd.f32 0.0, %v1933
      %v1935 = vpop.f32.mrb[0].mxu0
      %1936 = vmatprep.mubr.f32.mxu0 0.0
      %1937 = vmatmul.mubr.f32.gmra.mrb[0].mxu0 %v1716
      %v1938 = vpop.f32.mrb[0].mxu0
      %v1939 = vadd.f32 0.0, %v1938
      %v1940 = vpop.f32.mrb[0].mxu0
      %1941 = vmatprep.mubr.f32.mxu0 0.0
      %1942 = vmatmul.mubr.f32.gmra.mrb[0].mxu0 %v1719
      %v1943 = vpop.f32.mrb[0].mxu0
      %v1944 = vadd.f32 0.0, %v1943
      %v1945 = vpop.f32.mrb[0].mxu0
      %1946 = vmatprep.mubr.f32.mxu0 0.0
      %1947 = vmatmul.mubr.f32.gmra.mrb[0].mxu0 %v1722
      %v1948 = vpop.f32.mrb[0].mxu0
      %v1949 = vadd.f32 0.0, %v1948
      %v1950 = vpop.f32.mrb[0].mxu0
      %1951 = vdwg.mxu0
      %v1952 = vadd.f32 %v1345, %v1794
      %v1953 = vadd.f32 %v1350, %v1799
      %v1954 = vadd.f32 %v1355, %v1804
      %v1955 = vadd.f32 %v1360, %v1809
      %v1956 = vadd.f32 %v1365, %v1814
      %v1957 = vadd.f32 %v1370, %v1819
      %v1958 = vadd.f32 %v1375, %v1824
      %v1959 = vadd.f32 %v1380, %v1829
      %v1960 = vadd.f32 %v1385, %v1834
      %v1961 = vadd.f32 %v1390, %v1839
      %v1962 = vadd.f32 %v1395, %v1844
      %v1963 = vadd.f32 %v1400, %v1849
      %v1964 = vadd.f32 %v1405, %v1854
      %v1965 = vadd.f32 %v1410, %v1859
      %v1966 = vadd.f32 %v1415, %v1864
      %v1967 = vadd.f32 %v1420, %v1869
      %v1968 = vadd.f32 %v1425, %v1874
      %v1969 = vadd.f32 %v1430, %v1879
      %v1970 = vadd.f32 %v1435, %v1884
      %v1971 = vadd.f32 %v1440, %v1889
      %v1972 = vadd.f32 %v1445, %v1894
      %v1973 = vadd.f32 %v1450, %v1899
      %v1974 = vadd.f32 %v1455, %v1904
      %v1975 = vadd.f32 %v1460, %v1909
      %v1976 = vadd.f32 %v1465, %v1914
      %v1977 = vadd.f32 %v1470, %v1919
      %v1978 = vadd.f32 %v1475, %v1924
      %v1979 = vadd.f32 %v1480, %v1929
      %v1980 = vadd.f32 %v1485, %v1934
      %v1981 = vadd.f32 %v1490, %v1939
      %v1982 = vadd.f32 %v1495, %v1944
      %v1983 = vadd.f32 %v1500, %v1949
      %v1985 = vrot.slane %v255, 7
      %v1986 = vsel %vm768, %v826, %v1985
      %v1987 = vrot.slane %v256, 7
      %v1988 = vsel %vm768, %v1985, %v1987
      %v1991 = vsel %vm674, %v858, 0.0
      %v1992 = vsel %vm675, %v771, 0.0
      %v1993 = vsel %vm676, %v773, 0.0
      %v1994 = vsel %vm677, %v775, 0.0
      %v1995 = vsel %vm678, %v777, 0.0
      %v1996 = vsel %vm679, %v779, 0.0
      %v1997 = vsel %vm680, %v781, 0.0
      %v1998 = vsel %vm681, %v783, 0.0
      %v1999 = vsel %vm682, %v785, 0.0
      %v2000 = vsel %vm683, %v787, 0.0
      %v2001 = vsel %vm684, %v789, 0.0
      %v2002 = vsel %vm685, %v791, 0.0
      %v2003 = vsel %vm686, %v793, 0.0
      %v2004 = vsel %vm687, %v795, 0.0
      %v2005 = vsel %vm688, %v797, 0.0
      %v2006 = vsel %vm689, %v799, 0.0
      %v2007 = vsel %vm690, %v801, 0.0
      %v2008 = vsel %vm691, %v803, 0.0
      %v2009 = vsel %vm692, %v805, 0.0
      %v2010 = vsel %vm693, %v807, 0.0
      %v2011 = vsel %vm694, %v809, 0.0
      %v2012 = vsel %vm695, %v811, 0.0
      %v2013 = vsel %vm696, %v813, 0.0
      %v2014 = vsel %vm697, %v815, 0.0
      %v2015 = vsel %vm698, %v817, 0.0
      %v2016 = vsel %vm699, %v819, 0.0
      %v2017 = vsel %vm700, %v821, 0.0
      %v2018 = vsel %vm701, %v823, 0.0
      %v2019 = vsel %vm702, %v825, 0.0
      %v2020 = vsel %vm703, %v827, 0.0
      %v2021 = vsel %vm704, %v1986, 0.0
      %v2022 = vsel %vm705, %v1988, 0.0
      %s2023 = scalar_lea.vmem %s1, 12
      %v2024 = vld [vmem:[%s2023] sm:$0xf]
      %v2026 = vsel %vm892, %v1991, 0
      %v2029 = vsel %vm892, %v1992, 0
      %v2032 = vsel %vm892, %v1993, 0
      %v2035 = vsel %vm892, %v1994, 0
      %v2038 = vsel %vm892, %v1995, 0
      %v2041 = vsel %vm892, %v1996, 0
      %v2044 = vsel %vm892, %v1997, 0
      %v2047 = vsel %vm892, %v1998, 0
      %v2050 = vsel %vm892, %v1999, 0
      %v2053 = vsel %vm892, %v2000, 0
      %v2056 = vsel %vm892, %v2001, 0
      %v2059 = vsel %vm892, %v2002, 0
      %v2062 = vsel %vm892, %v2003, 0
      %v2065 = vsel %vm892, %v2004, 0
      %v2068 = vsel %vm892, %v2005, 0
      %v2071 = vsel %vm892, %v2006, 0
      %v2074 = vsel %vm892, %v2007, 0
      %v2077 = vsel %vm892, %v2008, 0
      %v2080 = vsel %vm892, %v2009, 0
      %v2083 = vsel %vm892, %v2010, 0
      %v2086 = vsel %vm892, %v2011, 0
      %v2089 = vsel %vm892, %v2012, 0
      %v2092 = vsel %vm892, %v2013, 0
      %v2095 = vsel %vm892, %v2014, 0
      %v2098 = vsel %vm892, %v2015, 0
      %v2101 = vsel %vm892, %v2016, 0
      %v2104 = vsel %vm892, %v2017, 0
      %v2107 = vsel %vm892, %v2018, 0
      %v2110 = vsel %vm892, %v2019, 0
      %v2113 = vsel %vm892, %v2020, 0
      %v2116 = vsel %vm892, %v2021, 0
      %v2119 = vsel %vm892, %v2022, 0
      %v2122 = vsel %vm956, %v2024, 0
      %2124 = vmatprep.subr.mxu0 0.0
      %2125 = vmatpush1.msra.mxu0 %v2122
      %2126 = vmatprep.subr.mxu0 0.0
      %2127 = vmatpush1.msra.mxu0 0.0
      %2128 = vmatprep.subr.mxu0 0.0
      %2129 = vmatpush1.msra.mxu0 0.0
      %2130 = vmatprep.subr.mxu0 0.0
      %2131 = vmatpush1.msra.mxu0 0.0
      %2132 = vmatprep.subr.mxu0 0.0
      %2133 = vmatpush1.msra.mxu0 0.0
      %2134 = vmatprep.subr.mxu0 0.0
      %2135 = vmatpush1.msra.mxu0 0.0
      %2136 = vmatprep.subr.mxu0 0.0
      %2137 = vmatpush1.msra.mxu0 0.0
      %2138 = vmatprep.subr.mxu0 0.0
      %2139 = vmatpush1.msra.mxu0 0.0
      %2140 = vmatprep.subr.mxu0 0.0
      %2141 = vmatpush1.msra.mxu0 0.0
      %2142 = vmatprep.subr.mxu0 0.0
      %2143 = vmatpush1.msra.mxu0 0.0
      %2144 = vmatprep.subr.mxu0 0.0
      %2145 = vmatpush1.msra.mxu0 0.0
      %2146 = vmatprep.subr.mxu0 0.0
      %2147 = vmatpush1.msra.mxu0 0.0
      %2148 = vmatprep.subr.mxu0 0.0
      %2149 = vmatpush1.msra.mxu0 0.0
      %2150 = vmatprep.subr.mxu0 0.0
      %2151 = vmatpush1.msra.mxu0 0.0
      %2152 = vmatprep.subr.mxu0 0.0
      %2153 = vmatpush1.msra.mxu0 0.0
      %2154 = vmatprep.subr.mxu0 0.0
      %2155 = vmatpush1.msra.mxu0 0.0
      %2156 = vmatprep.subr.mxu0 0.0
      %2157 = vmatpush1.msra.mxu0 0.0
      %2158 = vmatprep.subr.mxu0 0.0
      %2159 = vmatpush1.msra.mxu0 0.0
      %2160 = vmatprep.subr.mxu0 0.0
      %2161 = vmatpush1.msra.mxu0 0.0
      %2162 = vmatprep.subr.mxu0 0.0
      %2163 = vmatpush1.msra.mxu0 0.0
      %2164 = vmatprep.subr.mxu0 0.0
      %2165 = vmatpush1.msra.mxu0 0.0
      %2166 = vmatprep.subr.mxu0 0.0
      %2167 = vmatpush1.msra.mxu0 0.0
      %2168 = vmatprep.subr.mxu0 0.0
      %2169 = vmatpush1.msra.mxu0 0.0
      %2170 = vmatprep.subr.mxu0 0.0
      %2171 = vmatpush1.msra.mxu0 0.0
      %2172 = vmatprep.subr.mxu0 0.0
      %2173 = vmatpush1.msra.mxu0 0.0
      %2174 = vmatprep.subr.mxu0 0.0
      %2175 = vmatpush1.msra.mxu0 0.0
      %2176 = vmatprep.subr.mxu0 0.0
      %2177 = vmatpush1.msra.mxu0 0.0
      %2178 = vmatprep.subr.mxu0 0.0
      %2179 = vmatpush1.msra.mxu0 0.0
      %2180 = vmatprep.subr.mxu0 0.0
      %2181 = vmatpush1.msra.mxu0 0.0
      %2182 = vmatprep.subr.mxu0 0.0
      %2183 = vmatpush1.msra.mxu0 0.0
      %2184 = vmatprep.subr.mxu0 0.0
      %2185 = vmatpush1.msra.mxu0 0.0
      %2186 = vmatprep.subr.mxu0 0.0
      %2187 = vmatpush1.msra.mxu0 0.0
      %2188 = vmatprep.mubr.f32.mxu0 0.0
      %2189 = vmatmul.mubr.f32.gmra.mrb[0].mxu0 %v2026
      %v2190 = vpop.f32.mrb[0].mxu0
      %v2191 = vadd.f32 0.0, %v2190
      %v2192 = vpop.f32.mrb[0].mxu0
      %2193 = vmatprep.mubr.f32.mxu0 0.0
      %2194 = vmatmul.mubr.f32.gmra.mrb[0].mxu0 %v2029
      %v2195 = vpop.f32.mrb[0].mxu0
      %v2196 = vadd.f32 0.0, %v2195
      %v2197 = vpop.f32.mrb[0].mxu0
      %2198 = vmatprep.mubr.f32.mxu0 0.0
      %2199 = vmatmul.mubr.f32.gmra.mrb[0].mxu0 %v2032
      %v2200 = vpop.f32.mrb[0].mxu0
      %v2201 = vadd.f32 0.0, %v2200
      %v2202 = vpop.f32.mrb[0].mxu0
      %2203 = vmatprep.mubr.f32.mxu0 0.0
      %2204 = vmatmul.mubr.f32.gmra.mrb[0].mxu0 %v2035
      %v2205 = vpop.f32.mrb[0].mxu0
      %v2206 = vadd.f32 0.0, %v2205
      %v2207 = vpop.f32.mrb[0].mxu0
      %2208 = vmatprep.mubr.f32.mxu0 0.0
      %2209 = vmatmul.mubr.f32.gmra.mrb[0].mxu0 %v2038
      %v2210 = vpop.f32.mrb[0].mxu0
      %v2211 = vadd.f32 0.0, %v2210
      %v2212 = vpop.f32.mrb[0].mxu0
      %2213 = vmatprep.mubr.f32.mxu0 0.0
      %2214 = vmatmul.mubr.f32.gmra.mrb[0].mxu0 %v2041
      %v2215 = vpop.f32.mrb[0].mxu0
      %v2216 = vadd.f32 0.0, %v2215
      %v2217 = vpop.f32.mrb[0].mxu0
      %2218 = vmatprep.mubr.f32.mxu0 0.0
      %2219 = vmatmul.mubr.f32.gmra.mrb[0].mxu0 %v2044
      %v2220 = vpop.f32.mrb[0].mxu0
      %v2221 = vadd.f32 0.0, %v2220
      %v2222 = vpop.f32.mrb[0].mxu0
      %2223 = vmatprep.mubr.f32.mxu0 0.0
      %2224 = vmatmul.mubr.f32.gmra.mrb[0].mxu0 %v2047
      %v2225 = vpop.f32.mrb[0].mxu0
      %v2226 = vadd.f32 0.0, %v2225
      %v2227 = vpop.f32.mrb[0].mxu0
      %2228 = vmatprep.mubr.f32.mxu0 0.0
      %2229 = vmatmul.mubr.f32.gmra.mrb[0].mxu0 %v2050
      %v2230 = vpop.f32.mrb[0].mxu0
      %v2231 = vadd.f32 0.0, %v2230
      %v2232 = vpop.f32.mrb[0].mxu0
      %2233 = vmatprep.mubr.f32.mxu0 0.0
      %2234 = vmatmul.mubr.f32.gmra.mrb[0].mxu0 %v2053
      %v2235 = vpop.f32.mrb[0].mxu0
      %v2236 = vadd.f32 0.0, %v2235
      %v2237 = vpop.f32.mrb[0].mxu0
      %2238 = vmatprep.mubr.f32.mxu0 0.0
      %2239 = vmatmul.mubr.f32.gmra.mrb[0].mxu0 %v2056
      %v2240 = vpop.f32.mrb[0].mxu0
      %v2241 = vadd.f32 0.0, %v2240
      %v2242 = vpop.f32.mrb[0].mxu0
      %2243 = vmatprep.mubr.f32.mxu0 0.0
      %2244 = vmatmul.mubr.f32.gmra.mrb[0].mxu0 %v2059
      %v2245 = vpop.f32.mrb[0].mxu0
      %v2246 = vadd.f32 0.0, %v2245
      %v2247 = vpop.f32.mrb[0].mxu0
      %2248 = vmatprep.mubr.f32.mxu0 0.0
      %2249 = vmatmul.mubr.f32.gmra.mrb[0].mxu0 %v2062
      %v2250 = vpop.f32.mrb[0].mxu0
      %v2251 = vadd.f32 0.0, %v2250
      %v2252 = vpop.f32.mrb[0].mxu0
      %2253 = vmatprep.mubr.f32.mxu0 0.0
      %2254 = vmatmul.mubr.f32.gmra.mrb[0].mxu0 %v2065
      %v2255 = vpop.f32.mrb[0].mxu0
      %v2256 = vadd.f32 0.0, %v2255
      %v2257 = vpop.f32.mrb[0].mxu0
      %2258 = vmatprep.mubr.f32.mxu0 0.0
      %2259 = vmatmul.mubr.f32.gmra.mrb[0].mxu0 %v2068
      %v2260 = vpop.f32.mrb[0].mxu0
      %v2261 = vadd.f32 0.0, %v2260
      %v2262 = vpop.f32.mrb[0].mxu0
      %2263 = vmatprep.mubr.f32.mxu0 0.0
      %2264 = vmatmul.mubr.f32.gmra.mrb[0].mxu0 %v2071
      %v2265 = vpop.f32.mrb[0].mxu0
      %v2266 = vadd.f32 0.0, %v2265
      %v2267 = vpop.f32.mrb[0].mxu0
      %2268 = vmatprep.mubr.f32.mxu0 0.0
      %2269 = vmatmul.mubr.f32.gmra.mrb[0].mxu0 %v2074
      %v2270 = vpop.f32.mrb[0].mxu0
      %v2271 = vadd.f32 0.0, %v2270
      %v2272 = vpop.f32.mrb[0].mxu0
      %2273 = vmatprep.mubr.f32.mxu0 0.0
      %2274 = vmatmul.mubr.f32.gmra.mrb[0].mxu0 %v2077
      %v2275 = vpop.f32.mrb[0].mxu0
      %v2276 = vadd.f32 0.0, %v2275
      %v2277 = vpop.f32.mrb[0].mxu0
      %2278 = vmatprep.mubr.f32.mxu0 0.0
      %2279 = vmatmul.mubr.f32.gmra.mrb[0].mxu0 %v2080
      %v2280 = vpop.f32.mrb[0].mxu0
      %v2281 = vadd.f32 0.0, %v2280
      %v2282 = vpop.f32.mrb[0].mxu0
      %2283 = vmatprep.mubr.f32.mxu0 0.0
      %2284 = vmatmul.mubr.f32.gmra.mrb[0].mxu0 %v2083
      %v2285 = vpop.f32.mrb[0].mxu0
      %v2286 = vadd.f32 0.0, %v2285
      %v2287 = vpop.f32.mrb[0].mxu0
      %2288 = vmatprep.mubr.f32.mxu0 0.0
      %2289 = vmatmul.mubr.f32.gmra.mrb[0].mxu0 %v2086
      %v2290 = vpop.f32.mrb[0].mxu0
      %v2291 = vadd.f32 0.0, %v2290
      %v2292 = vpop.f32.mrb[0].mxu0
      %2293 = vmatprep.mubr.f32.mxu0 0.0
      %2294 = vmatmul.mubr.f32.gmra.mrb[0].mxu0 %v2089
      %v2295 = vpop.f32.mrb[0].mxu0
      %v2296 = vadd.f32 0.0, %v2295
      %v2297 = vpop.f32.mrb[0].mxu0
      %2298 = vmatprep.mubr.f32.mxu0 0.0
      %2299 = vmatmul.mubr.f32.gmra.mrb[0].mxu0 %v2092
      %v2300 = vpop.f32.mrb[0].mxu0
      %v2301 = vadd.f32 0.0, %v2300
      %v2302 = vpop.f32.mrb[0].mxu0
      %2303 = vmatprep.mubr.f32.mxu0 0.0
      %2304 = vmatmul.mubr.f32.gmra.mrb[0].mxu0 %v2095
      %v2305 = vpop.f32.mrb[0].mxu0
      %v2306 = vadd.f32 0.0, %v2305
      %v2307 = vpop.f32.mrb[0].mxu0
      %2308 = vmatprep.mubr.f32.mxu0 0.0
      %2309 = vmatmul.mubr.f32.gmra.mrb[0].mxu0 %v2098
      %v2310 = vpop.f32.mrb[0].mxu0
      %v2311 = vadd.f32 0.0, %v2310
      %v2312 = vpop.f32.mrb[0].mxu0
      %2313 = vmatprep.mubr.f32.mxu0 0.0
      %2314 = vmatmul.mubr.f32.gmra.mrb[0].mxu0 %v2101
      %v2315 = vpop.f32.mrb[0].mxu0
      %v2316 = vadd.f32 0.0, %v2315
      %v2317 = vpop.f32.mrb[0].mxu0
      %2318 = vmatprep.mubr.f32.mxu0 0.0
      %2319 = vmatmul.mubr.f32.gmra.mrb[0].mxu0 %v2104
      %v2320 = vpop.f32.mrb[0].mxu0
      %v2321 = vadd.f32 0.0, %v2320
      %v2322 = vpop.f32.mrb[0].mxu0
      %2323 = vmatprep.mubr.f32.mxu0 0.0
      %2324 = vmatmul.mubr.f32.gmra.mrb[0].mxu0 %v2107
      %v2325 = vpop.f32.mrb[0].mxu0
      %v2326 = vadd.f32 0.0, %v2325
      %v2327 = vpop.f32.mrb[0].mxu0
      %2328 = vmatprep.mubr.f32.mxu0 0.0
      %2329 = vmatmul.mubr.f32.gmra.mrb[0].mxu0 %v2110
      %v2330 = vpop.f32.mrb[0].mxu0
      %v2331 = vadd.f32 0.0, %v2330
      %v2332 = vpop.f32.mrb[0].mxu0
      %2333 = vmatprep.mubr.f32.mxu0 0.0
      %2334 = vmatmul.mubr.f32.gmra.mrb[0].mxu0 %v2113
      %v2335 = vpop.f32.mrb[0].mxu0
      %v2336 = vadd.f32 0.0, %v2335
      %v2337 = vpop.f32.mrb[0].mxu0
      %2338 = vmatprep.mubr.f32.mxu0 0.0
      %2339 = vmatmul.mubr.f32.gmra.mrb[0].mxu0 %v2116
      %v2340 = vpop.f32.mrb[0].mxu0
      %v2341 = vadd.f32 0.0, %v2340
      %v2342 = vpop.f32.mrb[0].mxu0
      %2343 = vmatprep.mubr.f32.mxu0 0.0
      %2344 = vmatmul.mubr.f32.gmra.mrb[0].mxu0 %v2119
      %v2345 = vpop.f32.mrb[0].mxu0
      %v2346 = vadd.f32 0.0, %v2345
      %v2347 = vpop.f32.mrb[0].mxu0
      %2348 = vdwg.mxu0
      %v2349 = vadd.f32 %v1952, %v2191
      %v2350 = vadd.f32 %v1953, %v2196
      %v2351 = vadd.f32 %v1954, %v2201
      %v2352 = vadd.f32 %v1955, %v2206
      %v2353 = vadd.f32 %v1956, %v2211
      %v2354 = vadd.f32 %v1957, %v2216
      %v2355 = vadd.f32 %v1958, %v2221
      %v2356 = vadd.f32 %v1959, %v2226
      %v2357 = vadd.f32 %v1960, %v2231
      %v2358 = vadd.f32 %v1961, %v2236
      %v2359 = vadd.f32 %v1962, %v2241
      %v2360 = vadd.f32 %v1963, %v2246
      %v2361 = vadd.f32 %v1964, %v2251
      %v2362 = vadd.f32 %v1965, %v2256
      %v2363 = vadd.f32 %v1966, %v2261
      %v2364 = vadd.f32 %v1967, %v2266
      %v2365 = vadd.f32 %v1968, %v2271
      %v2366 = vadd.f32 %v1969, %v2276
      %v2367 = vadd.f32 %v1970, %v2281
      %v2368 = vadd.f32 %v1971, %v2286
      %v2369 = vadd.f32 %v1972, %v2291
      %v2370 = vadd.f32 %v1973, %v2296
      %v2371 = vadd.f32 %v1974, %v2301
      %v2372 = vadd.f32 %v1975, %v2306
      %v2373 = vadd.f32 %v1976, %v2311
      %v2374 = vadd.f32 %v1977, %v2316
      %v2375 = vadd.f32 %v1978, %v2321
      %v2376 = vadd.f32 %v1979, %v2326
      %v2377 = vadd.f32 %v1980, %v2331
      %v2378 = vadd.f32 %v1981, %v2336
      %v2379 = vadd.f32 %v1982, %v2341
      %v2380 = vadd.f32 %v1983, %v2346
      %s2381 = scalar_lea.vmem %s1, 16
      %v2382 = vld [vmem:[%s2381] sm:$0xf]
      %v2383 = vsel %vm892, %v255, 0
      %v2385 = vsel %vm892, %v256, 0
      %v2388 = vsel %vm956, %v2382, 0
      %2390 = vmatprep.subr.mxu0 0.0
      %2391 = vmatpush1.msra.mxu0 %v2388
      %2392 = vmatprep.subr.mxu0 0.0
      %2393 = vmatpush1.msra.mxu0 0.0
      %2394 = vmatprep.subr.mxu0 0.0
      %2395 = vmatpush1.msra.mxu0 0.0
      %2396 = vmatprep.subr.mxu0 0.0
      %2397 = vmatpush1.msra.mxu0 0.0
      %2398 = vmatprep.subr.mxu0 0.0
      %2399 = vmatpush1.msra.mxu0 0.0
      %2400 = vmatprep.subr.mxu0 0.0
      %2401 = vmatpush1.msra.mxu0 0.0
      %2402 = vmatprep.subr.mxu0 0.0
      %2403 = vmatpush1.msra.mxu0 0.0
      %2404 = vmatprep.subr.mxu0 0.0
      %2405 = vmatpush1.msra.mxu0 0.0
      %2406 = vmatprep.subr.mxu0 0.0
      %2407 = vmatpush1.msra.mxu0 0.0
      %2408 = vmatprep.subr.mxu0 0.0
      %2409 = vmatpush1.msra.mxu0 0.0
      %2410 = vmatprep.subr.mxu0 0.0
      %2411 = vmatpush1.msra.mxu0 0.0
      %2412 = vmatprep.subr.mxu0 0.0
      %2413 = vmatpush1.msra.mxu0 0.0
      %2414 = vmatprep.subr.mxu0 0.0
      %2415 = vmatpush1.msra.mxu0 0.0
      %2416 = vmatprep.subr.mxu0 0.0
      %2417 = vmatpush1.msra.mxu0 0.0
      %2418 = vmatprep.subr.mxu0 0.0
      %2419 = vmatpush1.msra.mxu0 0.0
      %2420 = vmatprep.subr.mxu0 0.0
      %2421 = vmatpush1.msra.mxu0 0.0
      %2422 = vmatprep.subr.mxu0 0.0
      %2423 = vmatpush1.msra.mxu0 0.0
      %2424 = vmatprep.subr.mxu0 0.0
      %2425 = vmatpush1.msra.mxu0 0.0
      %2426 = vmatprep.subr.mxu0 0.0
      %2427 = vmatpush1.msra.mxu0 0.0
      %2428 = vmatprep.subr.mxu0 0.0
      %2429 = vmatpush1.msra.mxu0 0.0
      %2430 = vmatprep.subr.mxu0 0.0
      %2431 = vmatpush1.msra.mxu0 0.0
      %2432 = vmatprep.subr.mxu0 0.0
      %2433 = vmatpush1.msra.mxu0 0.0
      %2434 = vmatprep.subr.mxu0 0.0
      %2435 = vmatpush1.msra.mxu0 0.0
      %2436 = vmatprep.subr.mxu0 0.0
      %2437 = vmatpush1.msra.mxu0 0.0
      %2438 = vmatprep.subr.mxu0 0.0
      %2439 = vmatpush1.msra.mxu0 0.0
      %2440 = vmatprep.subr.mxu0 0.0
      %2441 = vmatpush1.msra.mxu0 0.0
      %2442 = vmatprep.subr.mxu0 0.0
      %2443 = vmatpush1.msra.mxu0 0.0
      %2444 = vmatprep.subr.mxu0 0.0
      %2445 = vmatpush1.msra.mxu0 0.0
      %2446 = vmatprep.subr.mxu0 0.0
      %2447 = vmatpush1.msra.mxu0 0.0
      %2448 = vmatprep.subr.mxu0 0.0
      %2449 = vmatpush1.msra.mxu0 0.0
      %2450 = vmatprep.subr.mxu0 0.0
      %2451 = vmatpush1.msra.mxu0 0.0
      %2452 = vmatprep.subr.mxu0 0.0
      %2453 = vmatpush1.msra.mxu0 0.0
      %2454 = vmatprep.mubr.f32.mxu0 0.0
      %2455 = vmatmul.mubr.f32.gmra.mrb[0].mxu0 %v896
      %v2456 = vpop.f32.mrb[0].mxu0
      %v2457 = vadd.f32 0.0, %v2456
      %v2458 = vpop.f32.mrb[0].mxu0
      %2459 = vmatprep.mubr.f32.mxu0 0.0
      %2460 = vmatmul.mubr.f32.gmra.mrb[0].mxu0 %v898
      %v2461 = vpop.f32.mrb[0].mxu0
      %v2462 = vadd.f32 0.0, %v2461
      %v2463 = vpop.f32.mrb[0].mxu0
      %2464 = vmatprep.mubr.f32.mxu0 0.0
      %2465 = vmatmul.mubr.f32.gmra.mrb[0].mxu0 %v900
      %v2466 = vpop.f32.mrb[0].mxu0
      %v2467 = vadd.f32 0.0, %v2466
      %v2468 = vpop.f32.mrb[0].mxu0
      %2469 = vmatprep.mubr.f32.mxu0 0.0
      %2470 = vmatmul.mubr.f32.gmra.mrb[0].mxu0 %v902
      %v2471 = vpop.f32.mrb[0].mxu0
      %v2472 = vadd.f32 0.0, %v2471
      %v2473 = vpop.f32.mrb[0].mxu0
      %2474 = vmatprep.mubr.f32.mxu0 0.0
      %2475 = vmatmul.mubr.f32.gmra.mrb[0].mxu0 %v904
      %v2476 = vpop.f32.mrb[0].mxu0
      %v2477 = vadd.f32 0.0, %v2476
      %v2478 = vpop.f32.mrb[0].mxu0
      %2479 = vmatprep.mubr.f32.mxu0 0.0
      %2480 = vmatmul.mubr.f32.gmra.mrb[0].mxu0 %v906
      %v2481 = vpop.f32.mrb[0].mxu0
      %v2482 = vadd.f32 0.0, %v2481
      %v2483 = vpop.f32.mrb[0].mxu0
      %2484 = vmatprep.mubr.f32.mxu0 0.0
      %2485 = vmatmul.mubr.f32.gmra.mrb[0].mxu0 %v908
      %v2486 = vpop.f32.mrb[0].mxu0
      %v2487 = vadd.f32 0.0, %v2486
      %v2488 = vpop.f32.mrb[0].mxu0
      %2489 = vmatprep.mubr.f32.mxu0 0.0
      %2490 = vmatmul.mubr.f32.gmra.mrb[0].mxu0 %v910
      %v2491 = vpop.f32.mrb[0].mxu0
      %v2492 = vadd.f32 0.0, %v2491
      %v2493 = vpop.f32.mrb[0].mxu0
      %2494 = vmatprep.mubr.f32.mxu0 0.0
      %2495 = vmatmul.mubr.f32.gmra.mrb[0].mxu0 %v912
      %v2496 = vpop.f32.mrb[0].mxu0
      %v2497 = vadd.f32 0.0, %v2496
      %v2498 = vpop.f32.mrb[0].mxu0
      %2499 = vmatprep.mubr.f32.mxu0 0.0
      %2500 = vmatmul.mubr.f32.gmra.mrb[0].mxu0 %v914
      %v2501 = vpop.f32.mrb[0].mxu0
      %v2502 = vadd.f32 0.0, %v2501
      %v2503 = vpop.f32.mrb[0].mxu0
      %2504 = vmatprep.mubr.f32.mxu0 0.0
      %2505 = vmatmul.mubr.f32.gmra.mrb[0].mxu0 %v916
      %v2506 = vpop.f32.mrb[0].mxu0
      %v2507 = vadd.f32 0.0, %v2506
      %v2508 = vpop.f32.mrb[0].mxu0
      %2509 = vmatprep.mubr.f32.mxu0 0.0
      %2510 = vmatmul.mubr.f32.gmra.mrb[0].mxu0 %v918
      %v2511 = vpop.f32.mrb[0].mxu0
      %v2512 = vadd.f32 0.0, %v2511
      %v2513 = vpop.f32.mrb[0].mxu0
      %2514 = vmatprep.mubr.f32.mxu0 0.0
      %2515 = vmatmul.mubr.f32.gmra.mrb[0].mxu0 %v920
      %v2516 = vpop.f32.mrb[0].mxu0
      %v2517 = vadd.f32 0.0, %v2516
      %v2518 = vpop.f32.mrb[0].mxu0
      %2519 = vmatprep.mubr.f32.mxu0 0.0
      %2520 = vmatmul.mubr.f32.gmra.mrb[0].mxu0 %v922
      %v2521 = vpop.f32.mrb[0].mxu0
      %v2522 = vadd.f32 0.0, %v2521
      %v2523 = vpop.f32.mrb[0].mxu0
      %2524 = vmatprep.mubr.f32.mxu0 0.0
      %2525 = vmatmul.mubr.f32.gmra.mrb[0].mxu0 %v924
      %v2526 = vpop.f32.mrb[0].mxu0
      %v2527 = vadd.f32 0.0, %v2526
      %v2528 = vpop.f32.mrb[0].mxu0
      %2529 = vmatprep.mubr.f32.mxu0 0.0
      %2530 = vmatmul.mubr.f32.gmra.mrb[0].mxu0 %v926
      %v2531 = vpop.f32.mrb[0].mxu0
      %v2532 = vadd.f32 0.0, %v2531
      %v2533 = vpop.f32.mrb[0].mxu0
      %2534 = vmatprep.mubr.f32.mxu0 0.0
      %2535 = vmatmul.mubr.f32.gmra.mrb[0].mxu0 %v928
      %v2536 = vpop.f32.mrb[0].mxu0
      %v2537 = vadd.f32 0.0, %v2536
      %v2538 = vpop.f32.mrb[0].mxu0
      %2539 = vmatprep.mubr.f32.mxu0 0.0
      %2540 = vmatmul.mubr.f32.gmra.mrb[0].mxu0 %v930
      %v2541 = vpop.f32.mrb[0].mxu0
      %v2542 = vadd.f32 0.0, %v2541
      %v2543 = vpop.f32.mrb[0].mxu0
      %2544 = vmatprep.mubr.f32.mxu0 0.0
      %2545 = vmatmul.mubr.f32.gmra.mrb[0].mxu0 %v932
      %v2546 = vpop.f32.mrb[0].mxu0
      %v2547 = vadd.f32 0.0, %v2546
      %v2548 = vpop.f32.mrb[0].mxu0
      %2549 = vmatprep.mubr.f32.mxu0 0.0
      %2550 = vmatmul.mubr.f32.gmra.mrb[0].mxu0 %v934
      %v2551 = vpop.f32.mrb[0].mxu0
      %v2552 = vadd.f32 0.0, %v2551
      %v2553 = vpop.f32.mrb[0].mxu0
      %2554 = vmatprep.mubr.f32.mxu0 0.0
      %2555 = vmatmul.mubr.f32.gmra.mrb[0].mxu0 %v936
      %v2556 = vpop.f32.mrb[0].mxu0
      %v2557 = vadd.f32 0.0, %v2556
      %v2558 = vpop.f32.mrb[0].mxu0
      %2559 = vmatprep.mubr.f32.mxu0 0.0
      %2560 = vmatmul.mubr.f32.gmra.mrb[0].mxu0 %v938
      %v2561 = vpop.f32.mrb[0].mxu0
      %v2562 = vadd.f32 0.0, %v2561
      %v2563 = vpop.f32.mrb[0].mxu0
      %2564 = vmatprep.mubr.f32.mxu0 0.0
      %2565 = vmatmul.mubr.f32.gmra.mrb[0].mxu0 %v940
      %v2566 = vpop.f32.mrb[0].mxu0
      %v2567 = vadd.f32 0.0, %v2566
      %v2568 = vpop.f32.mrb[0].mxu0
      %2569 = vmatprep.mubr.f32.mxu0 0.0
      %2570 = vmatmul.mubr.f32.gmra.mrb[0].mxu0 %v942
      %v2571 = vpop.f32.mrb[0].mxu0
      %v2572 = vadd.f32 0.0, %v2571
      %v2573 = vpop.f32.mrb[0].mxu0
      %2574 = vmatprep.mubr.f32.mxu0 0.0
      %2575 = vmatmul.mubr.f32.gmra.mrb[0].mxu0 %v944
      %v2576 = vpop.f32.mrb[0].mxu0
      %v2577 = vadd.f32 0.0, %v2576
      %v2578 = vpop.f32.mrb[0].mxu0
      %2579 = vmatprep.mubr.f32.mxu0 0.0
      %2580 = vmatmul.mubr.f32.gmra.mrb[0].mxu0 %v946
      %v2581 = vpop.f32.mrb[0].mxu0
      %v2582 = vadd.f32 0.0, %v2581
      %v2583 = vpop.f32.mrb[0].mxu0
      %2584 = vmatprep.mubr.f32.mxu0 0.0
      %2585 = vmatmul.mubr.f32.gmra.mrb[0].mxu0 %v948
      %v2586 = vpop.f32.mrb[0].mxu0
      %v2587 = vadd.f32 0.0, %v2586
      %v2588 = vpop.f32.mrb[0].mxu0
      %2589 = vmatprep.mubr.f32.mxu0 0.0
      %2590 = vmatmul.mubr.f32.gmra.mrb[0].mxu0 %v950
      %v2591 = vpop.f32.mrb[0].mxu0
      %v2592 = vadd.f32 0.0, %v2591
      %v2593 = vpop.f32.mrb[0].mxu0
      %2594 = vmatprep.mubr.f32.mxu0 0.0
      %2595 = vmatmul.mubr.f32.gmra.mrb[0].mxu0 %v952
      %v2596 = vpop.f32.mrb[0].mxu0
      %v2597 = vadd.f32 0.0, %v2596
      %v2598 = vpop.f32.mrb[0].mxu0
      %2599 = vmatprep.mubr.f32.mxu0 0.0
      %2600 = vmatmul.mubr.f32.gmra.mrb[0].mxu0 %v954
      %v2601 = vpop.f32.mrb[0].mxu0
      %v2602 = vadd.f32 0.0, %v2601
      %v2603 = vpop.f32.mrb[0].mxu0
      %2604 = vmatprep.mubr.f32.mxu0 0.0
      %2605 = vmatmul.mubr.f32.gmra.mrb[0].mxu0 %v2383
      %v2606 = vpop.f32.mrb[0].mxu0
      %v2607 = vadd.f32 0.0, %v2606
      %v2608 = vpop.f32.mrb[0].mxu0
      %2609 = vmatprep.mubr.f32.mxu0 0.0
      %2610 = vmatmul.mubr.f32.gmra.mrb[0].mxu0 %v2385
      %v2611 = vpop.f32.mrb[0].mxu0
      %v2612 = vadd.f32 0.0, %v2611
      %v2613 = vpop.f32.mrb[0].mxu0
      %2614 = vdwg.mxu0
      %v2615 = vadd.f32 %v2349, %v2457
      %v2616 = vadd.f32 %v2350, %v2462
      %v2617 = vadd.f32 %v2351, %v2467
      %v2618 = vadd.f32 %v2352, %v2472
      %v2619 = vadd.f32 %v2353, %v2477
      %v2620 = vadd.f32 %v2354, %v2482
      %v2621 = vadd.f32 %v2355, %v2487
      %v2622 = vadd.f32 %v2356, %v2492
      %v2623 = vadd.f32 %v2357, %v2497
      %v2624 = vadd.f32 %v2358, %v2502
      %v2625 = vadd.f32 %v2359, %v2507
      %v2626 = vadd.f32 %v2360, %v2512
      %v2627 = vadd.f32 %v2361, %v2517
      %v2628 = vadd.f32 %v2362, %v2522
      %v2629 = vadd.f32 %v2363, %v2527
      %v2630 = vadd.f32 %v2364, %v2532
      %v2631 = vadd.f32 %v2365, %v2537
      %v2632 = vadd.f32 %v2366, %v2542
      %v2633 = vadd.f32 %v2367, %v2547
      %v2634 = vadd.f32 %v2368, %v2552
      %v2635 = vadd.f32 %v2369, %v2557
      %v2636 = vadd.f32 %v2370, %v2562
      %v2637 = vadd.f32 %v2371, %v2567
      %v2638 = vadd.f32 %v2372, %v2572
      %v2639 = vadd.f32 %v2373, %v2577
      %v2640 = vadd.f32 %v2374, %v2582
      %v2641 = vadd.f32 %v2375, %v2587
      %v2642 = vadd.f32 %v2376, %v2592
      %v2643 = vadd.f32 %v2377, %v2597
      %v2644 = vadd.f32 %v2378, %v2602
      %v2645 = vadd.f32 %v2379, %v2607
      %v2646 = vadd.f32 %v2380, %v2612
      %v2647 = vrot.slane %v256, 1
      %v2648 = vsel %vm1504, %v1564, %v2647
      %v2651 = vsel %vm1504, %v2647, 0.0
      %v2652 = vsel %vm706, %v1507, 0.0
      %v2653 = vsel %vm707, %v1509, 0.0
      %v2654 = vsel %vm708, %v1511, 0.0
      %v2655 = vsel %vm709, %v1513, 0.0
      %v2656 = vsel %vm710, %v1515, 0.0
      %v2657 = vsel %vm711, %v1517, 0.0
      %v2658 = vsel %vm712, %v1519, 0.0
      %v2659 = vsel %vm713, %v1521, 0.0
      %v2660 = vsel %vm714, %v1523, 0.0
      %v2661 = vsel %vm715, %v1525, 0.0
      %v2662 = vsel %vm716, %v1527, 0.0
      %v2663 = vsel %vm717, %v1529, 0.0
      %v2664 = vsel %vm718, %v1531, 0.0
      %v2665 = vsel %vm719, %v1533, 0.0
      %v2666 = vsel %vm720, %v1535, 0.0
      %v2667 = vsel %vm721, %v1537, 0.0
      %v2668 = vsel %vm722, %v1539, 0.0
      %v2669 = vsel %vm723, %v1541, 0.0
      %v2670 = vsel %vm724, %v1543, 0.0
      %v2671 = vsel %vm725, %v1545, 0.0
      %v2672 = vsel %vm726, %v1547, 0.0
      %v2673 = vsel %vm727, %v1549, 0.0
      %v2674 = vsel %vm728, %v1551, 0.0
      %v2675 = vsel %vm729, %v1553, 0.0
      %v2676 = vsel %vm730, %v1555, 0.0
      %v2677 = vsel %vm731, %v1557, 0.0
      %v2678 = vsel %vm732, %v1559, 0.0
      %v2679 = vsel %vm733, %v1561, 0.0
      %v2680 = vsel %vm734, %v1563, 0.0
      %v2681 = vsel %vm735, %v1565, 0.0
      %v2682 = vsel %vm736, %v2648, 0.0
      %v2683 = vsel %vm737, %v2651, 0.0
      %s2684 = scalar_lea.vmem %s1, 20
      %v2685 = vld [vmem:[%s2684] sm:$0xf]
      %v2687 = vsel %vm892, %v2652, 0
      %v2690 = vsel %vm892, %v2653, 0
      %v2693 = vsel %vm892, %v2654, 0
      %v2696 = vsel %vm892, %v2655, 0
      %v2699 = vsel %vm892, %v2656, 0
      %v2702 = vsel %vm892, %v2657, 0
      %v2705 = vsel %vm892, %v2658, 0
      %v2708 = vsel %vm892, %v2659, 0
      %v2711 = vsel %vm892, %v2660, 0
      %v2714 = vsel %vm892, %v2661, 0
      %v2717 = vsel %vm892, %v2662, 0
      %v2720 = vsel %vm892, %v2663, 0
      %v2723 = vsel %vm892, %v2664, 0
      %v2726 = vsel %vm892, %v2665, 0
      %v2729 = vsel %vm892, %v2666, 0
      %v2732 = vsel %vm892, %v2667, 0
      %v2735 = vsel %vm892, %v2668, 0
      %v2738 = vsel %vm892, %v2669, 0
      %v2741 = vsel %vm892, %v2670, 0
      %v2744 = vsel %vm892, %v2671, 0
      %v2747 = vsel %vm892, %v2672, 0
      %v2750 = vsel %vm892, %v2673, 0
      %v2753 = vsel %vm892, %v2674, 0
      %v2756 = vsel %vm892, %v2675, 0
      %v2759 = vsel %vm892, %v2676, 0
      %v2762 = vsel %vm892, %v2677, 0
      %v2765 = vsel %vm892, %v2678, 0
      %v2768 = vsel %vm892, %v2679, 0
      %v2771 = vsel %vm892, %v2680, 0
      %v2774 = vsel %vm892, %v2681, 0
      %v2777 = vsel %vm892, %v2682, 0
      %v2780 = vsel %vm892, %v2683, 0
      %v2783 = vsel %vm956, %v2685, 0
      %2785 = vmatprep.subr.mxu0 0.0
      %2786 = vmatpush1.msra.mxu0 %v2783
      %2787 = vmatprep.subr.mxu0 0.0
      %2788 = vmatpush1.msra.mxu0 0.0
      %2789 = vmatprep.subr.mxu0 0.0
      %2790 = vmatpush1.msra.mxu0 0.0
      %2791 = vmatprep.subr.mxu0 0.0
      %2792 = vmatpush1.msra.mxu0 0.0
      %2793 = vmatprep.subr.mxu0 0.0
      %2794 = vmatpush1.msra.mxu0 0.0
      %2795 = vmatprep.subr.mxu0 0.0
      %2796 = vmatpush1.msra.mxu0 0.0
      %2797 = vmatprep.subr.mxu0 0.0
      %2798 = vmatpush1.msra.mxu0 0.0
      %2799 = vmatprep.subr.mxu0 0.0
      %2800 = vmatpush1.msra.mxu0 0.0
      %2801 = vmatprep.subr.mxu0 0.0
      %2802 = vmatpush1.msra.mxu0 0.0
      %2803 = vmatprep.subr.mxu0 0.0
      %2804 = vmatpush1.msra.mxu0 0.0
      %2805 = vmatprep.subr.mxu0 0.0
      %2806 = vmatpush1.msra.mxu0 0.0
      %2807 = vmatprep.subr.mxu0 0.0
      %2808 = vmatpush1.msra.mxu0 0.0
      %2809 = vmatprep.subr.mxu0 0.0
      %2810 = vmatpush1.msra.mxu0 0.0
      %2811 = vmatprep.subr.mxu0 0.0
      %2812 = vmatpush1.msra.mxu0 0.0
      %2813 = vmatprep.subr.mxu0 0.0
      %2814 = vmatpush1.msra.mxu0 0.0
      %2815 = vmatprep.subr.mxu0 0.0
      %2816 = vmatpush1.msra.mxu0 0.0
      %2817 = vmatprep.subr.mxu0 0.0
      %2818 = vmatpush1.msra.mxu0 0.0
      %2819 = vmatprep.subr.mxu0 0.0
      %2820 = vmatpush1.msra.mxu0 0.0
      %2821 = vmatprep.subr.mxu0 0.0
      %2822 = vmatpush1.msra.mxu0 0.0
      %2823 = vmatprep.subr.mxu0 0.0
      %2824 = vmatpush1.msra.mxu0 0.0
      %2825 = vmatprep.subr.mxu0 0.0
      %2826 = vmatpush1.msra.mxu0 0.0
      %2827 = vmatprep.subr.mxu0 0.0
      %2828 = vmatpush1.msra.mxu0 0.0
      %2829 = vmatprep.subr.mxu0 0.0
      %2830 = vmatpush1.msra.mxu0 0.0
      %2831 = vmatprep.subr.mxu0 0.0
      %2832 = vmatpush1.msra.mxu0 0.0
      %2833 = vmatprep.subr.mxu0 0.0
      %2834 = vmatpush1.msra.mxu0 0.0
      %2835 = vmatprep.subr.mxu0 0.0
      %2836 = vmatpush1.msra.mxu0 0.0
      %2837 = vmatprep.subr.mxu0 0.0
      %2838 = vmatpush1.msra.mxu0 0.0
      %2839 = vmatprep.subr.mxu0 0.0
      %2840 = vmatpush1.msra.mxu0 0.0
      %2841 = vmatprep.subr.mxu0 0.0
      %2842 = vmatpush1.msra.mxu0 0.0
      %2843 = vmatprep.subr.mxu0 0.0
      %2844 = vmatpush1.msra.mxu0 0.0
      %2845 = vmatprep.subr.mxu0 0.0
      %2846 = vmatpush1.msra.mxu0 0.0
      %2847 = vmatprep.subr.mxu0 0.0
      %2848 = vmatpush1.msra.mxu0 0.0
      %2849 = vmatprep.mubr.f32.mxu0 0.0
      %2850 = vmatmul.mubr.f32.gmra.mrb[0].mxu0 %v2687
      %v2851 = vpop.f32.mrb[0].mxu0
      %v2852 = vadd.f32 0.0, %v2851
      %v2853 = vpop.f32.mrb[0].mxu0
      %2854 = vmatprep.mubr.f32.mxu0 0.0
      %2855 = vmatmul.mubr.f32.gmra.mrb[0].mxu0 %v2690
      %v2856 = vpop.f32.mrb[0].mxu0
      %v2857 = vadd.f32 0.0, %v2856
      %v2858 = vpop.f32.mrb[0].mxu0
      %2859 = vmatprep.mubr.f32.mxu0 0.0
      %2860 = vmatmul.mubr.f32.gmra.mrb[0].mxu0 %v2693
      %v2861 = vpop.f32.mrb[0].mxu0
      %v2862 = vadd.f32 0.0, %v2861
      %v2863 = vpop.f32.mrb[0].mxu0
      %2864 = vmatprep.mubr.f32.mxu0 0.0
      %2865 = vmatmul.mubr.f32.gmra.mrb[0].mxu0 %v2696
      %v2866 = vpop.f32.mrb[0].mxu0
      %v2867 = vadd.f32 0.0, %v2866
      %v2868 = vpop.f32.mrb[0].mxu0
      %2869 = vmatprep.mubr.f32.mxu0 0.0
      %2870 = vmatmul.mubr.f32.gmra.mrb[0].mxu0 %v2699
      %v2871 = vpop.f32.mrb[0].mxu0
      %v2872 = vadd.f32 0.0, %v2871
      %v2873 = vpop.f32.mrb[0].mxu0
      %2874 = vmatprep.mubr.f32.mxu0 0.0
      %2875 = vmatmul.mubr.f32.gmra.mrb[0].mxu0 %v2702
      %v2876 = vpop.f32.mrb[0].mxu0
      %v2877 = vadd.f32 0.0, %v2876
      %v2878 = vpop.f32.mrb[0].mxu0
      %2879 = vmatprep.mubr.f32.mxu0 0.0
      %2880 = vmatmul.mubr.f32.gmra.mrb[0].mxu0 %v2705
      %v2881 = vpop.f32.mrb[0].mxu0
      %v2882 = vadd.f32 0.0, %v2881
      %v2883 = vpop.f32.mrb[0].mxu0
      %2884 = vmatprep.mubr.f32.mxu0 0.0
      %2885 = vmatmul.mubr.f32.gmra.mrb[0].mxu0 %v2708
      %v2886 = vpop.f32.mrb[0].mxu0
      %v2887 = vadd.f32 0.0, %v2886
      %v2888 = vpop.f32.mrb[0].mxu0
      %2889 = vmatprep.mubr.f32.mxu0 0.0
      %2890 = vmatmul.mubr.f32.gmra.mrb[0].mxu0 %v2711
      %v2891 = vpop.f32.mrb[0].mxu0
      %v2892 = vadd.f32 0.0, %v2891
      %v2893 = vpop.f32.mrb[0].mxu0
      %2894 = vmatprep.mubr.f32.mxu0 0.0
      %2895 = vmatmul.mubr.f32.gmra.mrb[0].mxu0 %v2714
      %v2896 = vpop.f32.mrb[0].mxu0
      %v2897 = vadd.f32 0.0, %v2896
      %v2898 = vpop.f32.mrb[0].mxu0
      %2899 = vmatprep.mubr.f32.mxu0 0.0
      %2900 = vmatmul.mubr.f32.gmra.mrb[0].mxu0 %v2717
      %v2901 = vpop.f32.mrb[0].mxu0
      %v2902 = vadd.f32 0.0, %v2901
      %v2903 = vpop.f32.mrb[0].mxu0
      %2904 = vmatprep.mubr.f32.mxu0 0.0
      %2905 = vmatmul.mubr.f32.gmra.mrb[0].mxu0 %v2720
      %v2906 = vpop.f32.mrb[0].mxu0
      %v2907 = vadd.f32 0.0, %v2906
      %v2908 = vpop.f32.mrb[0].mxu0
      %2909 = vmatprep.mubr.f32.mxu0 0.0
      %2910 = vmatmul.mubr.f32.gmra.mrb[0].mxu0 %v2723
      %v2911 = vpop.f32.mrb[0].mxu0
      %v2912 = vadd.f32 0.0, %v2911
      %v2913 = vpop.f32.mrb[0].mxu0
      %2914 = vmatprep.mubr.f32.mxu0 0.0
      %2915 = vmatmul.mubr.f32.gmra.mrb[0].mxu0 %v2726
      %v2916 = vpop.f32.mrb[0].mxu0
      %v2917 = vadd.f32 0.0, %v2916
      %v2918 = vpop.f32.mrb[0].mxu0
      %2919 = vmatprep.mubr.f32.mxu0 0.0
      %2920 = vmatmul.mubr.f32.gmra.mrb[0].mxu0 %v2729
      %v2921 = vpop.f32.mrb[0].mxu0
      %v2922 = vadd.f32 0.0, %v2921
      %v2923 = vpop.f32.mrb[0].mxu0
      %2924 = vmatprep.mubr.f32.mxu0 0.0
      %2925 = vmatmul.mubr.f32.gmra.mrb[0].mxu0 %v2732
      %v2926 = vpop.f32.mrb[0].mxu0
      %v2927 = vadd.f32 0.0, %v2926
      %v2928 = vpop.f32.mrb[0].mxu0
      %2929 = vmatprep.mubr.f32.mxu0 0.0
      %2930 = vmatmul.mubr.f32.gmra.mrb[0].mxu0 %v2735
      %v2931 = vpop.f32.mrb[0].mxu0
      %v2932 = vadd.f32 0.0, %v2931
      %v2933 = vpop.f32.mrb[0].mxu0
      %2934 = vmatprep.mubr.f32.mxu0 0.0
      %2935 = vmatmul.mubr.f32.gmra.mrb[0].mxu0 %v2738
      %v2936 = vpop.f32.mrb[0].mxu0
      %v2937 = vadd.f32 0.0, %v2936
      %v2938 = vpop.f32.mrb[0].mxu0
      %2939 = vmatprep.mubr.f32.mxu0 0.0
      %2940 = vmatmul.mubr.f32.gmra.mrb[0].mxu0 %v2741
      %v2941 = vpop.f32.mrb[0].mxu0
      %v2942 = vadd.f32 0.0, %v2941
      %v2943 = vpop.f32.mrb[0].mxu0
      %2944 = vmatprep.mubr.f32.mxu0 0.0
      %2945 = vmatmul.mubr.f32.gmra.mrb[0].mxu0 %v2744
      %v2946 = vpop.f32.mrb[0].mxu0
      %v2947 = vadd.f32 0.0, %v2946
      %v2948 = vpop.f32.mrb[0].mxu0
      %2949 = vmatprep.mubr.f32.mxu0 0.0
      %2950 = vmatmul.mubr.f32.gmra.mrb[0].mxu0 %v2747
      %v2951 = vpop.f32.mrb[0].mxu0
      %v2952 = vadd.f32 0.0, %v2951
      %v2953 = vpop.f32.mrb[0].mxu0
      %2954 = vmatprep.mubr.f32.mxu0 0.0
      %2955 = vmatmul.mubr.f32.gmra.mrb[0].mxu0 %v2750
      %v2956 = vpop.f32.mrb[0].mxu0
      %v2957 = vadd.f32 0.0, %v2956
      %v2958 = vpop.f32.mrb[0].mxu0
      %2959 = vmatprep.mubr.f32.mxu0 0.0
      %2960 = vmatmul.mubr.f32.gmra.mrb[0].mxu0 %v2753
      %v2961 = vpop.f32.mrb[0].mxu0
      %v2962 = vadd.f32 0.0, %v2961
      %v2963 = vpop.f32.mrb[0].mxu0
      %2964 = vmatprep.mubr.f32.mxu0 0.0
      %2965 = vmatmul.mubr.f32.gmra.mrb[0].mxu0 %v2756
      %v2966 = vpop.f32.mrb[0].mxu0
      %v2967 = vadd.f32 0.0, %v2966
      %v2968 = vpop.f32.mrb[0].mxu0
      %2969 = vmatprep.mubr.f32.mxu0 0.0
      %2970 = vmatmul.mubr.f32.gmra.mrb[0].mxu0 %v2759
      %v2971 = vpop.f32.mrb[0].mxu0
      %v2972 = vadd.f32 0.0, %v2971
      %v2973 = vpop.f32.mrb[0].mxu0
      %2974 = vmatprep.mubr.f32.mxu0 0.0
      %2975 = vmatmul.mubr.f32.gmra.mrb[0].mxu0 %v2762
      %v2976 = vpop.f32.mrb[0].mxu0
      %v2977 = vadd.f32 0.0, %v2976
      %v2978 = vpop.f32.mrb[0].mxu0
      %2979 = vmatprep.mubr.f32.mxu0 0.0
      %2980 = vmatmul.mubr.f32.gmra.mrb[0].mxu0 %v2765
      %v2981 = vpop.f32.mrb[0].mxu0
      %v2982 = vadd.f32 0.0, %v2981
      %v2983 = vpop.f32.mrb[0].mxu0
      %2984 = vmatprep.mubr.f32.mxu0 0.0
      %2985 = vmatmul.mubr.f32.gmra.mrb[0].mxu0 %v2768
      %v2986 = vpop.f32.mrb[0].mxu0
      %v2987 = vadd.f32 0.0, %v2986
      %v2988 = vpop.f32.mrb[0].mxu0
      %2989 = vmatprep.mubr.f32.mxu0 0.0
      %2990 = vmatmul.mubr.f32.gmra.mrb[0].mxu0 %v2771
      %v2991 = vpop.f32.mrb[0].mxu0
      %v2992 = vadd.f32 0.0, %v2991
      %v2993 = vpop.f32.mrb[0].mxu0
      %2994 = vmatprep.mubr.f32.mxu0 0.0
      %2995 = vmatmul.mubr.f32.gmra.mrb[0].mxu0 %v2774
      %v2996 = vpop.f32.mrb[0].mxu0
      %v2997 = vadd.f32 0.0, %v2996
      %v2998 = vpop.f32.mrb[0].mxu0
      %2999 = vmatprep.mubr.f32.mxu0 0.0
      %3000 = vmatmul.mubr.f32.gmra.mrb[0].mxu0 %v2777
      %v3001 = vpop.f32.mrb[0].mxu0
      %v3002 = vadd.f32 0.0, %v3001
      %v3003 = vpop.f32.mrb[0].mxu0
      %3004 = vmatprep.mubr.f32.mxu0 0.0
      %3005 = vmatmul.mubr.f32.gmra.mrb[0].mxu0 %v2780
      %v3006 = vpop.f32.mrb[0].mxu0
      %v3007 = vadd.f32 0.0, %v3006
      %v3008 = vpop.f32.mrb[0].mxu0
      %3009 = vdwg.mxu0
      %v3010 = vadd.f32 %v2615, %v2852
      %v3011 = vadd.f32 %v2616, %v2857
      %v3012 = vadd.f32 %v2617, %v2862
      %v3013 = vadd.f32 %v2618, %v2867
      %v3014 = vadd.f32 %v2619, %v2872
      %v3015 = vadd.f32 %v2620, %v2877
      %v3016 = vadd.f32 %v2621, %v2882
      %v3017 = vadd.f32 %v2622, %v2887
      %v3018 = vadd.f32 %v2623, %v2892
      %v3019 = vadd.f32 %v2624, %v2897
      %v3020 = vadd.f32 %v2625, %v2902
      %v3021 = vadd.f32 %v2626, %v2907
      %v3022 = vadd.f32 %v2627, %v2912
      %v3023 = vadd.f32 %v2628, %v2917
      %v3024 = vadd.f32 %v2629, %v2922
      %v3025 = vadd.f32 %v2630, %v2927
      %v3026 = vadd.f32 %v2631, %v2932
      %v3027 = vadd.f32 %v2632, %v2937
      %v3028 = vadd.f32 %v2633, %v2942
      %v3029 = vadd.f32 %v2634, %v2947
      %v3030 = vadd.f32 %v2635, %v2952
      %v3031 = vadd.f32 %v2636, %v2957
      %v3032 = vadd.f32 %v2637, %v2962
      %v3033 = vadd.f32 %v2638, %v2967
      %v3034 = vadd.f32 %v2639, %v2972
      %v3035 = vadd.f32 %v2640, %v2977
      %v3036 = vadd.f32 %v2641, %v2982
      %v3037 = vadd.f32 %v2642, %v2987
      %v3038 = vadd.f32 %v2643, %v2992
      %v3039 = vadd.f32 %v2644, %v2997
      %v3040 = vadd.f32 %v2645, %v3002
      %v3041 = vadd.f32 %v2646, %v3007
      %v3043 = vsel %vm768, %v1987, 0.0
      %v3044 = vsel %vm674, %v773, 0.0
      %v3045 = vsel %vm675, %v775, 0.0
      %v3046 = vsel %vm676, %v777, 0.0
      %v3047 = vsel %vm677, %v779, 0.0
      %v3048 = vsel %vm678, %v781, 0.0
      %v3049 = vsel %vm679, %v783, 0.0
      %v3050 = vsel %vm680, %v785, 0.0
      %v3051 = vsel %vm681, %v787, 0.0
      %v3052 = vsel %vm682, %v789, 0.0
      %v3053 = vsel %vm683, %v791, 0.0
      %v3054 = vsel %vm684, %v793, 0.0
      %v3055 = vsel %vm685, %v795, 0.0
      %v3056 = vsel %vm686, %v797, 0.0
      %v3057 = vsel %vm687, %v799, 0.0
      %v3058 = vsel %vm688, %v801, 0.0
      %v3059 = vsel %vm689, %v803, 0.0
      %v3060 = vsel %vm690, %v805, 0.0
      %v3061 = vsel %vm691, %v807, 0.0
      %v3062 = vsel %vm692, %v809, 0.0
      %v3063 = vsel %vm693, %v811, 0.0
      %v3064 = vsel %vm694, %v813, 0.0
      %v3065 = vsel %vm695, %v815, 0.0
      %v3066 = vsel %vm696, %v817, 0.0
      %v3067 = vsel %vm697, %v819, 0.0
      %v3068 = vsel %vm698, %v821, 0.0
      %v3069 = vsel %vm699, %v823, 0.0
      %v3070 = vsel %vm700, %v825, 0.0
      %v3071 = vsel %vm701, %v827, 0.0
      %v3072 = vsel %vm702, %v1986, 0.0
      %v3073 = vsel %vm703, %v1988, 0.0
      %v3074 = vsel %vm704, %v3043, 0.0
      %s3075 = scalar_lea.vmem %s1, 24
      %v3076 = vld [vmem:[%s3075] sm:$0xf]
      %v3078 = vsel %vm892, %v3044, 0
      %v3081 = vsel %vm892, %v3045, 0
      %v3084 = vsel %vm892, %v3046, 0
      %v3087 = vsel %vm892, %v3047, 0
      %v3090 = vsel %vm892, %v3048, 0
      %v3093 = vsel %vm892, %v3049, 0
      %v3096 = vsel %vm892, %v3050, 0
      %v3099 = vsel %vm892, %v3051, 0
      %v3102 = vsel %vm892, %v3052, 0
      %v3105 = vsel %vm892, %v3053, 0
      %v3108 = vsel %vm892, %v3054, 0
      %v3111 = vsel %vm892, %v3055, 0
      %v3114 = vsel %vm892, %v3056, 0
      %v3117 = vsel %vm892, %v3057, 0
      %v3120 = vsel %vm892, %v3058, 0
      %v3123 = vsel %vm892, %v3059, 0
      %v3126 = vsel %vm892, %v3060, 0
      %v3129 = vsel %vm892, %v3061, 0
      %v3132 = vsel %vm892, %v3062, 0
      %v3135 = vsel %vm892, %v3063, 0
      %v3138 = vsel %vm892, %v3064, 0
      %v3141 = vsel %vm892, %v3065, 0
      %v3144 = vsel %vm892, %v3066, 0
      %v3147 = vsel %vm892, %v3067, 0
      %v3150 = vsel %vm892, %v3068, 0
      %v3153 = vsel %vm892, %v3069, 0
      %v3156 = vsel %vm892, %v3070, 0
      %v3159 = vsel %vm892, %v3071, 0
      %v3162 = vsel %vm892, %v3072, 0
      %v3165 = vsel %vm892, %v3073, 0
      %v3168 = vsel %vm892, %v3074, 0
      %v3171 = vsel %vm956, %v3076, 0
      %3173 = vmatprep.subr.mxu0 0.0
      %3174 = vmatpush1.msra.mxu0 %v3171
      %3175 = vmatprep.subr.mxu0 0.0
      %3176 = vmatpush1.msra.mxu0 0.0
      %3177 = vmatprep.subr.mxu0 0.0
      %3178 = vmatpush1.msra.mxu0 0.0
      %3179 = vmatprep.subr.mxu0 0.0
      %3180 = vmatpush1.msra.mxu0 0.0
      %3181 = vmatprep.subr.mxu0 0.0
      %3182 = vmatpush1.msra.mxu0 0.0
      %3183 = vmatprep.subr.mxu0 0.0
      %3184 = vmatpush1.msra.mxu0 0.0
      %3185 = vmatprep.subr.mxu0 0.0
      %3186 = vmatpush1.msra.mxu0 0.0
      %3187 = vmatprep.subr.mxu0 0.0
      %3188 = vmatpush1.msra.mxu0 0.0
      %3189 = vmatprep.subr.mxu0 0.0
      %3190 = vmatpush1.msra.mxu0 0.0
      %3191 = vmatprep.subr.mxu0 0.0
      %3192 = vmatpush1.msra.mxu0 0.0
      %3193 = vmatprep.subr.mxu0 0.0
      %3194 = vmatpush1.msra.mxu0 0.0
      %3195 = vmatprep.subr.mxu0 0.0
      %3196 = vmatpush1.msra.mxu0 0.0
      %3197 = vmatprep.subr.mxu0 0.0
      %3198 = vmatpush1.msra.mxu0 0.0
      %3199 = vmatprep.subr.mxu0 0.0
      %3200 = vmatpush1.msra.mxu0 0.0
      %3201 = vmatprep.subr.mxu0 0.0
      %3202 = vmatpush1.msra.mxu0 0.0
      %3203 = vmatprep.subr.mxu0 0.0
      %3204 = vmatpush1.msra.mxu0 0.0
      %3205 = vmatprep.subr.mxu0 0.0
      %3206 = vmatpush1.msra.mxu0 0.0
      %3207 = vmatprep.subr.mxu0 0.0
      %3208 = vmatpush1.msra.mxu0 0.0
      %3209 = vmatprep.subr.mxu0 0.0
      %3210 = vmatpush1.msra.mxu0 0.0
      %3211 = vmatprep.subr.mxu0 0.0
      %3212 = vmatpush1.msra.mxu0 0.0
      %3213 = vmatprep.subr.mxu0 0.0
      %3214 = vmatpush1.msra.mxu0 0.0
      %3215 = vmatprep.subr.mxu0 0.0
      %3216 = vmatpush1.msra.mxu0 0.0
      %3217 = vmatprep.subr.mxu0 0.0
      %3218 = vmatpush1.msra.mxu0 0.0
      %3219 = vmatprep.subr.mxu0 0.0
      %3220 = vmatpush1.msra.mxu0 0.0
      %3221 = vmatprep.subr.mxu0 0.0
      %3222 = vmatpush1.msra.mxu0 0.0
      %3223 = vmatprep.subr.mxu0 0.0
      %3224 = vmatpush1.msra.mxu0 0.0
      %3225 = vmatprep.subr.mxu0 0.0
      %3226 = vmatpush1.msra.mxu0 0.0
      %3227 = vmatprep.subr.mxu0 0.0
      %3228 = vmatpush1.msra.mxu0 0.0
      %3229 = vmatprep.subr.mxu0 0.0
      %3230 = vmatpush1.msra.mxu0 0.0
      %3231 = vmatprep.subr.mxu0 0.0
      %3232 = vmatpush1.msra.mxu0 0.0
      %3233 = vmatprep.subr.mxu0 0.0
      %3234 = vmatpush1.msra.mxu0 0.0
      %3235 = vmatprep.subr.mxu0 0.0
      %3236 = vmatpush1.msra.mxu0 0.0
      %3237 = vmatprep.mubr.f32.mxu0 0.0
      %3238 = vmatmul.mubr.f32.gmra.mrb[0].mxu0 %v3078
      %v3239 = vpop.f32.mrb[0].mxu0
      %v3240 = vadd.f32 0.0, %v3239
      %v3241 = vpop.f32.mrb[0].mxu0
      %3242 = vmatprep.mubr.f32.mxu0 0.0
      %3243 = vmatmul.mubr.f32.gmra.mrb[0].mxu0 %v3081
      %v3244 = vpop.f32.mrb[0].mxu0
      %v3245 = vadd.f32 0.0, %v3244
      %v3246 = vpop.f32.mrb[0].mxu0
      %3247 = vmatprep.mubr.f32.mxu0 0.0
      %3248 = vmatmul.mubr.f32.gmra.mrb[0].mxu0 %v3084
      %v3249 = vpop.f32.mrb[0].mxu0
      %v3250 = vadd.f32 0.0, %v3249
      %v3251 = vpop.f32.mrb[0].mxu0
      %3252 = vmatprep.mubr.f32.mxu0 0.0
      %3253 = vmatmul.mubr.f32.gmra.mrb[0].mxu0 %v3087
      %v3254 = vpop.f32.mrb[0].mxu0
      %v3255 = vadd.f32 0.0, %v3254
      %v3256 = vpop.f32.mrb[0].mxu0
      %3257 = vmatprep.mubr.f32.mxu0 0.0
      %3258 = vmatmul.mubr.f32.gmra.mrb[0].mxu0 %v3090
      %v3259 = vpop.f32.mrb[0].mxu0
      %v3260 = vadd.f32 0.0, %v3259
      %v3261 = vpop.f32.mrb[0].mxu0
      %3262 = vmatprep.mubr.f32.mxu0 0.0
      %3263 = vmatmul.mubr.f32.gmra.mrb[0].mxu0 %v3093
      %v3264 = vpop.f32.mrb[0].mxu0
      %v3265 = vadd.f32 0.0, %v3264
      %v3266 = vpop.f32.mrb[0].mxu0
      %3267 = vmatprep.mubr.f32.mxu0 0.0
      %3268 = vmatmul.mubr.f32.gmra.mrb[0].mxu0 %v3096
      %v3269 = vpop.f32.mrb[0].mxu0
      %v3270 = vadd.f32 0.0, %v3269
      %v3271 = vpop.f32.mrb[0].mxu0
      %3272 = vmatprep.mubr.f32.mxu0 0.0
      %3273 = vmatmul.mubr.f32.gmra.mrb[0].mxu0 %v3099
      %v3274 = vpop.f32.mrb[0].mxu0
      %v3275 = vadd.f32 0.0, %v3274
      %v3276 = vpop.f32.mrb[0].mxu0
      %3277 = vmatprep.mubr.f32.mxu0 0.0
      %3278 = vmatmul.mubr.f32.gmra.mrb[0].mxu0 %v3102
      %v3279 = vpop.f32.mrb[0].mxu0
      %v3280 = vadd.f32 0.0, %v3279
      %v3281 = vpop.f32.mrb[0].mxu0
      %3282 = vmatprep.mubr.f32.mxu0 0.0
      %3283 = vmatmul.mubr.f32.gmra.mrb[0].mxu0 %v3105
      %v3284 = vpop.f32.mrb[0].mxu0
      %v3285 = vadd.f32 0.0, %v3284
      %v3286 = vpop.f32.mrb[0].mxu0
      %3287 = vmatprep.mubr.f32.mxu0 0.0
      %3288 = vmatmul.mubr.f32.gmra.mrb[0].mxu0 %v3108
      %v3289 = vpop.f32.mrb[0].mxu0
      %v3290 = vadd.f32 0.0, %v3289
      %v3291 = vpop.f32.mrb[0].mxu0
      %3292 = vmatprep.mubr.f32.mxu0 0.0
      %3293 = vmatmul.mubr.f32.gmra.mrb[0].mxu0 %v3111
      %v3294 = vpop.f32.mrb[0].mxu0
      %v3295 = vadd.f32 0.0, %v3294
      %v3296 = vpop.f32.mrb[0].mxu0
      %3297 = vmatprep.mubr.f32.mxu0 0.0
      %3298 = vmatmul.mubr.f32.gmra.mrb[0].mxu0 %v3114
      %v3299 = vpop.f32.mrb[0].mxu0
      %v3300 = vadd.f32 0.0, %v3299
      %v3301 = vpop.f32.mrb[0].mxu0
      %3302 = vmatprep.mubr.f32.mxu0 0.0
      %3303 = vmatmul.mubr.f32.gmra.mrb[0].mxu0 %v3117
      %v3304 = vpop.f32.mrb[0].mxu0
      %v3305 = vadd.f32 0.0, %v3304
      %v3306 = vpop.f32.mrb[0].mxu0
      %3307 = vmatprep.mubr.f32.mxu0 0.0
      %3308 = vmatmul.mubr.f32.gmra.mrb[0].mxu0 %v3120
      %v3309 = vpop.f32.mrb[0].mxu0
      %v3310 = vadd.f32 0.0, %v3309
      %v3311 = vpop.f32.mrb[0].mxu0
      %3312 = vmatprep.mubr.f32.mxu0 0.0
      %3313 = vmatmul.mubr.f32.gmra.mrb[0].mxu0 %v3123
      %v3314 = vpop.f32.mrb[0].mxu0
      %v3315 = vadd.f32 0.0, %v3314
      %v3316 = vpop.f32.mrb[0].mxu0
      %3317 = vmatprep.mubr.f32.mxu0 0.0
      %3318 = vmatmul.mubr.f32.gmra.mrb[0].mxu0 %v3126
      %v3319 = vpop.f32.mrb[0].mxu0
      %v3320 = vadd.f32 0.0, %v3319
      %v3321 = vpop.f32.mrb[0].mxu0
      %3322 = vmatprep.mubr.f32.mxu0 0.0
      %3323 = vmatmul.mubr.f32.gmra.mrb[0].mxu0 %v3129
      %v3324 = vpop.f32.mrb[0].mxu0
      %v3325 = vadd.f32 0.0, %v3324
      %v3326 = vpop.f32.mrb[0].mxu0
      %3327 = vmatprep.mubr.f32.mxu0 0.0
      %3328 = vmatmul.mubr.f32.gmra.mrb[0].mxu0 %v3132
      %v3329 = vpop.f32.mrb[0].mxu0
      %v3330 = vadd.f32 0.0, %v3329
      %v3331 = vpop.f32.mrb[0].mxu0
      %3332 = vmatprep.mubr.f32.mxu0 0.0
      %3333 = vmatmul.mubr.f32.gmra.mrb[0].mxu0 %v3135
      %v3334 = vpop.f32.mrb[0].mxu0
      %v3335 = vadd.f32 0.0, %v3334
      %v3336 = vpop.f32.mrb[0].mxu0
      %3337 = vmatprep.mubr.f32.mxu0 0.0
      %3338 = vmatmul.mubr.f32.gmra.mrb[0].mxu0 %v3138
      %v3339 = vpop.f32.mrb[0].mxu0
      %v3340 = vadd.f32 0.0, %v3339
      %v3341 = vpop.f32.mrb[0].mxu0
      %3342 = vmatprep.mubr.f32.mxu0 0.0
      %3343 = vmatmul.mubr.f32.gmra.mrb[0].mxu0 %v3141
      %v3344 = vpop.f32.mrb[0].mxu0
      %v3345 = vadd.f32 0.0, %v3344
      %v3346 = vpop.f32.mrb[0].mxu0
      %3347 = vmatprep.mubr.f32.mxu0 0.0
      %3348 = vmatmul.mubr.f32.gmra.mrb[0].mxu0 %v3144
      %v3349 = vpop.f32.mrb[0].mxu0
      %v3350 = vadd.f32 0.0, %v3349
      %v3351 = vpop.f32.mrb[0].mxu0
      %3352 = vmatprep.mubr.f32.mxu0 0.0
      %3353 = vmatmul.mubr.f32.gmra.mrb[0].mxu0 %v3147
      %v3354 = vpop.f32.mrb[0].mxu0
      %v3355 = vadd.f32 0.0, %v3354
      %v3356 = vpop.f32.mrb[0].mxu0
      %3357 = vmatprep.mubr.f32.mxu0 0.0
      %3358 = vmatmul.mubr.f32.gmra.mrb[0].mxu0 %v3150
      %v3359 = vpop.f32.mrb[0].mxu0
      %v3360 = vadd.f32 0.0, %v3359
      %v3361 = vpop.f32.mrb[0].mxu0
      %3362 = vmatprep.mubr.f32.mxu0 0.0
      %3363 = vmatmul.mubr.f32.gmra.mrb[0].mxu0 %v3153
      %v3364 = vpop.f32.mrb[0].mxu0
      %v3365 = vadd.f32 0.0, %v3364
      %v3366 = vpop.f32.mrb[0].mxu0
      %3367 = vmatprep.mubr.f32.mxu0 0.0
      %3368 = vmatmul.mubr.f32.gmra.mrb[0].mxu0 %v3156
      %v3369 = vpop.f32.mrb[0].mxu0
      %v3370 = vadd.f32 0.0, %v3369
      %v3371 = vpop.f32.mrb[0].mxu0
      %3372 = vmatprep.mubr.f32.mxu0 0.0
      %3373 = vmatmul.mubr.f32.gmra.mrb[0].mxu0 %v3159
      %v3374 = vpop.f32.mrb[0].mxu0
      %v3375 = vadd.f32 0.0, %v3374
      %v3376 = vpop.f32.mrb[0].mxu0
      %3377 = vmatprep.mubr.f32.mxu0 0.0
      %3378 = vmatmul.mubr.f32.gmra.mrb[0].mxu0 %v3162
      %v3379 = vpop.f32.mrb[0].mxu0
      %v3380 = vadd.f32 0.0, %v3379
      %v3381 = vpop.f32.mrb[0].mxu0
      %3382 = vmatprep.mubr.f32.mxu0 0.0
      %3383 = vmatmul.mubr.f32.gmra.mrb[0].mxu0 %v3165
      %v3384 = vpop.f32.mrb[0].mxu0
      %v3385 = vadd.f32 0.0, %v3384
      %v3386 = vpop.f32.mrb[0].mxu0
      %3387 = vmatprep.mubr.f32.mxu0 0.0
      %3388 = vmatmul.mubr.f32.gmra.mrb[0].mxu0 %v3168
      %v3389 = vpop.f32.mrb[0].mxu0
      %v3390 = vadd.f32 0.0, %v3389
      %v3391 = vpop.f32.mrb[0].mxu0
      %3392 = vmatprep.mubr.f32.mxu0 0.0
      %3393 = vmatmul.mubr.f32.gmra.mrb[0].mxu0 %v894
      %v3394 = vpop.f32.mrb[0].mxu0
      %v3395 = vadd.f32 0.0, %v3394
      %v3396 = vpop.f32.mrb[0].mxu0
      %3397 = vdwg.mxu0
      %v3398 = vadd.f32 %v3010, %v3240
      %v3399 = vadd.f32 %v3011, %v3245
      %v3400 = vadd.f32 %v3012, %v3250
      %v3401 = vadd.f32 %v3013, %v3255
      %v3402 = vadd.f32 %v3014, %v3260
      %v3403 = vadd.f32 %v3015, %v3265
      %v3404 = vadd.f32 %v3016, %v3270
      %v3405 = vadd.f32 %v3017, %v3275
      %v3406 = vadd.f32 %v3018, %v3280
      %v3407 = vadd.f32 %v3019, %v3285
      %v3408 = vadd.f32 %v3020, %v3290
      %v3409 = vadd.f32 %v3021, %v3295
      %v3410 = vadd.f32 %v3022, %v3300
      %v3411 = vadd.f32 %v3023, %v3305
      %v3412 = vadd.f32 %v3024, %v3310
      %v3413 = vadd.f32 %v3025, %v3315
      %v3414 = vadd.f32 %v3026, %v3320
      %v3415 = vadd.f32 %v3027, %v3325
      %v3416 = vadd.f32 %v3028, %v3330
      %v3417 = vadd.f32 %v3029, %v3335
      %v3418 = vadd.f32 %v3030, %v3340
      %v3419 = vadd.f32 %v3031, %v3345
      %v3420 = vadd.f32 %v3032, %v3350
      %v3421 = vadd.f32 %v3033, %v3355
      %v3422 = vadd.f32 %v3034, %v3360
      %v3423 = vadd.f32 %v3035, %v3365
      %v3424 = vadd.f32 %v3036, %v3370
      %v3425 = vadd.f32 %v3037, %v3375
      %v3426 = vadd.f32 %v3038, %v3380
      %v3427 = vadd.f32 %v3039, %v3385
      %v3428 = vadd.f32 %v3040, %v3390
      %v3429 = vadd.f32 %v3041, %v3395
      %s3430 = scalar_lea.vmem %s1, 28
      %v3431 = vld [vmem:[%s3430] sm:$0xf]
      %v3433 = vsel %vm956, %v3431, 0
      %3435 = vmatprep.subr.mxu0 0.0
      %3436 = vmatpush1.msra.mxu0 %v3433
      %3437 = vmatprep.subr.mxu0 0.0
      %3438 = vmatpush1.msra.mxu0 0.0
      %3439 = vmatprep.subr.mxu0 0.0
      %3440 = vmatpush1.msra.mxu0 0.0
      %3441 = vmatprep.subr.mxu0 0.0
      %3442 = vmatpush1.msra.mxu0 0.0
      %3443 = vmatprep.subr.mxu0 0.0
      %3444 = vmatpush1.msra.mxu0 0.0
      %3445 = vmatprep.subr.mxu0 0.0
      %3446 = vmatpush1.msra.mxu0 0.0
      %3447 = vmatprep.subr.mxu0 0.0
      %3448 = vmatpush1.msra.mxu0 0.0
      %3449 = vmatprep.subr.mxu0 0.0
      %3450 = vmatpush1.msra.mxu0 0.0
      %3451 = vmatprep.subr.mxu0 0.0
      %3452 = vmatpush1.msra.mxu0 0.0
      %3453 = vmatprep.subr.mxu0 0.0
      %3454 = vmatpush1.msra.mxu0 0.0
      %3455 = vmatprep.subr.mxu0 0.0
      %3456 = vmatpush1.msra.mxu0 0.0
      %3457 = vmatprep.subr.mxu0 0.0
      %3458 = vmatpush1.msra.mxu0 0.0
      %3459 = vmatprep.subr.mxu0 0.0
      %3460 = vmatpush1.msra.mxu0 0.0
      %3461 = vmatprep.subr.mxu0 0.0
      %3462 = vmatpush1.msra.mxu0 0.0
      %3463 = vmatprep.subr.mxu0 0.0
      %3464 = vmatpush1.msra.mxu0 0.0
      %3465 = vmatprep.subr.mxu0 0.0
      %3466 = vmatpush1.msra.mxu0 0.0
      %3467 = vmatprep.subr.mxu0 0.0
      %3468 = vmatpush1.msra.mxu0 0.0
      %3469 = vmatprep.subr.mxu0 0.0
      %3470 = vmatpush1.msra.mxu0 0.0
      %3471 = vmatprep.subr.mxu0 0.0
      %3472 = vmatpush1.msra.mxu0 0.0
      %3473 = vmatprep.subr.mxu0 0.0
      %3474 = vmatpush1.msra.mxu0 0.0
      %3475 = vmatprep.subr.mxu0 0.0
      %3476 = vmatpush1.msra.mxu0 0.0
      %3477 = vmatprep.subr.mxu0 0.0
      %3478 = vmatpush1.msra.mxu0 0.0
      %3479 = vmatprep.subr.mxu0 0.0
      %3480 = vmatpush1.msra.mxu0 0.0
      %3481 = vmatprep.subr.mxu0 0.0
      %3482 = vmatpush1.msra.mxu0 0.0
      %3483 = vmatprep.subr.mxu0 0.0
      %3484 = vmatpush1.msra.mxu0 0.0
      %3485 = vmatprep.subr.mxu0 0.0
      %3486 = vmatpush1.msra.mxu0 0.0
      %3487 = vmatprep.subr.mxu0 0.0
      %3488 = vmatpush1.msra.mxu0 0.0
      %3489 = vmatprep.subr.mxu0 0.0
      %3490 = vmatpush1.msra.mxu0 0.0
      %3491 = vmatprep.subr.mxu0 0.0
      %3492 = vmatpush1.msra.mxu0 0.0
      %3493 = vmatprep.subr.mxu0 0.0
      %3494 = vmatpush1.msra.mxu0 0.0
      %3495 = vmatprep.subr.mxu0 0.0
      %3496 = vmatpush1.msra.mxu0 0.0
      %3497 = vmatprep.subr.mxu0 0.0
      %3498 = vmatpush1.msra.mxu0 0.0
      %3499 = vmatprep.mubr.f32.mxu0 0.0
      %3500 = vmatmul.mubr.f32.gmra.mrb[0].mxu0 %v900
      %v3501 = vpop.f32.mrb[0].mxu0
      %v3502 = vadd.f32 0.0, %v3501
      %v3503 = vpop.f32.mrb[0].mxu0
      %3504 = vmatprep.mubr.f32.mxu0 0.0
      %3505 = vmatmul.mubr.f32.gmra.mrb[0].mxu0 %v902
      %v3506 = vpop.f32.mrb[0].mxu0
      %v3507 = vadd.f32 0.0, %v3506
      %v3508 = vpop.f32.mrb[0].mxu0
      %3509 = vmatprep.mubr.f32.mxu0 0.0
      %3510 = vmatmul.mubr.f32.gmra.mrb[0].mxu0 %v904
      %v3511 = vpop.f32.mrb[0].mxu0
      %v3512 = vadd.f32 0.0, %v3511
      %v3513 = vpop.f32.mrb[0].mxu0
      %3514 = vmatprep.mubr.f32.mxu0 0.0
      %3515 = vmatmul.mubr.f32.gmra.mrb[0].mxu0 %v906
      %v3516 = vpop.f32.mrb[0].mxu0
      %v3517 = vadd.f32 0.0, %v3516
      %v3518 = vpop.f32.mrb[0].mxu0
      %3519 = vmatprep.mubr.f32.mxu0 0.0
      %3520 = vmatmul.mubr.f32.gmra.mrb[0].mxu0 %v908
      %v3521 = vpop.f32.mrb[0].mxu0
      %v3522 = vadd.f32 0.0, %v3521
      %v3523 = vpop.f32.mrb[0].mxu0
      %3524 = vmatprep.mubr.f32.mxu0 0.0
      %3525 = vmatmul.mubr.f32.gmra.mrb[0].mxu0 %v910
      %v3526 = vpop.f32.mrb[0].mxu0
      %v3527 = vadd.f32 0.0, %v3526
      %v3528 = vpop.f32.mrb[0].mxu0
      %3529 = vmatprep.mubr.f32.mxu0 0.0
      %3530 = vmatmul.mubr.f32.gmra.mrb[0].mxu0 %v912
      %v3531 = vpop.f32.mrb[0].mxu0
      %v3532 = vadd.f32 0.0, %v3531
      %v3533 = vpop.f32.mrb[0].mxu0
      %3534 = vmatprep.mubr.f32.mxu0 0.0
      %3535 = vmatmul.mubr.f32.gmra.mrb[0].mxu0 %v914
      %v3536 = vpop.f32.mrb[0].mxu0
      %v3537 = vadd.f32 0.0, %v3536
      %v3538 = vpop.f32.mrb[0].mxu0
      %3539 = vmatprep.mubr.f32.mxu0 0.0
      %3540 = vmatmul.mubr.f32.gmra.mrb[0].mxu0 %v916
      %v3541 = vpop.f32.mrb[0].mxu0
      %v3542 = vadd.f32 0.0, %v3541
      %v3543 = vpop.f32.mrb[0].mxu0
      %3544 = vmatprep.mubr.f32.mxu0 0.0
      %3545 = vmatmul.mubr.f32.gmra.mrb[0].mxu0 %v918
      %v3546 = vpop.f32.mrb[0].mxu0
      %v3547 = vadd.f32 0.0, %v3546
      %v3548 = vpop.f32.mrb[0].mxu0
      %3549 = vmatprep.mubr.f32.mxu0 0.0
      %3550 = vmatmul.mubr.f32.gmra.mrb[0].mxu0 %v920
      %v3551 = vpop.f32.mrb[0].mxu0
      %v3552 = vadd.f32 0.0, %v3551
      %v3553 = vpop.f32.mrb[0].mxu0
      %3554 = vmatprep.mubr.f32.mxu0 0.0
      %3555 = vmatmul.mubr.f32.gmra.mrb[0].mxu0 %v922
      %v3556 = vpop.f32.mrb[0].mxu0
      %v3557 = vadd.f32 0.0, %v3556
      %v3558 = vpop.f32.mrb[0].mxu0
      %3559 = vmatprep.mubr.f32.mxu0 0.0
      %3560 = vmatmul.mubr.f32.gmra.mrb[0].mxu0 %v924
      %v3561 = vpop.f32.mrb[0].mxu0
      %v3562 = vadd.f32 0.0, %v3561
      %v3563 = vpop.f32.mrb[0].mxu0
      %3564 = vmatprep.mubr.f32.mxu0 0.0
      %3565 = vmatmul.mubr.f32.gmra.mrb[0].mxu0 %v926
      %v3566 = vpop.f32.mrb[0].mxu0
      %v3567 = vadd.f32 0.0, %v3566
      %v3568 = vpop.f32.mrb[0].mxu0
      %3569 = vmatprep.mubr.f32.mxu0 0.0
      %3570 = vmatmul.mubr.f32.gmra.mrb[0].mxu0 %v928
      %v3571 = vpop.f32.mrb[0].mxu0
      %v3572 = vadd.f32 0.0, %v3571
      %v3573 = vpop.f32.mrb[0].mxu0
      %3574 = vmatprep.mubr.f32.mxu0 0.0
      %3575 = vmatmul.mubr.f32.gmra.mrb[0].mxu0 %v930
      %v3576 = vpop.f32.mrb[0].mxu0
      %v3577 = vadd.f32 0.0, %v3576
      %v3578 = vpop.f32.mrb[0].mxu0
      %3579 = vmatprep.mubr.f32.mxu0 0.0
      %3580 = vmatmul.mubr.f32.gmra.mrb[0].mxu0 %v932
      %v3581 = vpop.f32.mrb[0].mxu0
      %v3582 = vadd.f32 0.0, %v3581
      %v3583 = vpop.f32.mrb[0].mxu0
      %3584 = vmatprep.mubr.f32.mxu0 0.0
      %3585 = vmatmul.mubr.f32.gmra.mrb[0].mxu0 %v934
      %v3586 = vpop.f32.mrb[0].mxu0
      %v3587 = vadd.f32 0.0, %v3586
      %v3588 = vpop.f32.mrb[0].mxu0
      %3589 = vmatprep.mubr.f32.mxu0 0.0
      %3590 = vmatmul.mubr.f32.gmra.mrb[0].mxu0 %v936
      %v3591 = vpop.f32.mrb[0].mxu0
      %v3592 = vadd.f32 0.0, %v3591
      %v3593 = vpop.f32.mrb[0].mxu0
      %3594 = vmatprep.mubr.f32.mxu0 0.0
      %3595 = vmatmul.mubr.f32.gmra.mrb[0].mxu0 %v938
      %v3596 = vpop.f32.mrb[0].mxu0
      %v3597 = vadd.f32 0.0, %v3596
      %v3598 = vpop.f32.mrb[0].mxu0
      %3599 = vmatprep.mubr.f32.mxu0 0.0
      %3600 = vmatmul.mubr.f32.gmra.mrb[0].mxu0 %v940
      %v3601 = vpop.f32.mrb[0].mxu0
      %v3602 = vadd.f32 0.0, %v3601
      %v3603 = vpop.f32.mrb[0].mxu0
      %3604 = vmatprep.mubr.f32.mxu0 0.0
      %3605 = vmatmul.mubr.f32.gmra.mrb[0].mxu0 %v942
      %v3606 = vpop.f32.mrb[0].mxu0
      %v3607 = vadd.f32 0.0, %v3606
      %v3608 = vpop.f32.mrb[0].mxu0
      %3609 = vmatprep.mubr.f32.mxu0 0.0
      %3610 = vmatmul.mubr.f32.gmra.mrb[0].mxu0 %v944
      %v3611 = vpop.f32.mrb[0].mxu0
      %v3612 = vadd.f32 0.0, %v3611
      %v3613 = vpop.f32.mrb[0].mxu0
      %3614 = vmatprep.mubr.f32.mxu0 0.0
      %3615 = vmatmul.mubr.f32.gmra.mrb[0].mxu0 %v946
      %v3616 = vpop.f32.mrb[0].mxu0
      %v3617 = vadd.f32 0.0, %v3616
      %v3618 = vpop.f32.mrb[0].mxu0
      %3619 = vmatprep.mubr.f32.mxu0 0.0
      %3620 = vmatmul.mubr.f32.gmra.mrb[0].mxu0 %v948
      %v3621 = vpop.f32.mrb[0].mxu0
      %v3622 = vadd.f32 0.0, %v3621
      %v3623 = vpop.f32.mrb[0].mxu0
      %3624 = vmatprep.mubr.f32.mxu0 0.0
      %3625 = vmatmul.mubr.f32.gmra.mrb[0].mxu0 %v950
      %v3626 = vpop.f32.mrb[0].mxu0
      %v3627 = vadd.f32 0.0, %v3626
      %v3628 = vpop.f32.mrb[0].mxu0
      %3629 = vmatprep.mubr.f32.mxu0 0.0
      %3630 = vmatmul.mubr.f32.gmra.mrb[0].mxu0 %v952
      %v3631 = vpop.f32.mrb[0].mxu0
      %v3632 = vadd.f32 0.0, %v3631
      %v3633 = vpop.f32.mrb[0].mxu0
      %3634 = vmatprep.mubr.f32.mxu0 0.0
      %3635 = vmatmul.mubr.f32.gmra.mrb[0].mxu0 %v954
      %v3636 = vpop.f32.mrb[0].mxu0
      %v3637 = vadd.f32 0.0, %v3636
      %v3638 = vpop.f32.mrb[0].mxu0
      %3639 = vmatprep.mubr.f32.mxu0 0.0
      %3640 = vmatmul.mubr.f32.gmra.mrb[0].mxu0 %v2383
      %v3641 = vpop.f32.mrb[0].mxu0
      %v3642 = vadd.f32 0.0, %v3641
      %v3643 = vpop.f32.mrb[0].mxu0
      %3644 = vmatprep.mubr.f32.mxu0 0.0
      %3645 = vmatmul.mubr.f32.gmra.mrb[0].mxu0 %v2385
      %v3646 = vpop.f32.mrb[0].mxu0
      %v3647 = vadd.f32 0.0, %v3646
      %v3648 = vpop.f32.mrb[0].mxu0
      %3649 = vmatprep.mubr.f32.mxu0 0.0
      %3650 = vmatmul.mubr.f32.gmra.mrb[0].mxu0 %v894
      %v3651 = vpop.f32.mrb[0].mxu0
      %v3652 = vadd.f32 0.0, %v3651
      %v3653 = vpop.f32.mrb[0].mxu0
      %3654 = vmatprep.mubr.f32.mxu0 0.0
      %3655 = vmatmul.mubr.f32.gmra.mrb[0].mxu0 %v894
      %v3656 = vpop.f32.mrb[0].mxu0
      %v3657 = vadd.f32 0.0, %v3656
      %v3658 = vpop.f32.mrb[0].mxu0
      %3659 = vdwg.mxu0
      %v3660 = vadd.f32 %v3398, %v3502
      %v3661 = vadd.f32 %v3399, %v3507
      %v3662 = vadd.f32 %v3400, %v3512
      %v3663 = vadd.f32 %v3401, %v3517
      %v3664 = vadd.f32 %v3402, %v3522
      %v3665 = vadd.f32 %v3403, %v3527
      %v3666 = vadd.f32 %v3404, %v3532
      %v3667 = vadd.f32 %v3405, %v3537
      %v3668 = vadd.f32 %v3406, %v3542
      %v3669 = vadd.f32 %v3407, %v3547
      %v3670 = vadd.f32 %v3408, %v3552
      %v3671 = vadd.f32 %v3409, %v3557
      %v3672 = vadd.f32 %v3410, %v3562
      %v3673 = vadd.f32 %v3411, %v3567
      %v3674 = vadd.f32 %v3412, %v3572
      %v3675 = vadd.f32 %v3413, %v3577
      %v3676 = vadd.f32 %v3414, %v3582
      %v3677 = vadd.f32 %v3415, %v3587
      %v3678 = vadd.f32 %v3416, %v3592
      %v3679 = vadd.f32 %v3417, %v3597
      %v3680 = vadd.f32 %v3418, %v3602
      %v3681 = vadd.f32 %v3419, %v3607
      %v3682 = vadd.f32 %v3420, %v3612
      %v3683 = vadd.f32 %v3421, %v3617
      %v3684 = vadd.f32 %v3422, %v3622
      %v3685 = vadd.f32 %v3423, %v3627
      %v3686 = vadd.f32 %v3424, %v3632
      %v3687 = vadd.f32 %v3425, %v3637
      %v3688 = vadd.f32 %v3426, %v3642
      %v3689 = vadd.f32 %v3427, %v3647
      %v3690 = vadd.f32 %v3428, %v3652
      %v3691 = vadd.f32 %v3429, %v3657
      %v3692 = vsel %vm706, %v1511, 0.0
      %v3693 = vsel %vm707, %v1513, 0.0
      %v3694 = vsel %vm708, %v1515, 0.0
      %v3695 = vsel %vm709, %v1517, 0.0
      %v3696 = vsel %vm710, %v1519, 0.0
      %v3697 = vsel %vm711, %v1521, 0.0
      %v3698 = vsel %vm712, %v1523, 0.0
      %v3699 = vsel %vm713, %v1525, 0.0
      %v3700 = vsel %vm714, %v1527, 0.0
      %v3701 = vsel %vm715, %v1529, 0.0
      %v3702 = vsel %vm716, %v1531, 0.0
      %v3703 = vsel %vm717, %v1533, 0.0
      %v3704 = vsel %vm718, %v1535, 0.0
      %v3705 = vsel %vm719, %v1537, 0.0
      %v3706 = vsel %vm720, %v1539, 0.0
      %v3707 = vsel %vm721, %v1541, 0.0
      %v3708 = vsel %vm722, %v1543, 0.0
      %v3709 = vsel %vm723, %v1545, 0.0
      %v3710 = vsel %vm724, %v1547, 0.0
      %v3711 = vsel %vm725, %v1549, 0.0
      %v3712 = vsel %vm726, %v1551, 0.0
      %v3713 = vsel %vm727, %v1553, 0.0
      %v3714 = vsel %vm728, %v1555, 0.0
      %v3715 = vsel %vm729, %v1557, 0.0
      %v3716 = vsel %vm730, %v1559, 0.0
      %v3717 = vsel %vm731, %v1561, 0.0
      %v3718 = vsel %vm732, %v1563, 0.0
      %v3719 = vsel %vm733, %v1565, 0.0
      %v3720 = vsel %vm734, %v2648, 0.0
      %v3721 = vsel %vm735, %v2651, 0.0
      %s3722 = scalar_lea.vmem %s1, 32
      %v3723 = vld [vmem:[%s3722] sm:$0xf]
      %v3725 = vsel %vm892, %v3692, 0
      %v3728 = vsel %vm892, %v3693, 0
      %v3731 = vsel %vm892, %v3694, 0
      %v3734 = vsel %vm892, %v3695, 0
      %v3737 = vsel %vm892, %v3696, 0
      %v3740 = vsel %vm892, %v3697, 0
      %v3743 = vsel %vm892, %v3698, 0
      %v3746 = vsel %vm892, %v3699, 0
      %v3749 = vsel %vm892, %v3700, 0
      %v3752 = vsel %vm892, %v3701, 0
      %v3755 = vsel %vm892, %v3702, 0
      %v3758 = vsel %vm892, %v3703, 0
      %v3761 = vsel %vm892, %v3704, 0
      %v3764 = vsel %vm892, %v3705, 0
      %v3767 = vsel %vm892, %v3706, 0
      %v3770 = vsel %vm892, %v3707, 0
      %v3773 = vsel %vm892, %v3708, 0
      %v3776 = vsel %vm892, %v3709, 0
      %v3779 = vsel %vm892, %v3710, 0
      %v3782 = vsel %vm892, %v3711, 0
      %v3785 = vsel %vm892, %v3712, 0
      %v3788 = vsel %vm892, %v3713, 0
      %v3791 = vsel %vm892, %v3714, 0
      %v3794 = vsel %vm892, %v3715, 0
      %v3797 = vsel %vm892, %v3716, 0
      %v3800 = vsel %vm892, %v3717, 0
      %v3803 = vsel %vm892, %v3718, 0
      %v3806 = vsel %vm892, %v3719, 0
      %v3809 = vsel %vm892, %v3720, 0
      %v3812 = vsel %vm892, %v3721, 0
      %v3815 = vsel %vm956, %v3723, 0
      %3817 = vmatprep.subr.mxu0 0.0
      %3818 = vmatpush1.msra.mxu0 %v3815
      %3819 = vmatprep.subr.mxu0 0.0
      %3820 = vmatpush1.msra.mxu0 0.0
      %3821 = vmatprep.subr.mxu0 0.0
      %3822 = vmatpush1.msra.mxu0 0.0
      %3823 = vmatprep.subr.mxu0 0.0
      %3824 = vmatpush1.msra.mxu0 0.0
      %3825 = vmatprep.subr.mxu0 0.0
      %3826 = vmatpush1.msra.mxu0 0.0
      %3827 = vmatprep.subr.mxu0 0.0
      %3828 = vmatpush1.msra.mxu0 0.0
      %3829 = vmatprep.subr.mxu0 0.0
      %3830 = vmatpush1.msra.mxu0 0.0
      %3831 = vmatprep.subr.mxu0 0.0
      %3832 = vmatpush1.msra.mxu0 0.0
      %3833 = vmatprep.subr.mxu0 0.0
      %3834 = vmatpush1.msra.mxu0 0.0
      %3835 = vmatprep.subr.mxu0 0.0
      %3836 = vmatpush1.msra.mxu0 0.0
      %3837 = vmatprep.subr.mxu0 0.0
      %3838 = vmatpush1.msra.mxu0 0.0
      %3839 = vmatprep.subr.mxu0 0.0
      %3840 = vmatpush1.msra.mxu0 0.0
      %3841 = vmatprep.subr.mxu0 0.0
      %3842 = vmatpush1.msra.mxu0 0.0
      %3843 = vmatprep.subr.mxu0 0.0
      %3844 = vmatpush1.msra.mxu0 0.0
      %3845 = vmatprep.subr.mxu0 0.0
      %3846 = vmatpush1.msra.mxu0 0.0
      %3847 = vmatprep.subr.mxu0 0.0
      %3848 = vmatpush1.msra.mxu0 0.0
      %3849 = vmatprep.subr.mxu0 0.0
      %3850 = vmatpush1.msra.mxu0 0.0
      %3851 = vmatprep.subr.mxu0 0.0
      %3852 = vmatpush1.msra.mxu0 0.0
      %3853 = vmatprep.subr.mxu0 0.0
      %3854 = vmatpush1.msra.mxu0 0.0
      %3855 = vmatprep.subr.mxu0 0.0
      %3856 = vmatpush1.msra.mxu0 0.0
      %3857 = vmatprep.subr.mxu0 0.0
      %3858 = vmatpush1.msra.mxu0 0.0
      %3859 = vmatprep.subr.mxu0 0.0
      %3860 = vmatpush1.msra.mxu0 0.0
      %3861 = vmatprep.subr.mxu0 0.0
      %3862 = vmatpush1.msra.mxu0 0.0
      %3863 = vmatprep.subr.mxu0 0.0
      %3864 = vmatpush1.msra.mxu0 0.0
      %3865 = vmatprep.subr.mxu0 0.0
      %3866 = vmatpush1.msra.mxu0 0.0
      %3867 = vmatprep.subr.mxu0 0.0
      %3868 = vmatpush1.msra.mxu0 0.0
      %3869 = vmatprep.subr.mxu0 0.0
      %3870 = vmatpush1.msra.mxu0 0.0
      %3871 = vmatprep.subr.mxu0 0.0
      %3872 = vmatpush1.msra.mxu0 0.0
      %3873 = vmatprep.subr.mxu0 0.0
      %3874 = vmatpush1.msra.mxu0 0.0
      %3875 = vmatprep.subr.mxu0 0.0
      %3876 = vmatpush1.msra.mxu0 0.0
      %3877 = vmatprep.subr.mxu0 0.0
      %3878 = vmatpush1.msra.mxu0 0.0
      %3879 = vmatprep.subr.mxu0 0.0
      %3880 = vmatpush1.msra.mxu0 0.0
      %3881 = vmatprep.mubr.f32.mxu0 0.0
      %3882 = vmatmul.mubr.f32.gmra.mrb[0].mxu0 %v3725
      %v3883 = vpop.f32.mrb[0].mxu0
      %v3884 = vadd.f32 0.0, %v3883
      %v3885 = vpop.f32.mrb[0].mxu0
      %3886 = vmatprep.mubr.f32.mxu0 0.0
      %3887 = vmatmul.mubr.f32.gmra.mrb[0].mxu0 %v3728
      %v3888 = vpop.f32.mrb[0].mxu0
      %v3889 = vadd.f32 0.0, %v3888
      %v3890 = vpop.f32.mrb[0].mxu0
      %3891 = vmatprep.mubr.f32.mxu0 0.0
      %3892 = vmatmul.mubr.f32.gmra.mrb[0].mxu0 %v3731
      %v3893 = vpop.f32.mrb[0].mxu0
      %v3894 = vadd.f32 0.0, %v3893
      %v3895 = vpop.f32.mrb[0].mxu0
      %3896 = vmatprep.mubr.f32.mxu0 0.0
      %3897 = vmatmul.mubr.f32.gmra.mrb[0].mxu0 %v3734
      %v3898 = vpop.f32.mrb[0].mxu0
      %v3899 = vadd.f32 0.0, %v3898
      %v3900 = vpop.f32.mrb[0].mxu0
      %3901 = vmatprep.mubr.f32.mxu0 0.0
      %3902 = vmatmul.mubr.f32.gmra.mrb[0].mxu0 %v3737
      %v3903 = vpop.f32.mrb[0].mxu0
      %v3904 = vadd.f32 0.0, %v3903
      %v3905 = vpop.f32.mrb[0].mxu0
      %3906 = vmatprep.mubr.f32.mxu0 0.0
      %3907 = vmatmul.mubr.f32.gmra.mrb[0].mxu0 %v3740
      %v3908 = vpop.f32.mrb[0].mxu0
      %v3909 = vadd.f32 0.0, %v3908
      %v3910 = vpop.f32.mrb[0].mxu0
      %3911 = vmatprep.mubr.f32.mxu0 0.0
      %3912 = vmatmul.mubr.f32.gmra.mrb[0].mxu0 %v3743
      %v3913 = vpop.f32.mrb[0].mxu0
      %v3914 = vadd.f32 0.0, %v3913
      %v3915 = vpop.f32.mrb[0].mxu0
      %3916 = vmatprep.mubr.f32.mxu0 0.0
      %3917 = vmatmul.mubr.f32.gmra.mrb[0].mxu0 %v3746
      %v3918 = vpop.f32.mrb[0].mxu0
      %v3919 = vadd.f32 0.0, %v3918
      %v3920 = vpop.f32.mrb[0].mxu0
      %3921 = vmatprep.mubr.f32.mxu0 0.0
      %3922 = vmatmul.mubr.f32.gmra.mrb[0].mxu0 %v3749
      %v3923 = vpop.f32.mrb[0].mxu0
      %v3924 = vadd.f32 0.0, %v3923
      %v3925 = vpop.f32.mrb[0].mxu0
      %3926 = vmatprep.mubr.f32.mxu0 0.0
      %3927 = vmatmul.mubr.f32.gmra.mrb[0].mxu0 %v3752
      %v3928 = vpop.f32.mrb[0].mxu0
      %v3929 = vadd.f32 0.0, %v3928
      %v3930 = vpop.f32.mrb[0].mxu0
      %3931 = vmatprep.mubr.f32.mxu0 0.0
      %3932 = vmatmul.mubr.f32.gmra.mrb[0].mxu0 %v3755
      %v3933 = vpop.f32.mrb[0].mxu0
      %v3934 = vadd.f32 0.0, %v3933
      %v3935 = vpop.f32.mrb[0].mxu0
      %3936 = vmatprep.mubr.f32.mxu0 0.0
      %3937 = vmatmul.mubr.f32.gmra.mrb[0].mxu0 %v3758
      %v3938 = vpop.f32.mrb[0].mxu0
      %v3939 = vadd.f32 0.0, %v3938
      %v3940 = vpop.f32.mrb[0].mxu0
      %3941 = vmatprep.mubr.f32.mxu0 0.0
      %3942 = vmatmul.mubr.f32.gmra.mrb[0].mxu0 %v3761
      %v3943 = vpop.f32.mrb[0].mxu0
      %v3944 = vadd.f32 0.0, %v3943
      %v3945 = vpop.f32.mrb[0].mxu0
      %3946 = vmatprep.mubr.f32.mxu0 0.0
      %3947 = vmatmul.mubr.f32.gmra.mrb[0].mxu0 %v3764
      %v3948 = vpop.f32.mrb[0].mxu0
      %v3949 = vadd.f32 0.0, %v3948
      %v3950 = vpop.f32.mrb[0].mxu0
      %3951 = vmatprep.mubr.f32.mxu0 0.0
      %3952 = vmatmul.mubr.f32.gmra.mrb[0].mxu0 %v3767
      %v3953 = vpop.f32.mrb[0].mxu0
      %v3954 = vadd.f32 0.0, %v3953
      %v3955 = vpop.f32.mrb[0].mxu0
      %3956 = vmatprep.mubr.f32.mxu0 0.0
      %3957 = vmatmul.mubr.f32.gmra.mrb[0].mxu0 %v3770
      %v3958 = vpop.f32.mrb[0].mxu0
      %v3959 = vadd.f32 0.0, %v3958
      %v3960 = vpop.f32.mrb[0].mxu0
      %3961 = vmatprep.mubr.f32.mxu0 0.0
      %3962 = vmatmul.mubr.f32.gmra.mrb[0].mxu0 %v3773
      %v3963 = vpop.f32.mrb[0].mxu0
      %v3964 = vadd.f32 0.0, %v3963
      %v3965 = vpop.f32.mrb[0].mxu0
      %3966 = vmatprep.mubr.f32.mxu0 0.0
      %3967 = vmatmul.mubr.f32.gmra.mrb[0].mxu0 %v3776
      %v3968 = vpop.f32.mrb[0].mxu0
      %v3969 = vadd.f32 0.0, %v3968
      %v3970 = vpop.f32.mrb[0].mxu0
      %3971 = vmatprep.mubr.f32.mxu0 0.0
      %3972 = vmatmul.mubr.f32.gmra.mrb[0].mxu0 %v3779
      %v3973 = vpop.f32.mrb[0].mxu0
      %v3974 = vadd.f32 0.0, %v3973
      %v3975 = vpop.f32.mrb[0].mxu0
      %3976 = vmatprep.mubr.f32.mxu0 0.0
      %3977 = vmatmul.mubr.f32.gmra.mrb[0].mxu0 %v3782
      %v3978 = vpop.f32.mrb[0].mxu0
      %v3979 = vadd.f32 0.0, %v3978
      %v3980 = vpop.f32.mrb[0].mxu0
      %3981 = vmatprep.mubr.f32.mxu0 0.0
      %3982 = vmatmul.mubr.f32.gmra.mrb[0].mxu0 %v3785
      %v3983 = vpop.f32.mrb[0].mxu0
      %v3984 = vadd.f32 0.0, %v3983
      %v3985 = vpop.f32.mrb[0].mxu0
      %3986 = vmatprep.mubr.f32.mxu0 0.0
      %3987 = vmatmul.mubr.f32.gmra.mrb[0].mxu0 %v3788
      %v3988 = vpop.f32.mrb[0].mxu0
      %v3989 = vadd.f32 0.0, %v3988
      %v3990 = vpop.f32.mrb[0].mxu0
      %3991 = vmatprep.mubr.f32.mxu0 0.0
      %3992 = vmatmul.mubr.f32.gmra.mrb[0].mxu0 %v3791
      %v3993 = vpop.f32.mrb[0].mxu0
      %v3994 = vadd.f32 0.0, %v3993
      %v3995 = vpop.f32.mrb[0].mxu0
      %3996 = vmatprep.mubr.f32.mxu0 0.0
      %3997 = vmatmul.mubr.f32.gmra.mrb[0].mxu0 %v3794
      %v3998 = vpop.f32.mrb[0].mxu0
      %v3999 = vadd.f32 0.0, %v3998
      %v4000 = vpop.f32.mrb[0].mxu0
      %4001 = vmatprep.mubr.f32.mxu0 0.0
      %4002 = vmatmul.mubr.f32.gmra.mrb[0].mxu0 %v3797
      %v4003 = vpop.f32.mrb[0].mxu0
      %v4004 = vadd.f32 0.0, %v4003
      %v4005 = vpop.f32.mrb[0].mxu0
      %4006 = vmatprep.mubr.f32.mxu0 0.0
      %4007 = vmatmul.mubr.f32.gmra.mrb[0].mxu0 %v3800
      %v4008 = vpop.f32.mrb[0].mxu0
      %v4009 = vadd.f32 0.0, %v4008
      %v4010 = vpop.f32.mrb[0].mxu0
      %4011 = vmatprep.mubr.f32.mxu0 0.0
      %4012 = vmatmul.mubr.f32.gmra.mrb[0].mxu0 %v3803
      %v4013 = vpop.f32.mrb[0].mxu0
      %v4014 = vadd.f32 0.0, %v4013
      %v4015 = vpop.f32.mrb[0].mxu0
      %4016 = vmatprep.mubr.f32.mxu0 0.0
      %4017 = vmatmul.mubr.f32.gmra.mrb[0].mxu0 %v3806
      %v4018 = vpop.f32.mrb[0].mxu0
      %v4019 = vadd.f32 0.0, %v4018
      %v4020 = vpop.f32.mrb[0].mxu0
      %4021 = vmatprep.mubr.f32.mxu0 0.0
      %4022 = vmatmul.mubr.f32.gmra.mrb[0].mxu0 %v3809
      %v4023 = vpop.f32.mrb[0].mxu0
      %v4024 = vadd.f32 0.0, %v4023
      %v4025 = vpop.f32.mrb[0].mxu0
      %4026 = vmatprep.mubr.f32.mxu0 0.0
      %4027 = vmatmul.mubr.f32.gmra.mrb[0].mxu0 %v3812
      %v4028 = vpop.f32.mrb[0].mxu0
      %v4029 = vadd.f32 0.0, %v4028
      %v4030 = vpop.f32.mrb[0].mxu0
      %4031 = vmatprep.mubr.f32.mxu0 0.0
      %4032 = vmatmul.mubr.f32.gmra.mrb[0].mxu0 %v894
      %v4033 = vpop.f32.mrb[0].mxu0
      %v4034 = vadd.f32 0.0, %v4033
      %v4035 = vpop.f32.mrb[0].mxu0
      %4036 = vmatprep.mubr.f32.mxu0 0.0
      %4037 = vmatmul.mubr.f32.gmra.mrb[0].mxu0 %v894
      %v4038 = vpop.f32.mrb[0].mxu0
      %v4039 = vadd.f32 0.0, %v4038
      %v4040 = vpop.f32.mrb[0].mxu0
      %4041 = vdwg.mxu0
      %v4042 = vadd.f32 %v3660, %v3884
      %v4043 = vadd.f32 %v3661, %v3889
      %v4044 = vadd.f32 %v3662, %v3894
      %v4045 = vadd.f32 %v3663, %v3899
      %v4046 = vadd.f32 %v3664, %v3904
      %v4047 = vadd.f32 %v3665, %v3909
      %v4048 = vadd.f32 %v3666, %v3914
      %v4049 = vadd.f32 %v3667, %v3919
      %v4050 = vadd.f32 %v3668, %v3924
      %v4051 = vadd.f32 %v3669, %v3929
      %v4052 = vadd.f32 %v3670, %v3934
      %v4053 = vadd.f32 %v3671, %v3939
      %v4054 = vadd.f32 %v3672, %v3944
      %v4055 = vadd.f32 %v3673, %v3949
      %v4056 = vadd.f32 %v3674, %v3954
      %v4057 = vadd.f32 %v3675, %v3959
      %v4058 = vadd.f32 %v3676, %v3964
      %v4059 = vadd.f32 %v3677, %v3969
      %v4060 = vadd.f32 %v3678, %v3974
      %v4061 = vadd.f32 %v3679, %v3979
      %v4062 = vadd.f32 %v3680, %v3984
      %v4063 = vadd.f32 %v3681, %v3989
      %v4064 = vadd.f32 %v3682, %v3994
      %v4065 = vadd.f32 %v3683, %v3999
      %v4066 = vadd.f32 %v3684, %v4004
      %v4067 = vadd.f32 %v3685, %v4009
      %v4068 = vadd.f32 %v3686, %v4014
      %v4069 = vadd.f32 %v3687, %v4019
      %v4070 = vadd.f32 %v3688, %v4024
      %v4071 = vadd.f32 %v3689, %v4029
      %v4072 = vadd.f32 %v3690, %v4034
      %v4073 = vadd.f32 %v3691, %v4039
      %v4074 = vld [vmem:[%s2] sm:$0x1]
      %v4076 = vlaneseq
      %v4077 = vshrl.u32 %v4076, 7
      %v4078 = vsub.s32 0, %v4077
      %v4079 = vrot.slane %v4074, %v4078
      %v4081 = vadd.f32 %v4042, %v4079
      %v4082 = vadd.f32 %v4043, %v4079
      %v4083 = vadd.f32 %v4044, %v4079
      %v4084 = vadd.f32 %v4045, %v4079
      %v4085 = vadd.f32 %v4046, %v4079
      %v4086 = vadd.f32 %v4047, %v4079
      %v4087 = vadd.f32 %v4048, %v4079
      %v4088 = vadd.f32 %v4049, %v4079
      %v4089 = vadd.f32 %v4050, %v4079
      %v4090 = vadd.f32 %v4051, %v4079
      %v4091 = vadd.f32 %v4052, %v4079
      %v4092 = vadd.f32 %v4053, %v4079
      %v4093 = vadd.f32 %v4054, %v4079
      %v4094 = vadd.f32 %v4055, %v4079
      %v4095 = vadd.f32 %v4056, %v4079
      %v4096 = vadd.f32 %v4057, %v4079
      %v4097 = vadd.f32 %v4058, %v4079
      %v4098 = vadd.f32 %v4059, %v4079
      %v4099 = vadd.f32 %v4060, %v4079
      %v4100 = vadd.f32 %v4061, %v4079
      %v4101 = vadd.f32 %v4062, %v4079
      %v4102 = vadd.f32 %v4063, %v4079
      %v4103 = vadd.f32 %v4064, %v4079
      %v4104 = vadd.f32 %v4065, %v4079
      %v4105 = vadd.f32 %v4066, %v4079
      %v4106 = vadd.f32 %v4067, %v4079
      %v4107 = vadd.f32 %v4068, %v4079
      %v4108 = vadd.f32 %v4069, %v4079
      %v4109 = vadd.f32 %v4070, %v4079
      %v4110 = vadd.f32 %v4071, %v4079
      %v4111 = vadd.f32 %v4072, %v4079
      %v4112 = vadd.f32 %v4073, %v4079
      %vm4113 = vcmp.gt.f32.partialorder %v4081, 0.0
      %vm4114 = vcmp.gt.f32.partialorder %v4082, 0.0
      %vm4115 = vcmp.gt.f32.partialorder %v4083, 0.0
      %vm4116 = vcmp.gt.f32.partialorder %v4084, 0.0
      %vm4117 = vcmp.gt.f32.partialorder %v4085, 0.0
      %vm4118 = vcmp.gt.f32.partialorder %v4086, 0.0
      %vm4119 = vcmp.gt.f32.partialorder %v4087, 0.0
      %vm4120 = vcmp.gt.f32.partialorder %v4088, 0.0
      %vm4121 = vcmp.gt.f32.partialorder %v4089, 0.0
      %vm4122 = vcmp.gt.f32.partialorder %v4090, 0.0
      %vm4123 = vcmp.gt.f32.partialorder %v4091, 0.0
      %vm4124 = vcmp.gt.f32.partialorder %v4092, 0.0
      %vm4125 = vcmp.gt.f32.partialorder %v4093, 0.0
      %vm4126 = vcmp.gt.f32.partialorder %v4094, 0.0
      %vm4127 = vcmp.gt.f32.partialorder %v4095, 0.0
      %vm4128 = vcmp.gt.f32.partialorder %v4096, 0.0
      %vm4129 = vcmp.gt.f32.partialorder %v4097, 0.0
      %vm4130 = vcmp.gt.f32.partialorder %v4098, 0.0
      %vm4131 = vcmp.gt.f32.partialorder %v4099, 0.0
      %vm4132 = vcmp.gt.f32.partialorder %v4100, 0.0
      %vm4133 = vcmp.gt.f32.partialorder %v4101, 0.0
      %vm4134 = vcmp.gt.f32.partialorder %v4102, 0.0
      %vm4135 = vcmp.gt.f32.partialorder %v4103, 0.0
      %vm4136 = vcmp.gt.f32.partialorder %v4104, 0.0
      %vm4137 = vcmp.gt.f32.partialorder %v4105, 0.0
      %vm4138 = vcmp.gt.f32.partialorder %v4106, 0.0
      %vm4139 = vcmp.gt.f32.partialorder %v4107, 0.0
      %vm4140 = vcmp.gt.f32.partialorder %v4108, 0.0
      %vm4141 = vcmp.gt.f32.partialorder %v4109, 0.0
      %vm4142 = vcmp.gt.f32.partialorder %v4110, 0.0
      %vm4143 = vcmp.gt.f32.partialorder %v4111, 0.0
      %vm4144 = vcmp.gt.f32.partialorder %v4112, 0.0
      %v4145 = vmul.f32 %v4081, 0.1
      %v4146 = vmul.f32 %v4082, 0.1
      %v4147 = vmul.f32 %v4083, 0.1
      %v4148 = vmul.f32 %v4084, 0.1
      %v4149 = vmul.f32 %v4085, 0.1
      %v4150 = vmul.f32 %v4086, 0.1
      %v4151 = vmul.f32 %v4087, 0.1
      %v4152 = vmul.f32 %v4088, 0.1
      %v4153 = vmul.f32 %v4089, 0.1
      %v4154 = vmul.f32 %v4090, 0.1
      %v4155 = vmul.f32 %v4091, 0.1
      %v4156 = vmul.f32 %v4092, 0.1
      %v4157 = vmul.f32 %v4093, 0.1
      %v4158 = vmul.f32 %v4094, 0.1
      %v4159 = vmul.f32 %v4095, 0.1
      %v4160 = vmul.f32 %v4096, 0.1
      %v4161 = vmul.f32 %v4097, 0.1
      %v4162 = vmul.f32 %v4098, 0.1
      %v4163 = vmul.f32 %v4099, 0.1
      %v4164 = vmul.f32 %v4100, 0.1
      %v4165 = vmul.f32 %v4101, 0.1
      %v4166 = vmul.f32 %v4102, 0.1
      %v4167 = vmul.f32 %v4103, 0.1
      %v4168 = vmul.f32 %v4104, 0.1
      %v4169 = vmul.f32 %v4105, 0.1
      %v4170 = vmul.f32 %v4106, 0.1
      %v4171 = vmul.f32 %v4107, 0.1
      %v4172 = vmul.f32 %v4108, 0.1
      %v4173 = vmul.f32 %v4109, 0.1
      %v4174 = vmul.f32 %v4110, 0.1
      %v4175 = vmul.f32 %v4111, 0.1
      %v4176 = vmul.f32 %v4112, 0.1
      %v4177 = vsel %vm4113, %v4081, %v4145
      %v4178 = vsel %vm4114, %v4082, %v4146
      %v4179 = vsel %vm4115, %v4083, %v4147
      %v4180 = vsel %vm4116, %v4084, %v4148
      %v4181 = vsel %vm4117, %v4085, %v4149
      %v4182 = vsel %vm4118, %v4086, %v4150
      %v4183 = vsel %vm4119, %v4087, %v4151
      %v4184 = vsel %vm4120, %v4088, %v4152
      %v4185 = vsel %vm4121, %v4089, %v4153
      %v4186 = vsel %vm4122, %v4090, %v4154
      %v4187 = vsel %vm4123, %v4091, %v4155
      %v4188 = vsel %vm4124, %v4092, %v4156
      %v4189 = vsel %vm4125, %v4093, %v4157
      %v4190 = vsel %vm4126, %v4094, %v4158
      %v4191 = vsel %vm4127, %v4095, %v4159
      %v4192 = vsel %vm4128, %v4096, %v4160
      %v4193 = vsel %vm4129, %v4097, %v4161
      %v4194 = vsel %vm4130, %v4098, %v4162
      %v4195 = vsel %vm4131, %v4099, %v4163
      %v4196 = vsel %vm4132, %v4100, %v4164
      %v4197 = vsel %vm4133, %v4101, %v4165
      %v4198 = vsel %vm4134, %v4102, %v4166
      %v4199 = vsel %vm4135, %v4103, %v4167
      %v4200 = vsel %vm4136, %v4104, %v4168
      %v4201 = vsel %vm4137, %v4105, %v4169
      %v4202 = vsel %vm4138, %v4106, %v4170
      %v4203 = vsel %vm4139, %v4107, %v4171
      %v4204 = vsel %vm4140, %v4108, %v4172
      %v4205 = vsel %vm4141, %v4109, %v4173
      %v4206 = vsel %vm4142, %v4110, %v4174
      %v4207 = vsel %vm4143, %v4111, %v4175
      %v4208 = vsel %vm4144, %v4112, %v4176
      %v4209 = vld [vmem:[%s3] sm:$0xff]
      %v4210 = vld [vmem:[%s4] sm:$0x1]
      %v4212 = vlaneseq
      %v4213 = vshrl.u32 %v4212, 7
      %v4214 = vsub.s32 0, %v4213
      %v4215 = vrot.slane %v4210, %v4214
      %vm4217 = vcmask 64512
      %v4219 = vsel %vm4217, %v4177, 0
      %v4222 = vsel %vm4217, %v4178, 0
      %v4225 = vsel %vm4217, %v4179, 0
      %v4228 = vsel %vm4217, %v4180, 0
      %v4231 = vsel %vm4217, %v4181, 0
      %v4234 = vsel %vm4217, %v4182, 0
      %v4237 = vsel %vm4217, %v4183, 0
      %v4240 = vsel %vm4217, %v4184, 0
      %v4243 = vsel %vm4217, %v4185, 0
      %v4246 = vsel %vm4217, %v4186, 0
      %v4249 = vsel %vm4217, %v4187, 0
      %v4252 = vsel %vm4217, %v4188, 0
      %v4255 = vsel %vm4217, %v4189, 0
      %v4258 = vsel %vm4217, %v4190, 0
      %v4261 = vsel %vm4217, %v4191, 0
      %v4264 = vsel %vm4217, %v4192, 0
      %v4267 = vsel %vm4217, %v4193, 0
      %v4270 = vsel %vm4217, %v4194, 0
      %v4273 = vsel %vm4217, %v4195, 0
      %v4276 = vsel %vm4217, %v4196, 0
      %v4279 = vsel %vm4217, %v4197, 0
      %v4282 = vsel %vm4217, %v4198, 0
      %v4285 = vsel %vm4217, %v4199, 0
      %v4288 = vsel %vm4217, %v4200, 0
      %v4291 = vsel %vm4217, %v4201, 0
      %v4294 = vsel %vm4217, %v4202, 0
      %v4297 = vsel %vm4217, %v4203, 0
      %v4300 = vsel %vm4217, %v4204, 0
      %v4303 = vsel %vm4217, %v4205, 0
      %v4306 = vsel %vm4217, %v4206, 0
      %v4309 = vsel %vm4217, %v4207, 0
      %v4312 = vsel %vm4217, %v4208, 0
      %4314 = vmatprep.subr.mxu0 0.0
      %4315 = vmatpush1.msra.mxu0 %v4209
      %4316 = vmatprep.subr.mxu0 0.0
      %4317 = vmatpush1.msra.mxu0 0.0
      %4318 = vmatprep.subr.mxu0 0.0
      %4319 = vmatpush1.msra.mxu0 0.0
      %4320 = vmatprep.subr.mxu0 0.0
      %4321 = vmatpush1.msra.mxu0 0.0
      %4322 = vmatprep.subr.mxu0 0.0
      %4323 = vmatpush1.msra.mxu0 0.0
      %4324 = vmatprep.subr.mxu0 0.0
      %4325 = vmatpush1.msra.mxu0 0.0
      %4326 = vmatprep.subr.mxu0 0.0
      %4327 = vmatpush1.msra.mxu0 0.0
      %4328 = vmatprep.subr.mxu0 0.0
      %4329 = vmatpush1.msra.mxu0 0.0
      %4330 = vmatprep.subr.mxu0 0.0
      %4331 = vmatpush1.msra.mxu0 0.0
      %4332 = vmatprep.subr.mxu0 0.0
      %4333 = vmatpush1.msra.mxu0 0.0
      %4334 = vmatprep.subr.mxu0 0.0
      %4335 = vmatpush1.msra.mxu0 0.0
      %4336 = vmatprep.subr.mxu0 0.0
      %4337 = vmatpush1.msra.mxu0 0.0
      %4338 = vmatprep.subr.mxu0 0.0
      %4339 = vmatpush1.msra.mxu0 0.0
      %4340 = vmatprep.subr.mxu0 0.0
      %4341 = vmatpush1.msra.mxu0 0.0
      %4342 = vmatprep.subr.mxu0 0.0
      %4343 = vmatpush1.msra.mxu0 0.0
      %4344 = vmatprep.subr.mxu0 0.0
      %4345 = vmatpush1.msra.mxu0 0.0
      %4346 = vmatprep.subr.mxu0 0.0
      %4347 = vmatpush1.msra.mxu0 0.0
      %4348 = vmatprep.subr.mxu0 0.0
      %4349 = vmatpush1.msra.mxu0 0.0
      %4350 = vmatprep.subr.mxu0 0.0
      %4351 = vmatpush1.msra.mxu0 0.0
      %4352 = vmatprep.subr.mxu0 0.0
      %4353 = vmatpush1.msra.mxu0 0.0
      %4354 = vmatprep.subr.mxu0 0.0
      %4355 = vmatpush1.msra.mxu0 0.0
      %4356 = vmatprep.subr.mxu0 0.0
      %4357 = vmatpush1.msra.mxu0 0.0
      %4358 = vmatprep.subr.mxu0 0.0
      %4359 = vmatpush1.msra.mxu0 0.0
      %4360 = vmatprep.subr.mxu0 0.0
      %4361 = vmatpush1.msra.mxu0 0.0
      %4362 = vmatprep.subr.mxu0 0.0
      %4363 = vmatpush1.msra.mxu0 0.0
      %4364 = vmatprep.subr.mxu0 0.0
      %4365 = vmatpush1.msra.mxu0 0.0
      %4366 = vmatprep.subr.mxu0 0.0
      %4367 = vmatpush1.msra.mxu0 0.0
      %4368 = vmatprep.subr.mxu0 0.0
      %4369 = vmatpush1.msra.mxu0 0.0
      %4370 = vmatprep.subr.mxu0 0.0
      %4371 = vmatpush1.msra.mxu0 0.0
      %4372 = vmatprep.subr.mxu0 0.0
      %4373 = vmatpush1.msra.mxu0 0.0
      %4374 = vmatprep.subr.mxu0 0.0
      %4375 = vmatpush1.msra.mxu0 0.0
      %4376 = vmatprep.subr.mxu0 0.0
      %4377 = vmatpush1.msra.mxu0 0.0
      %4378 = vmatprep.mubr.f32.mxu0 0.0
      %4379 = vmatmul.mubr.f32.gmra.mrb[0].mxu0 %v4219
      %v4380 = vpop.f32.mrb[0].mxu0
      %v4381 = vadd.f32 %v4215, %v4380
      %v4382 = vpop.f32.mrb[0].mxu0
      %4383 = vmatprep.mubr.f32.mxu0 0.0
      %4384 = vmatmul.mubr.f32.gmra.mrb[0].mxu0 %v4222
      %v4385 = vpop.f32.mrb[0].mxu0
      %v4386 = vadd.f32 %v4215, %v4385
      %v4387 = vpop.f32.mrb[0].mxu0
      %4388 = vmatprep.mubr.f32.mxu0 0.0
      %4389 = vmatmul.mubr.f32.gmra.mrb[0].mxu0 %v4225
      %v4390 = vpop.f32.mrb[0].mxu0
      %v4391 = vadd.f32 %v4215, %v4390
      %v4392 = vpop.f32.mrb[0].mxu0
      %4393 = vmatprep.mubr.f32.mxu0 0.0
      %4394 = vmatmul.mubr.f32.gmra.mrb[0].mxu0 %v4228
      %v4395 = vpop.f32.mrb[0].mxu0
      %v4396 = vadd.f32 %v4215, %v4395
      %v4397 = vpop.f32.mrb[0].mxu0
      %4398 = vmatprep.mubr.f32.mxu0 0.0
      %4399 = vmatmul.mubr.f32.gmra.mrb[0].mxu0 %v4231
      %v4400 = vpop.f32.mrb[0].mxu0
      %v4401 = vadd.f32 %v4215, %v4400
      %v4402 = vpop.f32.mrb[0].mxu0
      %4403 = vmatprep.mubr.f32.mxu0 0.0
      %4404 = vmatmul.mubr.f32.gmra.mrb[0].mxu0 %v4234
      %v4405 = vpop.f32.mrb[0].mxu0
      %v4406 = vadd.f32 %v4215, %v4405
      %v4407 = vpop.f32.mrb[0].mxu0
      %4408 = vmatprep.mubr.f32.mxu0 0.0
      %4409 = vmatmul.mubr.f32.gmra.mrb[0].mxu0 %v4237
      %v4410 = vpop.f32.mrb[0].mxu0
      %v4411 = vadd.f32 %v4215, %v4410
      %v4412 = vpop.f32.mrb[0].mxu0
      %4413 = vmatprep.mubr.f32.mxu0 0.0
      %4414 = vmatmul.mubr.f32.gmra.mrb[0].mxu0 %v4240
      %v4415 = vpop.f32.mrb[0].mxu0
      %v4416 = vadd.f32 %v4215, %v4415
      %v4417 = vpop.f32.mrb[0].mxu0
      %4418 = vmatprep.mubr.f32.mxu0 0.0
      %4419 = vmatmul.mubr.f32.gmra.mrb[0].mxu0 %v4243
      %v4420 = vpop.f32.mrb[0].mxu0
      %v4421 = vadd.f32 %v4215, %v4420
      %v4422 = vpop.f32.mrb[0].mxu0
      %4423 = vmatprep.mubr.f32.mxu0 0.0
      %4424 = vmatmul.mubr.f32.gmra.mrb[0].mxu0 %v4246
      %v4425 = vpop.f32.mrb[0].mxu0
      %v4426 = vadd.f32 %v4215, %v4425
      %v4427 = vpop.f32.mrb[0].mxu0
      %4428 = vmatprep.mubr.f32.mxu0 0.0
      %4429 = vmatmul.mubr.f32.gmra.mrb[0].mxu0 %v4249
      %v4430 = vpop.f32.mrb[0].mxu0
      %v4431 = vadd.f32 %v4215, %v4430
      %v4432 = vpop.f32.mrb[0].mxu0
      %4433 = vmatprep.mubr.f32.mxu0 0.0
      %4434 = vmatmul.mubr.f32.gmra.mrb[0].mxu0 %v4252
      %v4435 = vpop.f32.mrb[0].mxu0
      %v4436 = vadd.f32 %v4215, %v4435
      %v4437 = vpop.f32.mrb[0].mxu0
      %4438 = vmatprep.mubr.f32.mxu0 0.0
      %4439 = vmatmul.mubr.f32.gmra.mrb[0].mxu0 %v4255
      %v4440 = vpop.f32.mrb[0].mxu0
      %v4441 = vadd.f32 %v4215, %v4440
      %v4442 = vpop.f32.mrb[0].mxu0
      %4443 = vmatprep.mubr.f32.mxu0 0.0
      %4444 = vmatmul.mubr.f32.gmra.mrb[0].mxu0 %v4258
      %v4445 = vpop.f32.mrb[0].mxu0
      %v4446 = vadd.f32 %v4215, %v4445
      %v4447 = vpop.f32.mrb[0].mxu0
      %4448 = vmatprep.mubr.f32.mxu0 0.0
      %4449 = vmatmul.mubr.f32.gmra.mrb[0].mxu0 %v4261
      %v4450 = vpop.f32.mrb[0].mxu0
      %v4451 = vadd.f32 %v4215, %v4450
      %v4452 = vpop.f32.mrb[0].mxu0
      %4453 = vmatprep.mubr.f32.mxu0 0.0
      %4454 = vmatmul.mubr.f32.gmra.mrb[0].mxu0 %v4264
      %v4455 = vpop.f32.mrb[0].mxu0
      %v4456 = vadd.f32 %v4215, %v4455
      %v4457 = vpop.f32.mrb[0].mxu0
      %4458 = vmatprep.mubr.f32.mxu0 0.0
      %4459 = vmatmul.mubr.f32.gmra.mrb[0].mxu0 %v4267
      %v4460 = vpop.f32.mrb[0].mxu0
      %v4461 = vadd.f32 %v4215, %v4460
      %v4462 = vpop.f32.mrb[0].mxu0
      %4463 = vmatprep.mubr.f32.mxu0 0.0
      %4464 = vmatmul.mubr.f32.gmra.mrb[0].mxu0 %v4270
      %v4465 = vpop.f32.mrb[0].mxu0
      %v4466 = vadd.f32 %v4215, %v4465
      %v4467 = vpop.f32.mrb[0].mxu0
      %4468 = vmatprep.mubr.f32.mxu0 0.0
      %4469 = vmatmul.mubr.f32.gmra.mrb[0].mxu0 %v4273
      %v4470 = vpop.f32.mrb[0].mxu0
      %v4471 = vadd.f32 %v4215, %v4470
      %v4472 = vpop.f32.mrb[0].mxu0
      %4473 = vmatprep.mubr.f32.mxu0 0.0
      %4474 = vmatmul.mubr.f32.gmra.mrb[0].mxu0 %v4276
      %v4475 = vpop.f32.mrb[0].mxu0
      %v4476 = vadd.f32 %v4215, %v4475
      %v4477 = vpop.f32.mrb[0].mxu0
      %4478 = vmatprep.mubr.f32.mxu0 0.0
      %4479 = vmatmul.mubr.f32.gmra.mrb[0].mxu0 %v4279
      %v4480 = vpop.f32.mrb[0].mxu0
      %v4481 = vadd.f32 %v4215, %v4480
      %v4482 = vpop.f32.mrb[0].mxu0
      %4483 = vmatprep.mubr.f32.mxu0 0.0
      %4484 = vmatmul.mubr.f32.gmra.mrb[0].mxu0 %v4282
      %v4485 = vpop.f32.mrb[0].mxu0
      %v4486 = vadd.f32 %v4215, %v4485
      %v4487 = vpop.f32.mrb[0].mxu0
      %4488 = vmatprep.mubr.f32.mxu0 0.0
      %4489 = vmatmul.mubr.f32.gmra.mrb[0].mxu0 %v4285
      %v4490 = vpop.f32.mrb[0].mxu0
      %v4491 = vadd.f32 %v4215, %v4490
      %v4492 = vpop.f32.mrb[0].mxu0
      %4493 = vmatprep.mubr.f32.mxu0 0.0
      %4494 = vmatmul.mubr.f32.gmra.mrb[0].mxu0 %v4288
      %v4495 = vpop.f32.mrb[0].mxu0
      %v4496 = vadd.f32 %v4215, %v4495
      %v4497 = vpop.f32.mrb[0].mxu0
      %4498 = vmatprep.mubr.f32.mxu0 0.0
      %4499 = vmatmul.mubr.f32.gmra.mrb[0].mxu0 %v4291
      %v4500 = vpop.f32.mrb[0].mxu0
      %v4501 = vadd.f32 %v4215, %v4500
      %v4502 = vpop.f32.mrb[0].mxu0
      %4503 = vmatprep.mubr.f32.mxu0 0.0
      %4504 = vmatmul.mubr.f32.gmra.mrb[0].mxu0 %v4294
      %v4505 = vpop.f32.mrb[0].mxu0
      %v4506 = vadd.f32 %v4215, %v4505
      %v4507 = vpop.f32.mrb[0].mxu0
      %4508 = vmatprep.mubr.f32.mxu0 0.0
      %4509 = vmatmul.mubr.f32.gmra.mrb[0].mxu0 %v4297
      %v4510 = vpop.f32.mrb[0].mxu0
      %v4511 = vadd.f32 %v4215, %v4510
      %v4512 = vpop.f32.mrb[0].mxu0
      %4513 = vmatprep.mubr.f32.mxu0 0.0
      %4514 = vmatmul.mubr.f32.gmra.mrb[0].mxu0 %v4300
      %v4515 = vpop.f32.mrb[0].mxu0
      %v4516 = vadd.f32 %v4215, %v4515
      %v4517 = vpop.f32.mrb[0].mxu0
      %4518 = vmatprep.mubr.f32.mxu0 0.0
      %4519 = vmatmul.mubr.f32.gmra.mrb[0].mxu0 %v4303
      %v4520 = vpop.f32.mrb[0].mxu0
      %v4521 = vadd.f32 %v4215, %v4520
      %v4522 = vpop.f32.mrb[0].mxu0
      %4523 = vmatprep.mubr.f32.mxu0 0.0
      %4524 = vmatmul.mubr.f32.gmra.mrb[0].mxu0 %v4306
      %v4525 = vpop.f32.mrb[0].mxu0
      %v4526 = vadd.f32 %v4215, %v4525
      %v4527 = vpop.f32.mrb[0].mxu0
      %4528 = vmatprep.mubr.f32.mxu0 0.0
      %4529 = vmatmul.mubr.f32.gmra.mrb[0].mxu0 %v4309
      %v4530 = vpop.f32.mrb[0].mxu0
      %v4531 = vadd.f32 %v4215, %v4530
      %v4532 = vpop.f32.mrb[0].mxu0
      %4533 = vmatprep.mubr.f32.mxu0 0.0
      %4534 = vmatmul.mubr.f32.gmra.mrb[0].mxu0 %v4312
      %v4535 = vpop.f32.mrb[0].mxu0
      %v4536 = vadd.f32 %v4215, %v4535
      %v4537 = vpop.f32.mrb[0].mxu0
      %4538 = vdwg.mxu0
      %vm4539 = vcmp.gt.f32.partialorder %v4381, 0.0
      %vm4540 = vcmp.gt.f32.partialorder %v4386, 0.0
      %vm4541 = vcmp.gt.f32.partialorder %v4391, 0.0
      %vm4542 = vcmp.gt.f32.partialorder %v4396, 0.0
      %vm4543 = vcmp.gt.f32.partialorder %v4401, 0.0
      %vm4544 = vcmp.gt.f32.partialorder %v4406, 0.0
      %vm4545 = vcmp.gt.f32.partialorder %v4411, 0.0
      %vm4546 = vcmp.gt.f32.partialorder %v4416, 0.0
      %vm4547 = vcmp.gt.f32.partialorder %v4421, 0.0
      %vm4548 = vcmp.gt.f32.partialorder %v4426, 0.0
      %vm4549 = vcmp.gt.f32.partialorder %v4431, 0.0
      %vm4550 = vcmp.gt.f32.partialorder %v4436, 0.0
      %vm4551 = vcmp.gt.f32.partialorder %v4441, 0.0
      %vm4552 = vcmp.gt.f32.partialorder %v4446, 0.0
      %vm4553 = vcmp.gt.f32.partialorder %v4451, 0.0
      %vm4554 = vcmp.gt.f32.partialorder %v4456, 0.0
      %vm4555 = vcmp.gt.f32.partialorder %v4461, 0.0
      %vm4556 = vcmp.gt.f32.partialorder %v4466, 0.0
      %vm4557 = vcmp.gt.f32.partialorder %v4471, 0.0
      %vm4558 = vcmp.gt.f32.partialorder %v4476, 0.0
      %vm4559 = vcmp.gt.f32.partialorder %v4481, 0.0
      %vm4560 = vcmp.gt.f32.partialorder %v4486, 0.0
      %vm4561 = vcmp.gt.f32.partialorder %v4491, 0.0
      %vm4562 = vcmp.gt.f32.partialorder %v4496, 0.0
      %vm4563 = vcmp.gt.f32.partialorder %v4501, 0.0
      %vm4564 = vcmp.gt.f32.partialorder %v4506, 0.0
      %vm4565 = vcmp.gt.f32.partialorder %v4511, 0.0
      %vm4566 = vcmp.gt.f32.partialorder %v4516, 0.0
      %vm4567 = vcmp.gt.f32.partialorder %v4521, 0.0
      %vm4568 = vcmp.gt.f32.partialorder %v4526, 0.0
      %vm4569 = vcmp.gt.f32.partialorder %v4531, 0.0
      %vm4570 = vcmp.gt.f32.partialorder %v4536, 0.0
      %v4571 = vmul.f32 %v4381, 0.1
      %v4572 = vmul.f32 %v4386, 0.1
      %v4573 = vmul.f32 %v4391, 0.1
      %v4574 = vmul.f32 %v4396, 0.1
      %v4575 = vmul.f32 %v4401, 0.1
      %v4576 = vmul.f32 %v4406, 0.1
      %v4577 = vmul.f32 %v4411, 0.1
      %v4578 = vmul.f32 %v4416, 0.1
      %v4579 = vmul.f32 %v4421, 0.1
      %v4580 = vmul.f32 %v4426, 0.1
      %v4581 = vmul.f32 %v4431, 0.1
      %v4582 = vmul.f32 %v4436, 0.1
      %v4583 = vmul.f32 %v4441, 0.1
      %v4584 = vmul.f32 %v4446, 0.1
      %v4585 = vmul.f32 %v4451, 0.1
      %v4586 = vmul.f32 %v4456, 0.1
      %v4587 = vmul.f32 %v4461, 0.1
      %v4588 = vmul.f32 %v4466, 0.1
      %v4589 = vmul.f32 %v4471, 0.1
      %v4590 = vmul.f32 %v4476, 0.1
      %v4591 = vmul.f32 %v4481, 0.1
      %v4592 = vmul.f32 %v4486, 0.1
      %v4593 = vmul.f32 %v4491, 0.1
      %v4594 = vmul.f32 %v4496, 0.1
      %v4595 = vmul.f32 %v4501, 0.1
      %v4596 = vmul.f32 %v4506, 0.1
      %v4597 = vmul.f32 %v4511, 0.1
      %v4598 = vmul.f32 %v4516, 0.1
      %v4599 = vmul.f32 %v4521, 0.1
      %v4600 = vmul.f32 %v4526, 0.1
      %v4601 = vmul.f32 %v4531, 0.1
      %v4602 = vmul.f32 %v4536, 0.1
      %v4603 = vsel %vm4539, %v4381, %v4571
      %v4604 = vsel %vm4540, %v4386, %v4572
      %v4605 = vsel %vm4541, %v4391, %v4573
      %v4606 = vsel %vm4542, %v4396, %v4574
      %v4607 = vsel %vm4543, %v4401, %v4575
      %v4608 = vsel %vm4544, %v4406, %v4576
      %v4609 = vsel %vm4545, %v4411, %v4577
      %v4610 = vsel %vm4546, %v4416, %v4578
      %v4611 = vsel %vm4547, %v4421, %v4579
      %v4612 = vsel %vm4548, %v4426, %v4580
      %v4613 = vsel %vm4549, %v4431, %v4581
      %v4614 = vsel %vm4550, %v4436, %v4582
      %v4615 = vsel %vm4551, %v4441, %v4583
      %v4616 = vsel %vm4552, %v4446, %v4584
      %v4617 = vsel %vm4553, %v4451, %v4585
      %v4618 = vsel %vm4554, %v4456, %v4586
      %v4619 = vsel %vm4555, %v4461, %v4587
      %v4620 = vsel %vm4556, %v4466, %v4588
      %v4621 = vsel %vm4557, %v4471, %v4589
      %v4622 = vsel %vm4558, %v4476, %v4590
      %v4623 = vsel %vm4559, %v4481, %v4591
      %v4624 = vsel %vm4560, %v4486, %v4592
      %v4625 = vsel %vm4561, %v4491, %v4593
      %v4626 = vsel %vm4562, %v4496, %v4594
      %v4627 = vsel %vm4563, %v4501, %v4595
      %v4628 = vsel %vm4564, %v4506, %v4596
      %v4629 = vsel %vm4565, %v4511, %v4597
      %v4630 = vsel %vm4566, %v4516, %v4598
      %v4631 = vsel %vm4567, %v4521, %v4599
      %v4632 = vsel %vm4568, %v4526, %v4600
      %v4633 = vsel %vm4569, %v4531, %v4601
      %v4634 = vsel %vm4570, %v4536, %v4602
      %4635 = vst.msk [vmem:[%s224] sm:$0xff] %vm4217, %v4603
      %4636 = vst.msk [vmem:[%s224 + $0x8] sm:$0xff] %vm4217, %v4604
      %4637 = vst.msk [vmem:[%s224 + $0x10] sm:$0xff] %vm4217, %v4605
      %4638 = vst.msk [vmem:[%s224 + $0x18] sm:$0xff] %vm4217, %v4606
      %4639 = vst.msk [vmem:[%s224 + $0x20] sm:$0xff] %vm4217, %v4607
      %4640 = vst.msk [vmem:[%s224 + $0x28] sm:$0xff] %vm4217, %v4608
      %4641 = vst.msk [vmem:[%s224 + $0x30] sm:$0xff] %vm4217, %v4609
      %4642 = vst.msk [vmem:[%s224 + $0x38] sm:$0xff] %vm4217, %v4610
      %4643 = vst.msk [vmem:[%s224 + $0x40] sm:$0xff] %vm4217, %v4611
      %4644 = vst.msk [vmem:[%s224 + $0x48] sm:$0xff] %vm4217, %v4612
      %4645 = vst.msk [vmem:[%s224 + $0x50] sm:$0xff] %vm4217, %v4613
      %4646 = vst.msk [vmem:[%s224 + $0x58] sm:$0xff] %vm4217, %v4614
      %4647 = vst.msk [vmem:[%s224 + $0x60] sm:$0xff] %vm4217, %v4615
      %4648 = vst.msk [vmem:[%s224 + $0x68] sm:$0xff] %vm4217, %v4616
      %4649 = vst.msk [vmem:[%s224 + $0x70] sm:$0xff] %vm4217, %v4617
      %4650 = vst.msk [vmem:[%s224 + $0x78] sm:$0xff] %vm4217, %v4618
      %4651 = vst.msk [vmem:[%s224 + $0x80] sm:$0xff] %vm4217, %v4619
      %4652 = vst.msk [vmem:[%s224 + $0x88] sm:$0xff] %vm4217, %v4620
      %4653 = vst.msk [vmem:[%s224 + $0x90] sm:$0xff] %vm4217, %v4621
      %4654 = vst.msk [vmem:[%s224 + $0x98] sm:$0xff] %vm4217, %v4622
      %4655 = vst.msk [vmem:[%s224 + $0xa0] sm:$0xff] %vm4217, %v4623
      %4656 = vst.msk [vmem:[%s224 + $0xa8] sm:$0xff] %vm4217, %v4624
      %4657 = vst.msk [vmem:[%s224 + $0xb0] sm:$0xff] %vm4217, %v4625
      %4658 = vst.msk [vmem:[%s224 + $0xb8] sm:$0xff] %vm4217, %v4626
      %4659 = vst.msk [vmem:[%s224 + $0xc0] sm:$0xff] %vm4217, %v4627
      %4660 = vst.msk [vmem:[%s224 + $0xc8] sm:$0xff] %vm4217, %v4628
      %4661 = vst.msk [vmem:[%s224 + $0xd0] sm:$0xff] %vm4217, %v4629
      %4662 = vst.msk [vmem:[%s224 + $0xd8] sm:$0xff] %vm4217, %v4630
      %4663 = vst.msk [vmem:[%s224 + $0xe0] sm:$0xff] %vm4217, %v4631
      %4664 = vst.msk [vmem:[%s224 + $0xe8] sm:$0xff] %vm4217, %v4632
      %4665 = vst.msk [vmem:[%s224 + $0xf0] sm:$0xff] %vm4217, %v4633
      %4666 = vst.msk [vmem:[%s224 + $0xf8] sm:$0xff] %vm4217, %v4634
      %4699 = vrot.lane.b32.xlu0 %v4603, 120
      %v4700 = vpop.permute.xlu0 %4699
      %4701 = vrot.lane.b32.xlu0 %v4604, 120
      %v4702 = vpop.permute.xlu0 %4701
      %4703 = vrot.lane.b32.xlu0 %v4605, 120
      %v4704 = vpop.permute.xlu0 %4703
      %4705 = vrot.lane.b32.xlu0 %v4606, 120
      %v4706 = vpop.permute.xlu0 %4705
      %4707 = vrot.lane.b32.xlu0 %v4607, 120
      %v4708 = vpop.permute.xlu0 %4707
      %4709 = vrot.lane.b32.xlu0 %v4608, 120
      %v4710 = vpop.permute.xlu0 %4709
      %4711 = vrot.lane.b32.xlu0 %v4609, 120
      %v4712 = vpop.permute.xlu0 %4711
      %4713 = vrot.lane.b32.xlu0 %v4610, 120
      %v4714 = vpop.permute.xlu0 %4713
      %4715 = vrot.lane.b32.xlu0 %v4611, 120
      %v4716 = vpop.permute.xlu0 %4715
      %4717 = vrot.lane.b32.xlu0 %v4612, 120
      %v4718 = vpop.permute.xlu0 %4717
      %4719 = vrot.lane.b32.xlu0 %v4613, 120
      %v4720 = vpop.permute.xlu0 %4719
      %4721 = vrot.lane.b32.xlu0 %v4614, 120
      %v4722 = vpop.permute.xlu0 %4721
      %4723 = vrot.lane.b32.xlu0 %v4615, 120
      %v4724 = vpop.permute.xlu0 %4723
      %4725 = vrot.lane.b32.xlu0 %v4616, 120
      %v4726 = vpop.permute.xlu0 %4725
      %4727 = vrot.lane.b32.xlu0 %v4617, 120
      %v4728 = vpop.permute.xlu0 %4727
      %4729 = vrot.lane.b32.xlu0 %v4618, 120
      %v4730 = vpop.permute.xlu0 %4729
      %4731 = vrot.lane.b32.xlu0 %v4619, 120
      %v4732 = vpop.permute.xlu0 %4731
      %4733 = vrot.lane.b32.xlu0 %v4620, 120
      %v4734 = vpop.permute.xlu0 %4733
      %4735 = vrot.lane.b32.xlu0 %v4621, 120
      %v4736 = vpop.permute.xlu0 %4735
      %4737 = vrot.lane.b32.xlu0 %v4622, 120
      %v4738 = vpop.permute.xlu0 %4737
      %4739 = vrot.lane.b32.xlu0 %v4623, 120
      %v4740 = vpop.permute.xlu0 %4739
      %4741 = vrot.lane.b32.xlu0 %v4624, 120
      %v4742 = vpop.permute.xlu0 %4741
      %4743 = vrot.lane.b32.xlu0 %v4625, 120
      %v4744 = vpop.permute.xlu0 %4743
      %4745 = vrot.lane.b32.xlu0 %v4626, 120
      %v4746 = vpop.permute.xlu0 %4745
      %4747 = vrot.lane.b32.xlu0 %v4627, 120
      %v4748 = vpop.permute.xlu0 %4747
      %4749 = vrot.lane.b32.xlu0 %v4628, 120
      %v4750 = vpop.permute.xlu0 %4749
      %4751 = vrot.lane.b32.xlu0 %v4629, 120
      %v4752 = vpop.permute.xlu0 %4751
      %4753 = vrot.lane.b32.xlu0 %v4630, 120
      %v4754 = vpop.permute.xlu0 %4753
      %4755 = vrot.lane.b32.xlu0 %v4631, 120
      %v4756 = vpop.permute.xlu0 %4755
      %4757 = vrot.lane.b32.xlu0 %v4632, 120
      %v4758 = vpop.permute.xlu0 %4757
      %4759 = vrot.lane.b32.xlu0 %v4633, 120
      %v4760 = vpop.permute.xlu0 %4759
      %4761 = vrot.lane.b32.xlu0 %v4634, 120
      %v4762 = vpop.permute.xlu0 %4761
      %s4795 = scalar_lea.vmem %s224, 256
      %4796 = vst.msk [vmem:[%s4795] sm:$0xff] %vm4217, %v4700
      %4797 = vst.msk [vmem:[%s4795 + $0x8] sm:$0xff] %vm4217, %v4702
      %4798 = vst.msk [vmem:[%s4795 + $0x10] sm:$0xff] %vm4217, %v4704
      %4799 = vst.msk [vmem:[%s4795 + $0x18] sm:$0xff] %vm4217, %v4706
      %4800 = vst.msk [vmem:[%s4795 + $0x20] sm:$0xff] %vm4217, %v4708
      %4801 = vst.msk [vmem:[%s4795 + $0x28] sm:$0xff] %vm4217, %v4710
      %4802 = vst.msk [vmem:[%s4795 + $0x30] sm:$0xff] %vm4217, %v4712
      %4803 = vst.msk [vmem:[%s4795 + $0x38] sm:$0xff] %vm4217, %v4714
      %4804 = vst.msk [vmem:[%s4795 + $0x40] sm:$0xff] %vm4217, %v4716
      %4805 = vst.msk [vmem:[%s4795 + $0x48] sm:$0xff] %vm4217, %v4718
      %4806 = vst.msk [vmem:[%s4795 + $0x50] sm:$0xff] %vm4217, %v4720
      %4807 = vst.msk [vmem:[%s4795 + $0x58] sm:$0xff] %vm4217, %v4722
      %4808 = vst.msk [vmem:[%s4795 + $0x60] sm:$0xff] %vm4217, %v4724
      %4809 = vst.msk [vmem:[%s4795 + $0x68] sm:$0xff] %vm4217, %v4726
      %4810 = vst.msk [vmem:[%s4795 + $0x70] sm:$0xff] %vm4217, %v4728
      %4811 = vst.msk [vmem:[%s4795 + $0x78] sm:$0xff] %vm4217, %v4730
      %4812 = vst.msk [vmem:[%s4795 + $0x80] sm:$0xff] %vm4217, %v4732
      %4813 = vst.msk [vmem:[%s4795 + $0x88] sm:$0xff] %vm4217, %v4734
      %4814 = vst.msk [vmem:[%s4795 + $0x90] sm:$0xff] %vm4217, %v4736
      %4815 = vst.msk [vmem:[%s4795 + $0x98] sm:$0xff] %vm4217, %v4738
      %4816 = vst.msk [vmem:[%s4795 + $0xa0] sm:$0xff] %vm4217, %v4740
      %4817 = vst.msk [vmem:[%s4795 + $0xa8] sm:$0xff] %vm4217, %v4742
      %4818 = vst.msk [vmem:[%s4795 + $0xb0] sm:$0xff] %vm4217, %v4744
      %4819 = vst.msk [vmem:[%s4795 + $0xb8] sm:$0xff] %vm4217, %v4746
      %4820 = vst.msk [vmem:[%s4795 + $0xc0] sm:$0xff] %vm4217, %v4748
      %4821 = vst.msk [vmem:[%s4795 + $0xc8] sm:$0xff] %vm4217, %v4750
      %4822 = vst.msk [vmem:[%s4795 + $0xd0] sm:$0xff] %vm4217, %v4752
      %4823 = vst.msk [vmem:[%s4795 + $0xd8] sm:$0xff] %vm4217, %v4754
      %4824 = vst.msk [vmem:[%s4795 + $0xe0] sm:$0xff] %vm4217, %v4756
      %4825 = vst.msk [vmem:[%s4795 + $0xe8] sm:$0xff] %vm4217, %v4758
      %4826 = vst.msk [vmem:[%s4795 + $0xf0] sm:$0xff] %vm4217, %v4760
      %4827 = vst.msk [vmem:[%s4795 + $0xf8] sm:$0xff] %vm4217, %v4762
      %4828 = vrot.lane.b32.xlu0 %v4603, 112
      %v4829 = vpop.permute.xlu0 %4828
      %4830 = vrot.lane.b32.xlu0 %v4604, 112
      %v4831 = vpop.permute.xlu0 %4830
      %4832 = vrot.lane.b32.xlu0 %v4605, 112
      %v4833 = vpop.permute.xlu0 %4832
      %4834 = vrot.lane.b32.xlu0 %v4606, 112
      %v4835 = vpop.permute.xlu0 %4834
      %4836 = vrot.lane.b32.xlu0 %v4607, 112
      %v4837 = vpop.permute.xlu0 %4836
      %4838 = vrot.lane.b32.xlu0 %v4608, 112
      %v4839 = vpop.permute.xlu0 %4838
      %4840 = vrot.lane.b32.xlu0 %v4609, 112
      %v4841 = vpop.permute.xlu0 %4840
      %4842 = vrot.lane.b32.xlu0 %v4610, 112
      %v4843 = vpop.permute.xlu0 %4842
      %4844 = vrot.lane.b32.xlu0 %v4611, 112
      %v4845 = vpop.permute.xlu0 %4844
      %4846 = vrot.lane.b32.xlu0 %v4612, 112
      %v4847 = vpop.permute.xlu0 %4846
      %4848 = vrot.lane.b32.xlu0 %v4613, 112
      %v4849 = vpop.permute.xlu0 %4848
      %4850 = vrot.lane.b32.xlu0 %v4614, 112
      %v4851 = vpop.permute.xlu0 %4850
      %4852 = vrot.lane.b32.xlu0 %v4615, 112
      %v4853 = vpop.permute.xlu0 %4852
      %4854 = vrot.lane.b32.xlu0 %v4616, 112
      %v4855 = vpop.permute.xlu0 %4854
      %4856 = vrot.lane.b32.xlu0 %v4617, 112
      %v4857 = vpop.permute.xlu0 %4856
      %4858 = vrot.lane.b32.xlu0 %v4618, 112
      %v4859 = vpop.permute.xlu0 %4858
      %4860 = vrot.lane.b32.xlu0 %v4619, 112
      %v4861 = vpop.permute.xlu0 %4860
      %4862 = vrot.lane.b32.xlu0 %v4620, 112
      %v4863 = vpop.permute.xlu0 %4862
      %4864 = vrot.lane.b32.xlu0 %v4621, 112
      %v4865 = vpop.permute.xlu0 %4864
      %4866 = vrot.lane.b32.xlu0 %v4622, 112
      %v4867 = vpop.permute.xlu0 %4866
      %4868 = vrot.lane.b32.xlu0 %v4623, 112
      %v4869 = vpop.permute.xlu0 %4868
      %4870 = vrot.lane.b32.xlu0 %v4624, 112
      %v4871 = vpop.permute.xlu0 %4870
      %4872 = vrot.lane.b32.xlu0 %v4625, 112
      %v4873 = vpop.permute.xlu0 %4872
      %4874 = vrot.lane.b32.xlu0 %v4626, 112
      %v4875 = vpop.permute.xlu0 %4874
      %4876 = vrot.lane.b32.xlu0 %v4627, 112
      %v4877 = vpop.permute.xlu0 %4876
      %4878 = vrot.lane.b32.xlu0 %v4628, 112
      %v4879 = vpop.permute.xlu0 %4878
      %4880 = vrot.lane.b32.xlu0 %v4629, 112
      %v4881 = vpop.permute.xlu0 %4880
      %4882 = vrot.lane.b32.xlu0 %v4630, 112
      %v4883 = vpop.permute.xlu0 %4882
      %4884 = vrot.lane.b32.xlu0 %v4631, 112
      %v4885 = vpop.permute.xlu0 %4884
      %4886 = vrot.lane.b32.xlu0 %v4632, 112
      %v4887 = vpop.permute.xlu0 %4886
      %4888 = vrot.lane.b32.xlu0 %v4633, 112
      %v4889 = vpop.permute.xlu0 %4888
      %4890 = vrot.lane.b32.xlu0 %v4634, 112
      %v4891 = vpop.permute.xlu0 %4890
      %s4924 = scalar_lea.vmem %s224, 512
      %4925 = vst.msk [vmem:[%s4924] sm:$0xff] %vm4217, %v4829
      %4926 = vst.msk [vmem:[%s4924 + $0x8] sm:$0xff] %vm4217, %v4831
      %4927 = vst.msk [vmem:[%s4924 + $0x10] sm:$0xff] %vm4217, %v4833
      %4928 = vst.msk [vmem:[%s4924 + $0x18] sm:$0xff] %vm4217, %v4835
      %4929 = vst.msk [vmem:[%s4924 + $0x20] sm:$0xff] %vm4217, %v4837
      %4930 = vst.msk [vmem:[%s4924 + $0x28] sm:$0xff] %vm4217, %v4839
      %4931 = vst.msk [vmem:[%s4924 + $0x30] sm:$0xff] %vm4217, %v4841
      %4932 = vst.msk [vmem:[%s4924 + $0x38] sm:$0xff] %vm4217, %v4843
      %4933 = vst.msk [vmem:[%s4924 + $0x40] sm:$0xff] %vm4217, %v4845
      %4934 = vst.msk [vmem:[%s4924 + $0x48] sm:$0xff] %vm4217, %v4847
      %4935 = vst.msk [vmem:[%s4924 + $0x50] sm:$0xff] %vm4217, %v4849
      %4936 = vst.msk [vmem:[%s4924 + $0x58] sm:$0xff] %vm4217, %v4851
      %4937 = vst.msk [vmem:[%s4924 + $0x60] sm:$0xff] %vm4217, %v4853
      %4938 = vst.msk [vmem:[%s4924 + $0x68] sm:$0xff] %vm4217, %v4855
      %4939 = vst.msk [vmem:[%s4924 + $0x70] sm:$0xff] %vm4217, %v4857
      %4940 = vst.msk [vmem:[%s4924 + $0x78] sm:$0xff] %vm4217, %v4859
      %4941 = vst.msk [vmem:[%s4924 + $0x80] sm:$0xff] %vm4217, %v4861
      %4942 = vst.msk [vmem:[%s4924 + $0x88] sm:$0xff] %vm4217, %v4863
      %4943 = vst.msk [vmem:[%s4924 + $0x90] sm:$0xff] %vm4217, %v4865
      %4944 = vst.msk [vmem:[%s4924 + $0x98] sm:$0xff] %vm4217, %v4867
      %4945 = vst.msk [vmem:[%s4924 + $0xa0] sm:$0xff] %vm4217, %v4869
      %4946 = vst.msk [vmem:[%s4924 + $0xa8] sm:$0xff] %vm4217, %v4871
      %4947 = vst.msk [vmem:[%s4924 + $0xb0] sm:$0xff] %vm4217, %v4873
      %4948 = vst.msk [vmem:[%s4924 + $0xb8] sm:$0xff] %vm4217, %v4875
      %4949 = vst.msk [vmem:[%s4924 + $0xc0] sm:$0xff] %vm4217, %v4877
      %4950 = vst.msk [vmem:[%s4924 + $0xc8] sm:$0xff] %vm4217, %v4879
      %4951 = vst.msk [vmem:[%s4924 + $0xd0] sm:$0xff] %vm4217, %v4881
      %4952 = vst.msk [vmem:[%s4924 + $0xd8] sm:$0xff] %vm4217, %v4883
      %4953 = vst.msk [vmem:[%s4924 + $0xe0] sm:$0xff] %vm4217, %v4885
      %4954 = vst.msk [vmem:[%s4924 + $0xe8] sm:$0xff] %vm4217, %v4887
      %4955 = vst.msk [vmem:[%s4924 + $0xf0] sm:$0xff] %vm4217, %v4889
      %4956 = vst.msk [vmem:[%s4924 + $0xf8] sm:$0xff] %vm4217, %v4891
      %p4957 = scmp.lt.s32.totalorder %s16, 1
      %s4958 = scalar_select %p4957, %s16, 1
      %s4959 = smul.addr %s4958, 96
      %s4960 = smul.addr %s4959, 8
      %s4961 = scalar_lea.vmem %s5, %s4960
      // Predicated region
      $region41: #{tpu_custom_call.1} parent=39 // pred_check
        %p4962 = pneg %p144
      $region42: #{tpu_custom_call.1} parent=39 // pred_check_branch
        %4964 = sbr.rel (%p4962) target = $region44
      $region43: #{tpu_custom_call.1} parent=39 // pred_region
        _
      $region44: #{tpu_custom_call.1} parent=39 // pred_fallthru
        _
    $region40: #{tpu_custom_call.1} parent=5 // pred_fallthru
      _
    %p4965 = scmp.le.s32.totalorder 2, %s11
    // Predicated region
    $region45: #{tpu_custom_call.1} parent=5 // pred_check
      %p4966 = pneg %p4965
    $region46: #{tpu_custom_call.1} parent=5 // pred_check_branch
      %4968 = sbr.rel (%p4966) target = $region48
    $region47: #{tpu_custom_call.1} parent=5 // pred_region
      %s4969 = ssub.s32 %s11, 2
      // Predicated region
      $region49: #{tpu_custom_call.1} parent=47 // pred_check
        %p4970 = pneg %p150
      $region50: #{tpu_custom_call.1} parent=47 // pred_check_branch
        %4972 = sbr.rel (%p4970) target = $region52
      $region51: #{tpu_custom_call.1} parent=47 // pred_region
        %p4973 = scmp.lt.s32.totalorder %s17, 1
        %s4974 = scalar_select %p4973, %s17, 1
        %s4975 = smul.addr %s4974, 96
        %s4976 = smul.addr %s4975, 8
        %s4977 = scalar_lea.vmem %s5, %s4976
      $region52: #{tpu_custom_call.1} parent=47 // pred_fallthru
        _
    $region48: #{tpu_custom_call.1} parent=5 // pred_fallthru
      _
  $region6: #{tpu_custom_call.1} parent=0 // loop_footer
    %s15 = sadd.s32 1, %s11
  $region7: #{tpu_custom_call.1} parent=0 // loop_footer_branch
    %10 = sbr.rel target = $region3
  $region8: #{tpu_custom_call.1} parent=0 // loop_exit
    _

</llo_original>
